<compile_context>
chip_gen: v7x
topology: tpu7x:2x2x1
jax: 0.10.0
libtpu: 0.0.40
codegen_flags: <defaults>
</compile_context>

<pallas_src>
import functools
import math

import jax
import jax.numpy as jnp
from jax.experimental import pallas as pl
from jax.experimental.pallas import tpu as pltpu


# ----------------------------- in-kernel helpers -----------------------------

def _layernorm(x, g, b, eps=1e-5):
    mu = jnp.mean(x, axis=-1, keepdims=True)
    var = jnp.mean((x - mu) ** 2, axis=-1, keepdims=True)
    return (x - mu) * jax.lax.rsqrt(var + eps) * g + b


def _attend(q, k, v, bt, s_q, s_kv, num_heads, head_size, masked):
    """Batched multi-head attention.

    q: (bt*s_q, E) f32, k/v: (bt*s_kv, E) f32.  Returns (bt*s_q, E) f32.
    All heads (and batch rows) are processed by single batched einsums
    (batch dim g = H*bt); matmul operands are bf16, accumulation f32.
    Head relayout uses only static lane slices + leading-axis stack +
    lane concat (no 3-D transposes) for robust Mosaic lowering.
    """
    H, Dh = num_heads, head_size
    E = H * Dh
    G = H * bt

    def split_heads(t, s):
        # (bt*s, E) -> (H*bt, s, Dh)
        t3 = t.reshape(bt, s, E)
        heads = [t3[:, :, h * Dh:(h + 1) * Dh] for h in range(H)]   # (bt,s,Dh)
        th = jnp.stack(heads, axis=0)                               # (H,bt,s,Dh)
        return th.reshape(G, s, Dh).astype(jnp.bfloat16)

    qh = split_heads(q, s_q)
    kh = split_heads(k, s_kv)
    vh = split_heads(v, s_kv)

    scores = jnp.einsum("gqd,gkd->gqk", qh, kh,
                        preferred_element_type=jnp.float32)
    scores = scores * (1.0 / math.sqrt(Dh))

    if masked:
        # Built once per layer, shared by every head / batch row.
        row = jax.lax.broadcasted_iota(jnp.int32, (s_q, s_kv), 0)
        col = jax.lax.broadcasted_iota(jnp.int32, (s_q, s_kv), 1)
        scores = jnp.where((col <= row)[None, :, :], scores, -1e30)

    scores = scores - jnp.max(scores, axis=-1, keepdims=True)
    p = jnp.exp(scores)
    p = p * pl.reciprocal(jnp.sum(p, axis=-1, keepdims=True), approx=True)

    ctx = jnp.einsum("gqk,gkd->gqd", p.astype(jnp.bfloat16), vh,
                     preferred_element_type=jnp.float32)            # (G,s_q,Dh)
    ctx4 = ctx.reshape(H, bt, s_q, Dh)
    out = jnp.concatenate([ctx4[h] for h in range(H)], axis=-1)     # (bt,s_q,E)
    return out.reshape(bt * s_q, E)


# ------------------------------ Pallas kernels -------------------------------

def decoder_stack_kernel(enc_ref, x_ref,
                         wqkv_s_ref, bqkv_s_ref, wo_s_ref, bo_s_ref,
                         wq_c_ref, bq_c_ref, wkv_c_ref, bkv_c_ref,
                         wo_c_ref, bo_c_ref,
                         g1_ref, be1_ref, g2_ref, be2_ref, g3_ref, be3_ref,
                         wf1_ref, bf1_ref, wf2_ref, bf2_ref,
                         out_ref, *, num_heads, head_size):
    layer = pl.program_id(1)

    # Seed the resident activation (output block revisited across the layer
    # axis) from the target embeddings at the first layer.
    @pl.when(layer == 0)
    def _init():
        out_ref[...] = x_ref[...]

    bt, s, e = out_ref.shape
    s_enc = enc_ref.shape[1]

    x = out_ref[...].reshape(bt * s, e)                 # f32 residual stream
    enc = enc_ref[...].reshape(bt * s_enc, e)
    x_bf = x.astype(jnp.bfloat16)

    # ---- masked self-attention: fused QKV (one MXU matmul) + out proj ----
    qkv = jnp.dot(x_bf, wqkv_s_ref[0],
                  preferred_element_type=jnp.float32) + bqkv_s_ref[0]
    sa = _attend(qkv[:, :e], qkv[:, e:2 * e], qkv[:, 2 * e:3 * e],
                 bt, s, s, num_heads, head_size, masked=True)
    sa = jnp.dot(sa.astype(jnp.bfloat16), wo_s_ref[0],
                 preferred_element_type=jnp.float32) + bo_s_ref[0]
    h1 = _layernorm(x + sa, g1_ref[0], be1_ref[0])

    # ---- cross-attention: Q from layer input, fused K/V from encoder ----
    q_c = jnp.dot(x_bf, wq_c_ref[0],
                  preferred_element_type=jnp.float32) + bq_c_ref[0]
    kv_c = jnp.dot(enc.astype(jnp.bfloat16), wkv_c_ref[0],
                   preferred_element_type=jnp.float32) + bkv_c_ref[0]
    ca = _attend(q_c, kv_c[:, :e], kv_c[:, e:2 * e],
                 bt, s, s_enc, num_heads, head_size, masked=False)
    ca = jnp.dot(ca.astype(jnp.bfloat16), wo_c_ref[0],
                 preferred_element_type=jnp.float32) + bo_c_ref[0]
    h2 = _layernorm(h1 + ca, g2_ref[0], be2_ref[0])

    # ---- feedforward (Linear -> ReLU -> Linear) + residual + LN3 ----
    ff = jnp.dot(h2.astype(jnp.bfloat16), wf1_ref[0],
                 preferred_element_type=jnp.float32) + bf1_ref[0]
    ff = jnp.maximum(ff, 0.0)
    ff = jnp.dot(ff.astype(jnp.bfloat16), wf2_ref[0],
                 preferred_element_type=jnp.float32) + bf2_ref[0]
    y = _layernorm(ff + h2, g3_ref[0], be3_ref[0])

    out_ref[...] = y.reshape(bt, s, e)


def lm_head_kernel(x_ref, w_ref, b_ref, out_ref, *, vocab_size):
    bt, s, e = x_ref.shape
    vp = out_ref.shape[-1]                               # lane-dense padded V
    x = x_ref[...].reshape(bt * s, e).astype(jnp.bfloat16)
    logits = jnp.dot(x, w_ref[...],
                     preferred_element_type=jnp.float32) + b_ref[...]
    lane = jax.lax.broadcasted_iota(jnp.int32, logits.shape, 1)
    logits = jnp.where(lane < vocab_size, logits, -1e30)  # mask the pad lanes
    logits = logits - jnp.max(logits, axis=-1, keepdims=True)
    ex = jnp.exp(logits)
    probs = ex * pl.reciprocal(jnp.sum(ex, axis=-1, keepdims=True), approx=True)
    out_ref[...] = probs.reshape(bt, s, vp)


# ------------------------------- host wrappers --------------------------------

STACK_WEIGHT_KEYS = [
    'wqkv_s', 'bqkv_s', 'wo_s', 'bo_s',
    'wq_c', 'bq_c', 'wkv_c', 'bkv_c', 'wo_c', 'bo_c',
    'g1', 'be1', 'g2', 'be2', 'g3', 'be3',
    'wf1', 'bf1', 'wf2', 'bf2',
]


def _batch_chunks(B):
    # Keep >=2 parallel grid steps for megacore / v7x when possible,
    # otherwise fold everything into one chunk.
    return 2 if (B >= 2 and B % 2 == 0) else 1


def _vmem_limit_bytes(weights, act_block_bytes):
    # double-buffered per-layer weights + (double-buffered) activation blocks
    # + headroom for scores / FFN temporaries; clamp to a safe range.
    wbytes = sum(math.prod(w.shape[1:]) * w.dtype.itemsize for w in weights)
    est = 2 * wbytes + 2 * act_block_bytes + (4 << 20)
    return int(min(max(est, 16 << 20), 48 << 20))


def decoder_stack_forward(enc, x, params, num_heads, head_size):
    B, S, E = x.shape
    S_enc = enc.shape[1]
    L = params['wqkv_s'].shape[0]
    nb = _batch_chunks(B)
    Bt = B // nb

    weights = [params[k] for k in STACK_WEIGHT_KEYS]

    in_specs = [
        pl.BlockSpec((Bt, S_enc, E), lambda b, l: (b, 0, 0)),
        pl.BlockSpec((Bt, S, E), lambda b, l: (b, 0, 0)),
    ]
    for w in weights:
        # stacked (L, ...) weights: indexed by the layer grid axis so the
        # pipeline prefetches the next layer's weights during compute.
        in_specs.append(
            pl.BlockSpec((1,) + tuple(w.shape[1:]), lambda b, l: (l, 0, 0)))

    act_block_bytes = (Bt * S_enc * E + 2 * Bt * S * E) * 4
    kernel = functools.partial(decoder_stack_kernel,
                               num_heads=num_heads, head_size=head_size)
    return pl.pallas_call(
        kernel,
        out_shape=jax.ShapeDtypeStruct((B, S, E), jnp.float32),
        grid=(nb, L),
        in_specs=in_specs,
        out_specs=pl.BlockSpec((Bt, S, E), lambda b, l: (b, 0, 0)),
        compiler_params=pltpu.CompilerParams(
            dimension_semantics=("parallel", "arbitrary"),
            vmem_limit_bytes=_vmem_limit_bytes(weights, act_block_bytes)),
    )(enc, x, *weights)


def lm_head_forward(x, w, b, vocab_size):
    B, S, E = x.shape
    Vp = w.shape[1]                                      # padded, lane-dense
    nb = _batch_chunks(B)
    Bt = B // nb
    kernel = functools.partial(lm_head_kernel, vocab_size=vocab_size)
    probs = pl.pallas_call(
        kernel,
        out_shape=jax.ShapeDtypeStruct((B, S, Vp), jnp.float32),
        grid=(nb,),
        in_specs=[
            pl.BlockSpec((Bt, S, E), lambda bi: (bi, 0, 0)),
            pl.BlockSpec(w.shape, lambda bi: (0, 0)),
            pl.BlockSpec(b.shape, lambda bi: (0, 0)),
        ],
        out_specs=pl.BlockSpec((Bt, S, Vp), lambda bi: (bi, 0, 0)),
        compiler_params=pltpu.CompilerParams(
            dimension_semantics=("parallel",)),
    )(x, w, b)
    return probs[..., :vocab_size]                       # drop pad lanes


def decoder_forward(enc, trgt_embeddings, params, num_heads, head_size,
                    vocab_size):
    h = decoder_stack_forward(enc, trgt_embeddings, params,
                              num_heads, head_size)
    return lm_head_forward(h, params['lm_w'], params['lm_b'], vocab_size)


# ------------------------------ parameter init --------------------------------

def init_decoder_params(key, vocab_size, embed_dim, num_layers):
    E, F, L = embed_dim, 4 * embed_dim, num_layers
    keys = jax.random.split(key, 8)

    def w(k, shape):
        # weights stored bf16 in HBM (MXU-native operand, half the DMA bytes)
        return (0.02 * jax.random.normal(k, shape, jnp.float32)).astype(jnp.bfloat16)

    def zeros(shape):
        return jnp.zeros(shape, jnp.float32)

    def ones(shape):
        return jnp.ones(shape, jnp.float32)

    p = {
        # masked self-attention: fused Wq|Wk|Wv
        'wqkv_s': w(keys[0], (L, E, 3 * E)), 'bqkv_s': zeros((L, 1, 3 * E)),
        'wo_s':   w(keys[1], (L, E, E)),     'bo_s':   zeros((L, 1, E)),
        # cross-attention: Q separate, fused Wk|Wv
        'wq_c':   w(keys[2], (L, E, E)),     'bq_c':   zeros((L, 1, E)),
        'wkv_c':  w(keys[3], (L, E, 2 * E)), 'bkv_c':  zeros((L, 1, 2 * E)),
        'wo_c':   w(keys[4], (L, E, E)),     'bo_c':   zeros((L, 1, E)),
        # layernorms (f32)
        'g1': ones((L, 1, E)), 'be1': zeros((L, 1, E)),
        'g2': ones((L, 1, E)), 'be2': zeros((L, 1, E)),
        'g3': ones((L, 1, E)), 'be3': zeros((L, 1, E)),
        # feedforward
        'wf1': w(keys[5], (L, E, F)), 'bf1': zeros((L, 1, F)),
        'wf2': w(keys[6], (L, F, E)), 'bf2': zeros((L, 1, E)),
    }

    # LM head padded to a lane-dense multiple of 128 (sliced back on host).
    Vp = ((vocab_size + 127) // 128) * 128
    lm_w = 0.02 * jax.random.normal(keys[7], (E, vocab_size), jnp.float32)
    p['lm_w'] = jnp.pad(lm_w, ((0, 0), (0, Vp - vocab_size))).astype(jnp.bfloat16)
    p['lm_b'] = jnp.zeros((1, Vp), jnp.float32)
    return p


# ------------------------------------ main -------------------------------------

if __name__ == "__main__":
    # batch, seq(block_size), embed, heads, layers, vocab
    B, S, E, H, L, V = 2, 8, 32, 4, 2, 16
    head_size = E // H

    key = jax.random.PRNGKey(0)
    k_enc, k_trgt, k_params = jax.random.split(key, 3)

    encoder_output = jax.random.normal(k_enc, (B, S, E), jnp.float32)
    trgt_embeddings = jax.random.normal(k_trgt, (B, S, E), jnp.float32)
    params = init_decoder_params(k_params, V, E, L)

    fwd = jax.jit(functools.partial(decoder_forward, num_heads=H,
                                    head_size=head_size, vocab_size=V))
    probs = fwd(encoder_output, trgt_embeddings, params)
    jax.block_until_ready(probs)

    assert probs.shape == (B, S, V)
    assert bool(jnp.all(jnp.isfinite(probs)))
    # softmax rows sum to ~1 (bf16 matmuls + approx EUP reciprocal => loose tol)
    assert bool(jnp.allclose(jnp.sum(probs, axis=-1), 1.0, atol=1e-2))
    print("KERNEL_OK")
</pallas_src>

<mosaic_0001>
module attributes {stable_mosaic.version = 11 : i64} {
  func.func @lm_head_kernel(%arg0: i32, %arg1: memref<1x8x32xf32, #tpu.memory_space<vmem>>, %arg2: memref<32x128xbf16, #tpu.memory_space<vmem>>, %arg3: memref<1x128xf32, #tpu.memory_space<vmem>>, %arg4: memref<1x8x128xf32, #tpu.memory_space<vmem>>) attributes {dimension_semantics = [#tpu.dimension_semantics<parallel>], iteration_bounds = array<i64: 2>, scalar_prefetch = 0 : i64, scratch_operands = 0 : i64, tpu.core_type = #tpu.core_type<tc>, window_params = [{transform_indices = @transform_0, window_bounds = array<i64: 1, 8, 32>}, {pipeline_mode = #tpu.pipeline_mode<synchronous>, transform_indices = @transform_1, window_bounds = array<i64: 32, 128>}, {pipeline_mode = #tpu.pipeline_mode<synchronous>, transform_indices = @transform_2, window_bounds = array<i64: 1, 128>}, {transform_indices = @transform_3, window_bounds = array<i64: 1, 8, 128>}]} {
    %c0 = arith.constant 0 : index
    %c0_0 = arith.constant 0 : index
    %c0_1 = arith.constant 0 : index
    %0 = vector.load %arg1[%c0, %c0_0, %c0_1] : memref<1x8x32xf32, #tpu.memory_space<vmem>>, vector<1x8x32xf32>
    %1 = vector.shape_cast %0 : vector<1x8x32xf32> to vector<8x32xf32>
    %2 = arith.truncf %1 : vector<8x32xf32> to vector<8x32xbf16>
    %c0_2 = arith.constant 0 : index
    %c0_3 = arith.constant 0 : index
    %3 = vector.load %arg2[%c0_2, %c0_3] : memref<32x128xbf16, #tpu.memory_space<vmem>>, vector<32x128xbf16>
    %cst = arith.constant dense<0.000000e+00> : vector<8x128xf32>
    %4 = tpu.matmul %2, %3, %cst {dimension_numbers = #tpu.dot_dimension_numbers<[1], [0], [0], [1], [0, 0, 1, 1], [], []>} : vector<8x32xbf16>, vector<32x128xbf16>, vector<8x128xf32> -> vector<8x128xf32>
    %c0_4 = arith.constant 0 : index
    %c0_5 = arith.constant 0 : index
    %5 = vector.load %arg3[%c0_4, %c0_5] : memref<1x128xf32, #tpu.memory_space<vmem>>, vector<1x128xf32>
    %6 = vector.broadcast %5 : vector<1x128xf32> to vector<8x128xf32>
    %7 = arith.addf %4, %6 : vector<8x128xf32>
    %8 = tpu.iota {dimensions = array<i32: 1>} : vector<8x128xi32>
    %c16_i32 = arith.constant 16 : i32
    %9 = vector.broadcast %c16_i32 : i32 to vector<8x128xi32>
    %10 = arith.cmpi slt, %8, %9 : vector<8x128xi32>
    %cst_6 = arith.constant -1.000000e+30 : f32
    %11 = vector.broadcast %cst_6 : f32 to vector<8x128xf32>
    %12 = arith.select %10, %7, %11 : vector<8x128xi1>, vector<8x128xf32>
    %cst_7 = arith.constant dense<0xFF800000> : vector<8xf32>
    %13 = vector.multi_reduction <maximumf>, %12, %cst_7 [1] : vector<8x128xf32> to vector<8xf32>
    %14 = vector.shape_cast %13 : vector<8xf32> to vector<8x1xf32>
    %15 = vector.broadcast %14 : vector<8x1xf32> to vector<8x128xf32>
    %16 = arith.subf %12, %15 : vector<8x128xf32>
    %17 = math.exp %16 : vector<8x128xf32>
    %cst_8 = arith.constant dense<0.000000e+00> : vector<8xf32>
    %18 = vector.multi_reduction <add>, %17, %cst_8 [1] : vector<8x128xf32> to vector<8xf32>
    %19 = vector.shape_cast %18 : vector<8xf32> to vector<8x1xf32>
    %20 = tpu.reciprocal %19 {approx = true} : vector<8x1xf32> -> vector<8x1xf32>
    %21 = vector.broadcast %20 : vector<8x1xf32> to vector<8x128xf32>
    %22 = arith.mulf %17, %21 : vector<8x128xf32>
    %23 = vector.shape_cast %22 : vector<8x128xf32> to vector<1x8x128xf32>
    %c0_9 = arith.constant 0 : index
    %c0_10 = arith.constant 0 : index
    %c0_11 = arith.constant 0 : index
    %24 = vector.load %arg4[%c0_9, %c0_10, %c0_11] : memref<1x8x128xf32, #tpu.memory_space<vmem>>, vector<1x8x128xf32>
    tpu.vector_store %arg4[%c0_9, %c0_10, %c0_11], %23 {strides = array<i32>} : memref<1x8x128xf32, #tpu.memory_space<vmem>>, vector<1x8x128xf32>,
    return
  }
  func.func @transform_0(%arg0: i32) -> (i32, i32, i32) {
    %c0_i32 = arith.constant 0 : i32
    %c0_i32_0 = arith.constant 0 : i32
    %c0_i32_1 = arith.constant 0 : i32
    return %arg0, %c0_i32, %c0_i32_0 : i32, i32, i32
  }
  func.func @transform_1(%arg0: i32) -> (i32, i32) {
    %c0_i32 = arith.constant 0 : i32
    %c0_i32_0 = arith.constant 0 : i32
    %c0_i32_1 = arith.constant 0 : i32
    return %c0_i32, %c0_i32_0 : i32, i32
  }
  func.func @transform_2(%arg0: i32) -> (i32, i32) {
    %c0_i32 = arith.constant 0 : i32
    %c0_i32_0 = arith.constant 0 : i32
    %c0_i32_1 = arith.constant 0 : i32
    return %c0_i32, %c0_i32_0 : i32, i32
  }
  func.func @transform_3(%arg0: i32) -> (i32, i32, i32) {
    %c0_i32 = arith.constant 0 : i32
    %c0_i32_0 = arith.constant 0 : i32
    %c0_i32_1 = arith.constant 0 : i32
    return %arg0, %c0_i32, %c0_i32_0 : i32, i32, i32
  }
}

module attributes {stable_mosaic.version = 11 : i64} {
  func.func @decoder_stack_kernel(%arg0: i32, %arg1: i32, %arg2: memref<1x8x32xf32, #tpu.memory_space<vmem>>, %arg3: memref<1x8x32xf32, #tpu.memory_space<vmem>>, %arg4: memref<1x32x96xbf16, #tpu.memory_space<vmem>>, %arg5: memref<1x1x96xf32, #tpu.memory_space<vmem>>, %arg6: memref<1x32x32xbf16, #tpu.memory_space<vmem>>, %arg7: memref<1x1x32xf32, #tpu.memory_space<vmem>>, %arg8: memref<1x32x32xbf16, #tpu.memory_space<vmem>>, %arg9: memref<1x1x32xf32, #tpu.memory_space<vmem>>, %arg10: memref<1x32x64xbf16, #tpu.memory_space<vmem>>, %arg11: memref<1x1x64xf32, #tpu.memory_space<vmem>>, %arg12: memref<1x32x32xbf16, #tpu.memory_space<vmem>>, %arg13: memref<1x1x32xf32, #tpu.memory_space<vmem>>, %arg14: memref<1x1x32xf32, #tpu.memory_space<vmem>>, %arg15: memref<1x1x32xf32, #tpu.memory_space<vmem>>, %arg16: memref<1x1x32xf32, #tpu.memory_space<vmem>>, %arg17: memref<1x1x32xf32, #tpu.memory_space<vmem>>, %arg18: memref<1x1x32xf32, #tpu.memory_space<vmem>>, %arg19: memref<1x1x32xf32, #tpu.memory_space<vmem>>, %arg20: memref<1x32x128xbf16, #tpu.memory_space<vmem>>, %arg21: memref<1x1x128xf32, #tpu.memory_space<vmem>>, %arg22: memref<1x128x32xbf16, #tpu.memory_space<vmem>>, %arg23: memref<1x1x32xf32, #tpu.memory_space<vmem>>, %arg24: memref<1x8x32xf32, #tpu.memory_space<vmem>>) attributes {dimension_semantics = [#tpu.dimension_semantics<parallel>, #tpu.dimension_semantics<arbitrary>], iteration_bounds = array<i64: 2, 2>, scalar_prefetch = 0 : i64, scratch_operands = 0 : i64, tpu.core_type = #tpu.core_type<tc>, window_params = [{transform_indices = @transform_0, window_bounds = array<i64: 1, 8, 32>}, {transform_indices = @transform_1, window_bounds = array<i64: 1, 8, 32>}, {transform_indices = @transform_2, window_bounds = array<i64: 1, 32, 96>}, {transform_indices = @transform_3, window_bounds = array<i64: 1, 1, 96>}, {transform_indices = @transform_4, window_bounds = array<i64: 1, 32, 32>}, {transform_indices = @transform_5, window_bounds = array<i64: 1, 1, 32>}, {transform_indices = @transform_6, window_bounds = array<i64: 1, 32, 32>}, {transform_indices = @transform_7, window_bounds = array<i64: 1, 1, 32>}, {transform_indices = @transform_8, window_bounds = array<i64: 1, 32, 64>}, {transform_indices = @transform_9, window_bounds = array<i64: 1, 1, 64>}, {transform_indices = @transform_10, window_bounds = array<i64: 1, 32, 32>}, {transform_indices = @transform_11, window_bounds = array<i64: 1, 1, 32>}, {transform_indices = @transform_12, window_bounds = array<i64: 1, 1, 32>}, {transform_indices = @transform_13, window_bounds = array<i64: 1, 1, 32>}, {transform_indices = @transform_14, window_bounds = array<i64: 1, 1, 32>}, {transform_indices = @transform_15, window_bounds = array<i64: 1, 1, 32>}, {transform_indices = @transform_16, window_bounds = array<i64: 1, 1, 32>}, {transform_indices = @transform_17, window_bounds = array<i64: 1, 1, 32>}, {transform_indices = @transform_18, window_bounds = array<i64: 1, 32, 128>}, {transform_indices = @transform_19, window_bounds = array<i64: 1, 1, 128>}, {transform_indices = @transform_20, window_bounds = array<i64: 1, 128, 32>}, {transform_indices = @transform_21, window_bounds = array<i64: 1, 1, 32>}, {transform_indices = @transform_22, window_bounds = array<i64: 1, 8, 32>}]} {
    %c0_i32 = arith.constant 0 : i32
    %0 = arith.cmpi eq, %arg1, %c0_i32 : i32
    %1 = arith.extui %0 : i1 to i32
    %c0_i32_0 = arith.constant 0 : i32
    %2 = arith.cmpi ne, %1, %c0_i32_0 : i32
    scf.if %2 {
      %c0_102 = arith.constant 0 : index
      %c0_103 = arith.constant 0 : index
      %c0_104 = arith.constant 0 : index
      %284 = vector.load %arg3[%c0_102, %c0_103, %c0_104] : memref<1x8x32xf32, #tpu.memory_space<vmem>>, vector<1x8x32xf32>
      %c0_105 = arith.constant 0 : index
      %c0_106 = arith.constant 0 : index
      %c0_107 = arith.constant 0 : index
      %285 = vector.load %arg24[%c0_105, %c0_106, %c0_107] : memref<1x8x32xf32, #tpu.memory_space<vmem>>, vector<1x8x32xf32>
      tpu.vector_store %arg24[%c0_105, %c0_106, %c0_107], %284 {strides = array<i32>} : memref<1x8x32xf32, #tpu.memory_space<vmem>>, vector<1x8x32xf32>,
    } else {
    }
    %c0 = arith.constant 0 : index
    %c0_1 = arith.constant 0 : index
    %c0_2 = arith.constant 0 : index
    %3 = vector.load %arg24[%c0, %c0_1, %c0_2] : memref<1x8x32xf32, #tpu.memory_space<vmem>>, vector<1x8x32xf32>
    %4 = vector.shape_cast %3 : vector<1x8x32xf32> to vector<8x32xf32>
    %c0_3 = arith.constant 0 : index
    %c0_4 = arith.constant 0 : index
    %c0_5 = arith.constant 0 : index
    %5 = vector.load %arg2[%c0_3, %c0_4, %c0_5] : memref<1x8x32xf32, #tpu.memory_space<vmem>>, vector<1x8x32xf32>
    %6 = vector.shape_cast %5 : vector<1x8x32xf32> to vector<8x32xf32>
    %7 = arith.truncf %4 : vector<8x32xf32> to vector<8x32xbf16>
    %c0_6 = arith.constant 0 : index
    %c0_7 = arith.constant 0 : index
    %c0_8 = arith.constant 0 : index
    %8 = vector.load %arg4[%c0_6, %c0_7, %c0_8] : memref<1x32x96xbf16, #tpu.memory_space<vmem>>, vector<1x32x96xbf16>
    %9 = vector.shape_cast %8 : vector<1x32x96xbf16> to vector<32x96xbf16>
    %cst = arith.constant dense<0.000000e+00> : vector<8x96xf32>
    %10 = tpu.matmul %7, %9, %cst {dimension_numbers = #tpu.dot_dimension_numbers<[1], [0], [0], [1], [0, 0, 1, 1], [], []>} : vector<8x32xbf16>, vector<32x96xbf16>, vector<8x96xf32> -> vector<8x96xf32>
    %c0_9 = arith.constant 0 : index
    %c0_10 = arith.constant 0 : index
    %c0_11 = arith.constant 0 : index
    %11 = vector.load %arg5[%c0_9, %c0_10, %c0_11] : memref<1x1x96xf32, #tpu.memory_space<vmem>>, vector<1x1x96xf32>
    %12 = vector.shape_cast %11 : vector<1x1x96xf32> to vector<1x96xf32>
    %13 = vector.broadcast %12 : vector<1x96xf32> to vector<8x96xf32>
    %14 = arith.addf %10, %13 : vector<8x96xf32>
    %15 = vector.extract_strided_slice %14 {offsets = [0, 0], sizes = [8, 32], strides = [1, 1]} : vector<8x96xf32> to vector<8x32xf32>
    %16 = vector.extract_strided_slice %14 {offsets = [0, 32], sizes = [8, 32], strides = [1, 1]} : vector<8x96xf32> to vector<8x32xf32>
    %17 = vector.extract_strided_slice %14 {offsets = [0, 64], sizes = [8, 32], strides = [1, 1]} : vector<8x96xf32> to vector<8x32xf32>
    %18 = vector.shape_cast %15 : vector<8x32xf32> to vector<1x8x32xf32>
    %19 = vector.extract_strided_slice %18 {offsets = [0, 0, 0], sizes = [1, 8, 8], strides = [1, 1, 1]} : vector<1x8x32xf32> to vector<1x8x8xf32>
    %20 = vector.extract_strided_slice %18 {offsets = [0, 0, 8], sizes = [1, 8, 8], strides = [1, 1, 1]} : vector<1x8x32xf32> to vector<1x8x8xf32>
    %21 = vector.extract_strided_slice %18 {offsets = [0, 0, 16], sizes = [1, 8, 8], strides = [1, 1, 1]} : vector<1x8x32xf32> to vector<1x8x8xf32>
    %22 = vector.extract_strided_slice %18 {offsets = [0, 0, 24], sizes = [1, 8, 8], strides = [1, 1, 1]} : vector<1x8x32xf32> to vector<1x8x8xf32>
    %23 = vector.shape_cast %19 : vector<1x8x8xf32> to vector<1x1x8x8xf32>
    %24 = vector.shape_cast %20 : vector<1x8x8xf32> to vector<1x1x8x8xf32>
    %25 = vector.shape_cast %21 : vector<1x8x8xf32> to vector<1x1x8x8xf32>
    %26 = vector.shape_cast %22 : vector<1x8x8xf32> to vector<1x1x8x8xf32>
    %27 = tpu.concatenate %23, %24, %25, %26 in 0 : vector<1x1x8x8xf32>, vector<1x1x8x8xf32>, vector<1x1x8x8xf32>, vector<1x1x8x8xf32> -> vector<4x1x8x8xf32>
    %28 = vector.shape_cast %27 : vector<4x1x8x8xf32> to vector<4x8x8xf32>
    %29 = arith.truncf %28 : vector<4x8x8xf32> to vector<4x8x8xbf16>
    %30 = vector.shape_cast %16 : vector<8x32xf32> to vector<1x8x32xf32>
    %31 = vector.extract_strided_slice %30 {offsets = [0, 0, 0], sizes = [1, 8, 8], strides = [1, 1, 1]} : vector<1x8x32xf32> to vector<1x8x8xf32>
    %32 = vector.extract_strided_slice %30 {offsets = [0, 0, 8], sizes = [1, 8, 8], strides = [1, 1, 1]} : vector<1x8x32xf32> to vector<1x8x8xf32>
    %33 = vector.extract_strided_slice %30 {offsets = [0, 0, 16], sizes = [1, 8, 8], strides = [1, 1, 1]} : vector<1x8x32xf32> to vector<1x8x8xf32>
    %34 = vector.extract_strided_slice %30 {offsets = [0, 0, 24], sizes = [1, 8, 8], strides = [1, 1, 1]} : vector<1x8x32xf32> to vector<1x8x8xf32>
    %35 = vector.shape_cast %31 : vector<1x8x8xf32> to vector<1x1x8x8xf32>
    %36 = vector.shape_cast %32 : vector<1x8x8xf32> to vector<1x1x8x8xf32>
    %37 = vector.shape_cast %33 : vector<1x8x8xf32> to vector<1x1x8x8xf32>
    %38 = vector.shape_cast %34 : vector<1x8x8xf32> to vector<1x1x8x8xf32>
    %39 = tpu.concatenate %35, %36, %37, %38 in 0 : vector<1x1x8x8xf32>, vector<1x1x8x8xf32>, vector<1x1x8x8xf32>, vector<1x1x8x8xf32> -> vector<4x1x8x8xf32>
    %40 = vector.shape_cast %39 : vector<4x1x8x8xf32> to vector<4x8x8xf32>
    %41 = arith.truncf %40 : vector<4x8x8xf32> to vector<4x8x8xbf16>
    %42 = vector.shape_cast %17 : vector<8x32xf32> to vector<1x8x32xf32>
    %43 = vector.extract_strided_slice %42 {offsets = [0, 0, 0], sizes = [1, 8, 8], strides = [1, 1, 1]} : vector<1x8x32xf32> to vector<1x8x8xf32>
    %44 = vector.extract_strided_slice %42 {offsets = [0, 0, 8], sizes = [1, 8, 8], strides = [1, 1, 1]} : vector<1x8x32xf32> to vector<1x8x8xf32>
    %45 = vector.extract_strided_slice %42 {offsets = [0, 0, 16], sizes = [1, 8, 8], strides = [1, 1, 1]} : vector<1x8x32xf32> to vector<1x8x8xf32>
    %46 = vector.extract_strided_slice %42 {offsets = [0, 0, 24], sizes = [1, 8, 8], strides = [1, 1, 1]} : vector<1x8x32xf32> to vector<1x8x8xf32>
    %47 = vector.shape_cast %43 : vector<1x8x8xf32> to vector<1x1x8x8xf32>
    %48 = vector.shape_cast %44 : vector<1x8x8xf32> to vector<1x1x8x8xf32>
    %49 = vector.shape_cast %45 : vector<1x8x8xf32> to vector<1x1x8x8xf32>
    %50 = vector.shape_cast %46 : vector<1x8x8xf32> to vector<1x1x8x8xf32>
    %51 = tpu.concatenate %47, %48, %49, %50 in 0 : vector<1x1x8x8xf32>, vector<1x1x8x8xf32>, vector<1x1x8x8xf32>, vector<1x1x8x8xf32> -> vector<4x1x8x8xf32>
    %52 = vector.shape_cast %51 : vector<4x1x8x8xf32> to vector<4x8x8xf32>
    %53 = arith.truncf %52 : vector<4x8x8xf32> to vector<4x8x8xbf16>
    "tpu.trace_start"() <{level = 10 : i32, message = "gqd,gkd->gqk"}> : () -> ()
    %cst_12 = arith.constant dense<0.000000e+00> : vector<4x8x8xf32>
    %54 = tpu.matmul %29, %41, %cst_12 {dimension_numbers = #tpu.dot_dimension_numbers<[2], [2], [1], [1], [0, 0, 0, 1, 1, 1], [0], [0]>} : vector<4x8x8xbf16>, vector<4x8x8xbf16>, vector<4x8x8xf32> -> vector<4x8x8xf32>
    "tpu.trace_stop"() : () -> ()
    %cst_13 = arith.constant 0.353553385 : f32
    %55 = vector.broadcast %cst_13 : f32 to vector<4x8x8xf32>
    %56 = arith.mulf %54, %55 : vector<4x8x8xf32>
    %57 = tpu.iota {dimensions = array<i32: 0>} : vector<8x8xi32>
    %58 = tpu.iota {dimensions = array<i32: 1>} : vector<8x8xi32>
    %59 = arith.cmpi sle, %58, %57 : vector<8x8xi32>
    %60 = vector.shape_cast %59 : vector<8x8xi1> to vector<1x8x8xi1>
    %cst_14 = arith.constant -1.000000e+30 : f32
    %61 = vector.shape_cast %60 : vector<1x8x8xi1> to vector<1x8x8xi1>
    %62 = vector.broadcast %61 : vector<1x8x8xi1> to vector<4x8x8xi1>
    %63 = vector.broadcast %cst_14 : f32 to vector<4x8x8xf32>
    %64 = arith.select %62, %56, %63 : vector<4x8x8xi1>, vector<4x8x8xf32>
    %cst_15 = arith.constant dense<0xFF800000> : vector<4x8xf32>
    %65 = vector.multi_reduction <maximumf>, %64, %cst_15 [2] : vector<4x8x8xf32> to vector<4x8xf32>
    %66 = vector.shape_cast %65 : vector<4x8xf32> to vector<4x8x1xf32>
    %67 = vector.broadcast %66 : vector<4x8x1xf32> to vector<4x8x8xf32>
    %68 = arith.subf %64, %67 : vector<4x8x8xf32>
    %69 = math.exp %68 : vector<4x8x8xf32>
    %cst_16 = arith.constant dense<0.000000e+00> : vector<4x8xf32>
    %70 = vector.multi_reduction <add>, %69, %cst_16 [2] : vector<4x8x8xf32> to vector<4x8xf32>
    %71 = vector.shape_cast %70 : vector<4x8xf32> to vector<4x8x1xf32>
    %72 = tpu.reciprocal %71 {approx = true} : vector<4x8x1xf32> -> vector<4x8x1xf32>
    %73 = vector.broadcast %72 : vector<4x8x1xf32> to vector<4x8x8xf32>
    %74 = arith.mulf %69, %73 : vector<4x8x8xf32>
    %75 = arith.truncf %74 : vector<4x8x8xf32> to vector<4x8x8xbf16>
    "tpu.trace_start"() <{level = 10 : i32, message = "gqk,gkd->gqd"}> : () -> ()
    %cst_17 = arith.constant dense<0.000000e+00> : vector<4x8x8xf32>
    %76 = tpu.matmul %75, %53, %cst_17 {dimension_numbers = #tpu.dot_dimension_numbers<[2], [1], [1], [2], [0, 0, 0, 1, 1, 2], [0], [0]>} : vector<4x8x8xbf16>, vector<4x8x8xbf16>, vector<4x8x8xf32> -> vector<4x8x8xf32>
    "tpu.trace_stop"() : () -> ()
    %77 = vector.shape_cast %76 : vector<4x8x8xf32> to vector<4x1x8x8xf32>
    %78 = vector.extract_strided_slice %77 {offsets = [0, 0, 0, 0], sizes = [1, 1, 8, 8], strides = [1, 1, 1, 1]} : vector<4x1x8x8xf32> to vector<1x1x8x8xf32>
    %79 = vector.shape_cast %78 : vector<1x1x8x8xf32> to vector<1x8x8xf32>
    %80 = vector.extract_strided_slice %77 {offsets = [1, 0, 0, 0], sizes = [1, 1, 8, 8], strides = [1, 1, 1, 1]} : vector<4x1x8x8xf32> to vector<1x1x8x8xf32>
    %81 = vector.shape_cast %80 : vector<1x1x8x8xf32> to vector<1x8x8xf32>
    %82 = vector.extract_strided_slice %77 {offsets = [2, 0, 0, 0], sizes = [1, 1, 8, 8], strides = [1, 1, 1, 1]} : vector<4x1x8x8xf32> to vector<1x1x8x8xf32>
    %83 = vector.shape_cast %82 : vector<1x1x8x8xf32> to vector<1x8x8xf32>
    %84 = vector.extract_strided_slice %77 {offsets = [3, 0, 0, 0], sizes = [1, 1, 8, 8], strides = [1, 1, 1, 1]} : vector<4x1x8x8xf32> to vector<1x1x8x8xf32>
    %85 = vector.shape_cast %84 : vector<1x1x8x8xf32> to vector<1x8x8xf32>
    %86 = tpu.concatenate %79, %81, %83, %85 in 2 : vector<1x8x8xf32>, vector<1x8x8xf32>, vector<1x8x8xf32>, vector<1x8x8xf32> -> vector<1x8x32xf32>
    %87 = vector.shape_cast %86 : vector<1x8x32xf32> to vector<8x32xf32>
    %88 = arith.truncf %87 : vector<8x32xf32> to vector<8x32xbf16>
    %c0_18 = arith.constant 0 : index
    %c0_19 = arith.constant 0 : index
    %c0_20 = arith.constant 0 : index
    %89 = vector.load %arg6[%c0_18, %c0_19, %c0_20] : memref<1x32x32xbf16, #tpu.memory_space<vmem>>, vector<1x32x32xbf16>
    %90 = vector.shape_cast %89 : vector<1x32x32xbf16> to vector<32x32xbf16>
    %cst_21 = arith.constant dense<0.000000e+00> : vector<8x32xf32>
    %91 = tpu.matmul %88, %90, %cst_21 {dimension_numbers = #tpu.dot_dimension_numbers<[1], [0], [0], [1], [0, 0, 1, 1], [], []>} : vector<8x32xbf16>, vector<32x32xbf16>, vector<8x32xf32> -> vector<8x32xf32>
    %c0_22 = arith.constant 0 : index
    %c0_23 = arith.constant 0 : index
    %c0_24 = arith.constant 0 : index
    %92 = vector.load %arg7[%c0_22, %c0_23, %c0_24] : memref<1x1x32xf32, #tpu.memory_space<vmem>>, vector<1x1x32xf32>
    %93 = vector.shape_cast %92 : vector<1x1x32xf32> to vector<1x32xf32>
    %94 = vector.broadcast %93 : vector<1x32xf32> to vector<8x32xf32>
    %95 = arith.addf %91, %94 : vector<8x32xf32>
    %96 = arith.addf %4, %95 : vector<8x32xf32>
    %c0_25 = arith.constant 0 : index
    %c0_26 = arith.constant 0 : index
    %c0_27 = arith.constant 0 : index
    %97 = vector.load %arg14[%c0_25, %c0_26, %c0_27] : memref<1x1x32xf32, #tpu.memory_space<vmem>>, vector<1x1x32xf32>
    %98 = vector.shape_cast %97 : vector<1x1x32xf32> to vector<1x32xf32>
    %c0_28 = arith.constant 0 : index
    %c0_29 = arith.constant 0 : index
    %c0_30 = arith.constant 0 : index
    %99 = vector.load %arg15[%c0_28, %c0_29, %c0_30] : memref<1x1x32xf32, #tpu.memory_space<vmem>>, vector<1x1x32xf32>
    %100 = vector.shape_cast %99 : vector<1x1x32xf32> to vector<1x32xf32>
    %cst_31 = arith.constant dense<0.000000e+00> : vector<8xf32>
    %101 = vector.multi_reduction <add>, %96, %cst_31 [1] : vector<8x32xf32> to vector<8xf32>
    %102 = vector.shape_cast %101 : vector<8xf32> to vector<8x1xf32>
    %cst_32 = arith.constant 3.200000e+01 : f32
    %103 = vector.broadcast %cst_32 : f32 to vector<8x1xf32>
    %104 = arith.divf %102, %103 : vector<8x1xf32>
    %105 = vector.broadcast %104 : vector<8x1xf32> to vector<8x32xf32>
    %106 = arith.subf %96, %105 : vector<8x32xf32>
    %107 = arith.mulf %106, %106 : vector<8x32xf32>
    %cst_33 = arith.constant dense<0.000000e+00> : vector<8xf32>
    %108 = vector.multi_reduction <add>, %107, %cst_33 [1] : vector<8x32xf32> to vector<8xf32>
    %109 = vector.shape_cast %108 : vector<8xf32> to vector<8x1xf32>
    %cst_34 = arith.constant 3.200000e+01 : f32
    %110 = vector.broadcast %cst_34 : f32 to vector<8x1xf32>
    %111 = arith.divf %109, %110 : vector<8x1xf32>
    %112 = vector.broadcast %104 : vector<8x1xf32> to vector<8x32xf32>
    %113 = arith.subf %96, %112 : vector<8x32xf32>
    %cst_35 = arith.constant 9.99999974E-6 : f32
    %114 = vector.broadcast %cst_35 : f32 to vector<8x1xf32>
    %115 = arith.addf %111, %114 : vector<8x1xf32>
    %116 = math.rsqrt %115 : vector<8x1xf32>
    %117 = vector.broadcast %116 : vector<8x1xf32> to vector<8x32xf32>
    %118 = arith.mulf %113, %117 : vector<8x32xf32>
    %119 = vector.broadcast %98 : vector<1x32xf32> to vector<8x32xf32>
    %120 = arith.mulf %118, %119 : vector<8x32xf32>
    %121 = vector.broadcast %100 : vector<1x32xf32> to vector<8x32xf32>
    %122 = arith.addf %120, %121 : vector<8x32xf32>
    %c0_36 = arith.constant 0 : index
    %c0_37 = arith.constant 0 : index
    %c0_38 = arith.constant 0 : index
    %123 = vector.load %arg8[%c0_36, %c0_37, %c0_38] : memref<1x32x32xbf16, #tpu.memory_space<vmem>>, vector<1x32x32xbf16>
    %124 = vector.shape_cast %123 : vector<1x32x32xbf16> to vector<32x32xbf16>
    %cst_39 = arith.constant dense<0.000000e+00> : vector<8x32xf32>
    %125 = tpu.matmul %7, %124, %cst_39 {dimension_numbers = #tpu.dot_dimension_numbers<[1], [0], [0], [1], [0, 0, 1, 1], [], []>} : vector<8x32xbf16>, vector<32x32xbf16>, vector<8x32xf32> -> vector<8x32xf32>
    %c0_40 = arith.constant 0 : index
    %c0_41 = arith.constant 0 : index
    %c0_42 = arith.constant 0 : index
    %126 = vector.load %arg9[%c0_40, %c0_41, %c0_42] : memref<1x1x32xf32, #tpu.memory_space<vmem>>, vector<1x1x32xf32>
    %127 = vector.shape_cast %126 : vector<1x1x32xf32> to vector<1x32xf32>
    %128 = vector.broadcast %127 : vector<1x32xf32> to vector<8x32xf32>
    %129 = arith.addf %125, %128 : vector<8x32xf32>
    %130 = arith.truncf %6 : vector<8x32xf32> to vector<8x32xbf16>
    %c0_43 = arith.constant 0 : index
    %c0_44 = arith.constant 0 : index
    %c0_45 = arith.constant 0 : index
    %131 = vector.load %arg10[%c0_43, %c0_44, %c0_45] : memref<1x32x64xbf16, #tpu.memory_space<vmem>>, vector<1x32x64xbf16>
    %132 = vector.shape_cast %131 : vector<1x32x64xbf16> to vector<32x64xbf16>
    %cst_46 = arith.constant dense<0.000000e+00> : vector<8x64xf32>
    %133 = tpu.matmul %130, %132, %cst_46 {dimension_numbers = #tpu.dot_dimension_numbers<[1], [0], [0], [1], [0, 0, 1, 1], [], []>} : vector<8x32xbf16>, vector<32x64xbf16>, vector<8x64xf32> -> vector<8x64xf32>
    %c0_47 = arith.constant 0 : index
    %c0_48 = arith.constant 0 : index
    %c0_49 = arith.constant 0 : index
    %134 = vector.load %arg11[%c0_47, %c0_48, %c0_49] : memref<1x1x64xf32, #tpu.memory_space<vmem>>, vector<1x1x64xf32>
    %135 = vector.shape_cast %134 : vector<1x1x64xf32> to vector<1x64xf32>
    %136 = vector.broadcast %135 : vector<1x64xf32> to vector<8x64xf32>
    %137 = arith.addf %133, %136 : vector<8x64xf32>
    %138 = vector.extract_strided_slice %137 {offsets = [0, 0], sizes = [8, 32], strides = [1, 1]} : vector<8x64xf32> to vector<8x32xf32>
    %139 = vector.extract_strided_slice %137 {offsets = [0, 32], sizes = [8, 32], strides = [1, 1]} : vector<8x64xf32> to vector<8x32xf32>
    %140 = vector.shape_cast %129 : vector<8x32xf32> to vector<1x8x32xf32>
    %141 = vector.extract_strided_slice %140 {offsets = [0, 0, 0], sizes = [1, 8, 8], strides = [1, 1, 1]} : vector<1x8x32xf32> to vector<1x8x8xf32>
    %142 = vector.extract_strided_slice %140 {offsets = [0, 0, 8], sizes = [1, 8, 8], strides = [1, 1, 1]} : vector<1x8x32xf32> to vector<1x8x8xf32>
    %143 = vector.extract_strided_slice %140 {offsets = [0, 0, 16], sizes = [1, 8, 8], strides = [1, 1, 1]} : vector<1x8x32xf32> to vector<1x8x8xf32>
    %144 = vector.extract_strided_slice %140 {offsets = [0, 0, 24], sizes = [1, 8, 8], strides = [1, 1, 1]} : vector<1x8x32xf32> to vector<1x8x8xf32>
    %145 = vector.shape_cast %141 : vector<1x8x8xf32> to vector<1x1x8x8xf32>
    %146 = vector.shape_cast %142 : vector<1x8x8xf32> to vector<1x1x8x8xf32>
    %147 = vector.shape_cast %143 : vector<1x8x8xf32> to vector<1x1x8x8xf32>
    %148 = vector.shape_cast %144 : vector<1x8x8xf32> to vector<1x1x8x8xf32>
    %149 = tpu.concatenate %145, %146, %147, %148 in 0 : vector<1x1x8x8xf32>, vector<1x1x8x8xf32>, vector<1x1x8x8xf32>, vector<1x1x8x8xf32> -> vector<4x1x8x8xf32>
    %150 = vector.shape_cast %149 : vector<4x1x8x8xf32> to vector<4x8x8xf32>
    %151 = arith.truncf %150 : vector<4x8x8xf32> to vector<4x8x8xbf16>
    %152 = vector.shape_cast %138 : vector<8x32xf32> to vector<1x8x32xf32>
    %153 = vector.extract_strided_slice %152 {offsets = [0, 0, 0], sizes = [1, 8, 8], strides = [1, 1, 1]} : vector<1x8x32xf32> to vector<1x8x8xf32>
    %154 = vector.extract_strided_slice %152 {offsets = [0, 0, 8], sizes = [1, 8, 8], strides = [1, 1, 1]} : vector<1x8x32xf32> to vector<1x8x8xf32>
    %155 = vector.extract_strided_slice %152 {offsets = [0, 0, 16], sizes = [1, 8, 8], strides = [1, 1, 1]} : vector<1x8x32xf32> to vector<1x8x8xf32>
    %156 = vector.extract_strided_slice %152 {offsets = [0, 0, 24], sizes = [1, 8, 8], strides = [1, 1, 1]} : vector<1x8x32xf32> to vector<1x8x8xf32>
    %157 = vector.shape_cast %153 : vector<1x8x8xf32> to vector<1x1x8x8xf32>
    %158 = vector.shape_cast %154 : vector<1x8x8xf32> to vector<1x1x8x8xf32>
    %159 = vector.shape_cast %155 : vector<1x8x8xf32> to vector<1x1x8x8xf32>
    %160 = vector.shape_cast %156 : vector<1x8x8xf32> to vector<1x1x8x8xf32>
    %161 = tpu.concatenate %157, %158, %159, %160 in 0 : vector<1x1x8x8xf32>, vector<1x1x8x8xf32>, vector<1x1x8x8xf32>, vector<1x1x8x8xf32> -> vector<4x1x8x8xf32>
    %162 = vector.shape_cast %161 : vector<4x1x8x8xf32> to vector<4x8x8xf32>
    %163 = arith.truncf %162 : vector<4x8x8xf32> to vector<4x8x8xbf16>
    %164 = vector.shape_cast %139 : vector<8x32xf32> to vector<1x8x32xf32>
    %165 = vector.extract_strided_slice %164 {offsets = [0, 0, 0], sizes = [1, 8, 8], strides = [1, 1, 1]} : vector<1x8x32xf32> to vector<1x8x8xf32>
    %166 = vector.extract_strided_slice %164 {offsets = [0, 0, 8], sizes = [1, 8, 8], strides = [1, 1, 1]} : vector<1x8x32xf32> to vector<1x8x8xf32>
    %167 = vector.extract_strided_slice %164 {offsets = [0, 0, 16], sizes = [1, 8, 8], strides = [1, 1, 1]} : vector<1x8x32xf32> to vector<1x8x8xf32>
    %168 = vector.extract_strided_slice %164 {offsets = [0, 0, 24], sizes = [1, 8, 8], strides = [1, 1, 1]} : vector<1x8x32xf32> to vector<1x8x8xf32>
    %169 = vector.shape_cast %165 : vector<1x8x8xf32> to vector<1x1x8x8xf32>
    %170 = vector.shape_cast %166 : vector<1x8x8xf32> to vector<1x1x8x8xf32>
    %171 = vector.shape_cast %167 : vector<1x8x8xf32> to vector<1x1x8x8xf32>
    %172 = vector.shape_cast %168 : vector<1x8x8xf32> to vector<1x1x8x8xf32>
    %173 = tpu.concatenate %169, %170, %171, %172 in 0 : vector<1x1x8x8xf32>, vector<1x1x8x8xf32>, vector<1x1x8x8xf32>, vector<1x1x8x8xf32> -> vector<4x1x8x8xf32>
    %174 = vector.shape_cast %173 : vector<4x1x8x8xf32> to vector<4x8x8xf32>
    %175 = arith.truncf %174 : vector<4x8x8xf32> to vector<4x8x8xbf16>
    "tpu.trace_start"() <{level = 10 : i32, message = "gqd,gkd->gqk"}> : () -> ()
    %cst_50 = arith.constant dense<0.000000e+00> : vector<4x8x8xf32>
    %176 = tpu.matmul %151, %163, %cst_50 {dimension_numbers = #tpu.dot_dimension_numbers<[2], [2], [1], [1], [0, 0, 0, 1, 1, 1], [0], [0]>} : vector<4x8x8xbf16>, vector<4x8x8xbf16>, vector<4x8x8xf32> -> vector<4x8x8xf32>
    "tpu.trace_stop"() : () -> ()
    %cst_51 = arith.constant 0.353553385 : f32
    %177 = vector.broadcast %cst_51 : f32 to vector<4x8x8xf32>
    %178 = arith.mulf %176, %177 : vector<4x8x8xf32>
    %cst_52 = arith.constant dense<0xFF800000> : vector<4x8xf32>
    %179 = vector.multi_reduction <maximumf>, %178, %cst_52 [2] : vector<4x8x8xf32> to vector<4x8xf32>
    %180 = vector.shape_cast %179 : vector<4x8xf32> to vector<4x8x1xf32>
    %181 = vector.broadcast %180 : vector<4x8x1xf32> to vector<4x8x8xf32>
    %182 = arith.subf %178, %181 : vector<4x8x8xf32>
    %183 = math.exp %182 : vector<4x8x8xf32>
    %cst_53 = arith.constant dense<0.000000e+00> : vector<4x8xf32>
    %184 = vector.multi_reduction <add>, %183, %cst_53 [2] : vector<4x8x8xf32> to vector<4x8xf32>
    %185 = vector.shape_cast %184 : vector<4x8xf32> to vector<4x8x1xf32>
    %186 = tpu.reciprocal %185 {approx = true} : vector<4x8x1xf32> -> vector<4x8x1xf32>
    %187 = vector.broadcast %186 : vector<4x8x1xf32> to vector<4x8x8xf32>
    %188 = arith.mulf %183, %187 : vector<4x8x8xf32>
    %189 = arith.truncf %188 : vector<4x8x8xf32> to vector<4x8x8xbf16>
    "tpu.trace_start"() <{level = 10 : i32, message = "gqk,gkd->gqd"}> : () -> ()
    %cst_54 = arith.constant dense<0.000000e+00> : vector<4x8x8xf32>
    %190 = tpu.matmul %189, %175, %cst_54 {dimension_numbers = #tpu.dot_dimension_numbers<[2], [1], [1], [2], [0, 0, 0, 1, 1, 2], [0], [0]>} : vector<4x8x8xbf16>, vector<4x8x8xbf16>, vector<4x8x8xf32> -> vector<4x8x8xf32>
    "tpu.trace_stop"() : () -> ()
    %191 = vector.shape_cast %190 : vector<4x8x8xf32> to vector<4x1x8x8xf32>
    %192 = vector.extract_strided_slice %191 {offsets = [0, 0, 0, 0], sizes = [1, 1, 8, 8], strides = [1, 1, 1, 1]} : vector<4x1x8x8xf32> to vector<1x1x8x8xf32>
    %193 = vector.shape_cast %192 : vector<1x1x8x8xf32> to vector<1x8x8xf32>
    %194 = vector.extract_strided_slice %191 {offsets = [1, 0, 0, 0], sizes = [1, 1, 8, 8], strides = [1, 1, 1, 1]} : vector<4x1x8x8xf32> to vector<1x1x8x8xf32>
    %195 = vector.shape_cast %194 : vector<1x1x8x8xf32> to vector<1x8x8xf32>
    %196 = vector.extract_strided_slice %191 {offsets = [2, 0, 0, 0], sizes = [1, 1, 8, 8], strides = [1, 1, 1, 1]} : vector<4x1x8x8xf32> to vector<1x1x8x8xf32>
    %197 = vector.shape_cast %196 : vector<1x1x8x8xf32> to vector<1x8x8xf32>
    %198 = vector.extract_strided_slice %191 {offsets = [3, 0, 0, 0], sizes = [1, 1, 8, 8], strides = [1, 1, 1, 1]} : vector<4x1x8x8xf32> to vector<1x1x8x8xf32>
    %199 = vector.shape_cast %198 : vector<1x1x8x8xf32> to vector<1x8x8xf32>
    %200 = tpu.concatenate %193, %195, %197, %199 in 2 : vector<1x8x8xf32>, vector<1x8x8xf32>, vector<1x8x8xf32>, vector<1x8x8xf32> -> vector<1x8x32xf32>
    %201 = vector.shape_cast %200 : vector<1x8x32xf32> to vector<8x32xf32>
    %202 = arith.truncf %201 : vector<8x32xf32> to vector<8x32xbf16>
    %c0_55 = arith.constant 0 : index
    %c0_56 = arith.constant 0 : index
    %c0_57 = arith.constant 0 : index
    %203 = vector.load %arg12[%c0_55, %c0_56, %c0_57] : memref<1x32x32xbf16, #tpu.memory_space<vmem>>, vector<1x32x32xbf16>
    %204 = vector.shape_cast %203 : vector<1x32x32xbf16> to vector<32x32xbf16>
    %cst_58 = arith.constant dense<0.000000e+00> : vector<8x32xf32>
    %205 = tpu.matmul %202, %204, %cst_58 {dimension_numbers = #tpu.dot_dimension_numbers<[1], [0], [0], [1], [0, 0, 1, 1], [], []>} : vector<8x32xbf16>, vector<32x32xbf16>, vector<8x32xf32> -> vector<8x32xf32>
    %c0_59 = arith.constant 0 : index
    %c0_60 = arith.constant 0 : index
    %c0_61 = arith.constant 0 : index
    %206 = vector.load %arg13[%c0_59, %c0_60, %c0_61] : memref<1x1x32xf32, #tpu.memory_space<vmem>>, vector<1x1x32xf32>
    %207 = vector.shape_cast %206 : vector<1x1x32xf32> to vector<1x32xf32>
    %208 = vector.broadcast %207 : vector<1x32xf32> to vector<8x32xf32>
    %209 = arith.addf %205, %208 : vector<8x32xf32>
    %210 = arith.addf %122, %209 : vector<8x32xf32>
    %c0_62 = arith.constant 0 : index
    %c0_63 = arith.constant 0 : index
    %c0_64 = arith.constant 0 : index
    %211 = vector.load %arg16[%c0_62, %c0_63, %c0_64] : memref<1x1x32xf32, #tpu.memory_space<vmem>>, vector<1x1x32xf32>
    %212 = vector.shape_cast %211 : vector<1x1x32xf32> to vector<1x32xf32>
    %c0_65 = arith.constant 0 : index
    %c0_66 = arith.constant 0 : index
    %c0_67 = arith.constant 0 : index
    %213 = vector.load %arg17[%c0_65, %c0_66, %c0_67] : memref<1x1x32xf32, #tpu.memory_space<vmem>>, vector<1x1x32xf32>
    %214 = vector.shape_cast %213 : vector<1x1x32xf32> to vector<1x32xf32>
    %cst_68 = arith.constant dense<0.000000e+00> : vector<8xf32>
    %215 = vector.multi_reduction <add>, %210, %cst_68 [1] : vector<8x32xf32> to vector<8xf32>
    %216 = vector.shape_cast %215 : vector<8xf32> to vector<8x1xf32>
    %cst_69 = arith.constant 3.200000e+01 : f32
    %217 = vector.broadcast %cst_69 : f32 to vector<8x1xf32>
    %218 = arith.divf %216, %217 : vector<8x1xf32>
    %219 = vector.broadcast %218 : vector<8x1xf32> to vector<8x32xf32>
    %220 = arith.subf %210, %219 : vector<8x32xf32>
    %221 = arith.mulf %220, %220 : vector<8x32xf32>
    %cst_70 = arith.constant dense<0.000000e+00> : vector<8xf32>
    %222 = vector.multi_reduction <add>, %221, %cst_70 [1] : vector<8x32xf32> to vector<8xf32>
    %223 = vector.shape_cast %222 : vector<8xf32> to vector<8x1xf32>
    %cst_71 = arith.constant 3.200000e+01 : f32
    %224 = vector.broadcast %cst_71 : f32 to vector<8x1xf32>
    %225 = arith.divf %223, %224 : vector<8x1xf32>
    %226 = vector.broadcast %218 : vector<8x1xf32> to vector<8x32xf32>
    %227 = arith.subf %210, %226 : vector<8x32xf32>
    %cst_72 = arith.constant 9.99999974E-6 : f32
    %228 = vector.broadcast %cst_72 : f32 to vector<8x1xf32>
    %229 = arith.addf %225, %228 : vector<8x1xf32>
    %230 = math.rsqrt %229 : vector<8x1xf32>
    %231 = vector.broadcast %230 : vector<8x1xf32> to vector<8x32xf32>
    %232 = arith.mulf %227, %231 : vector<8x32xf32>
    %233 = vector.broadcast %212 : vector<1x32xf32> to vector<8x32xf32>
    %234 = arith.mulf %232, %233 : vector<8x32xf32>
    %235 = vector.broadcast %214 : vector<1x32xf32> to vector<8x32xf32>
    %236 = arith.addf %234, %235 : vector<8x32xf32>
    %237 = arith.truncf %236 : vector<8x32xf32> to vector<8x32xbf16>
    %c0_73 = arith.constant 0 : index
    %c0_74 = arith.constant 0 : index
    %c0_75 = arith.constant 0 : index
    %238 = vector.load %arg20[%c0_73, %c0_74, %c0_75] : memref<1x32x128xbf16, #tpu.memory_space<vmem>>, vector<1x32x128xbf16>
    %239 = vector.shape_cast %238 : vector<1x32x128xbf16> to vector<32x128xbf16>
    %cst_76 = arith.constant dense<0.000000e+00> : vector<8x128xf32>
    %240 = tpu.matmul %237, %239, %cst_76 {dimension_numbers = #tpu.dot_dimension_numbers<[1], [0], [0], [1], [0, 0, 1, 1], [], []>} : vector<8x32xbf16>, vector<32x128xbf16>, vector<8x128xf32> -> vector<8x128xf32>
    %c0_77 = arith.constant 0 : index
    %c0_78 = arith.constant 0 : index
    %c0_79 = arith.constant 0 : index
    %241 = vector.load %arg21[%c0_77, %c0_78, %c0_79] : memref<1x1x128xf32, #tpu.memory_space<vmem>>, vector<1x1x128xf32>
    %242 = vector.shape_cast %241 : vector<1x1x128xf32> to vector<1x128xf32>
    %243 = vector.broadcast %242 : vector<1x128xf32> to vector<8x128xf32>
    %244 = arith.addf %240, %243 : vector<8x128xf32>
    %cst_80 = arith.constant 0.000000e+00 : f32
    %245 = vector.broadcast %cst_80 : f32 to vector<8x128xf32>
    %246 = arith.maximumf %244, %245 : vector<8x128xf32>
    %247 = arith.truncf %246 : vector<8x128xf32> to vector<8x128xbf16>
    %c0_81 = arith.constant 0 : index
    %c0_82 = arith.constant 0 : index
    %c0_83 = arith.constant 0 : index
    %248 = vector.load %arg22[%c0_81, %c0_82, %c0_83] : memref<1x128x32xbf16, #tpu.memory_space<vmem>>, vector<1x128x32xbf16>
    %249 = vector.shape_cast %248 : vector<1x128x32xbf16> to vector<128x32xbf16>
    %cst_84 = arith.constant dense<0.000000e+00> : vector<8x32xf32>
    %250 = tpu.matmul %247, %249, %cst_84 {dimension_numbers = #tpu.dot_dimension_numbers<[1], [0], [0], [1], [0, 0, 1, 1], [], []>} : vector<8x128xbf16>, vector<128x32xbf16>, vector<8x32xf32> -> vector<8x32xf32>
    %c0_85 = arith.constant 0 : index
    %c0_86 = arith.constant 0 : index
    %c0_87 = arith.constant 0 : index
    %251 = vector.load %arg23[%c0_85, %c0_86, %c0_87] : memref<1x1x32xf32, #tpu.memory_space<vmem>>, vector<1x1x32xf32>
    %252 = vector.shape_cast %251 : vector<1x1x32xf32> to vector<1x32xf32>
    %253 = vector.broadcast %252 : vector<1x32xf32> to vector<8x32xf32>
    %254 = arith.addf %250, %253 : vector<8x32xf32>
    %255 = arith.addf %254, %236 : vector<8x32xf32>
    %c0_88 = arith.constant 0 : index
    %c0_89 = arith.constant 0 : index
    %c0_90 = arith.constant 0 : index
    %256 = vector.load %arg18[%c0_88, %c0_89, %c0_90] : memref<1x1x32xf32, #tpu.memory_space<vmem>>, vector<1x1x32xf32>
    %257 = vector.shape_cast %256 : vector<1x1x32xf32> to vector<1x32xf32>
    %c0_91 = arith.constant 0 : index
    %c0_92 = arith.constant 0 : index
    %c0_93 = arith.constant 0 : index
    %258 = vector.load %arg19[%c0_91, %c0_92, %c0_93] : memref<1x1x32xf32, #tpu.memory_space<vmem>>, vector<1x1x32xf32>
    %259 = vector.shape_cast %258 : vector<1x1x32xf32> to vector<1x32xf32>
    %cst_94 = arith.constant dense<0.000000e+00> : vector<8xf32>
    %260 = vector.multi_reduction <add>, %255, %cst_94 [1] : vector<8x32xf32> to vector<8xf32>
    %261 = vector.shape_cast %260 : vector<8xf32> to vector<8x1xf32>
    %cst_95 = arith.constant 3.200000e+01 : f32
    %262 = vector.broadcast %cst_95 : f32 to vector<8x1xf32>
    %263 = arith.divf %261, %262 : vector<8x1xf32>
    %264 = vector.broadcast %263 : vector<8x1xf32> to vector<8x32xf32>
    %265 = arith.subf %255, %264 : vector<8x32xf32>
    %266 = arith.mulf %265, %265 : vector<8x32xf32>
    %cst_96 = arith.constant dense<0.000000e+00> : vector<8xf32>
    %267 = vector.multi_reduction <add>, %266, %cst_96 [1] : vector<8x32xf32> to vector<8xf32>
    %268 = vector.shape_cast %267 : vector<8xf32> to vector<8x1xf32>
    %cst_97 = arith.constant 3.200000e+01 : f32
    %269 = vector.broadcast %cst_97 : f32 to vector<8x1xf32>
    %270 = arith.divf %268, %269 : vector<8x1xf32>
    %271 = vector.broadcast %263 : vector<8x1xf32> to vector<8x32xf32>
    %272 = arith.subf %255, %271 : vector<8x32xf32>
    %cst_98 = arith.constant 9.99999974E-6 : f32
    %273 = vector.broadcast %cst_98 : f32 to vector<8x1xf32>
    %274 = arith.addf %270, %273 : vector<8x1xf32>
    %275 = math.rsqrt %274 : vector<8x1xf32>
    %276 = vector.broadcast %275 : vector<8x1xf32> to vector<8x32xf32>
    %277 = arith.mulf %272, %276 : vector<8x32xf32>
    %278 = vector.broadcast %257 : vector<1x32xf32> to vector<8x32xf32>
    %279 = arith.mulf %277, %278 : vector<8x32xf32>
    %280 = vector.broadcast %259 : vector<1x32xf32> to vector<8x32xf32>
    %281 = arith.addf %279, %280 : vector<8x32xf32>
    %282 = vector.shape_cast %281 : vector<8x32xf32> to vector<1x8x32xf32>
    %c0_99 = arith.constant 0 : index
    %c0_100 = arith.constant 0 : index
    %c0_101 = arith.constant 0 : index
    %283 = vector.load %arg24[%c0_99, %c0_100, %c0_101] : memref<1x8x32xf32, #tpu.memory_space<vmem>>, vector<1x8x32xf32>
    tpu.vector_store %arg24[%c0_99, %c0_100, %c0_101], %282 {strides = array<i32>} : memref<1x8x32xf32, #tpu.memory_space<vmem>>, vector<1x8x32xf32>,
    return
  }
  func.func @transform_0(%arg0: i32, %arg1: i32) -> (i32, i32, i32) {
    %c0_i32 = arith.constant 0 : i32
    %c0_i32_0 = arith.constant 0 : i32
    %c0_i32_1 = arith.constant 0 : i32
    return %arg0, %c0_i32, %c0_i32_0 : i32, i32, i32
  }
  func.func @transform_1(%arg0: i32, %arg1: i32) -> (i32, i32, i32) {
    %c0_i32 = arith.constant 0 : i32
    %c0_i32_0 = arith.constant 0 : i32
    %c0_i32_1 = arith.constant 0 : i32
    return %arg0, %c0_i32, %c0_i32_0 : i32, i32, i32
  }
  func.func @transform_2(%arg0: i32, %arg1: i32) -> (i32, i32, i32) {
    %c0_i32 = arith.constant 0 : i32
    %c0_i32_0 = arith.constant 0 : i32
    %c0_i32_1 = arith.constant 0 : i32
    return %arg1, %c0_i32, %c0_i32_0 : i32, i32, i32
  }
  func.func @transform_3(%arg0: i32, %arg1: i32) -> (i32, i32, i32) {
    %c0_i32 = arith.constant 0 : i32
    %c0_i32_0 = arith.constant 0 : i32
    %c0_i32_1 = arith.constant 0 : i32
    return %arg1, %c0_i32, %c0_i32_0 : i32, i32, i32
  }
  func.func @transform_4(%arg0: i32, %arg1: i32) -> (i32, i32, i32) {
    %c0_i32 = arith.constant 0 : i32
    %c0_i32_0 = arith.constant 0 : i32
    %c0_i32_1 = arith.constant 0 : i32
    return %arg1, %c0_i32, %c0_i32_0 : i32, i32, i32
  }
  func.func @transform_5(%arg0: i32, %arg1: i32) -> (i32, i32, i32) {
    %c0_i32 = arith.constant 0 : i32
    %c0_i32_0 = arith.constant 0 : i32
    %c0_i32_1 = arith.constant 0 : i32
    return %arg1, %c0_i32, %c0_i32_0 : i32, i32, i32
  }
  func.func @transform_6(%arg0: i32, %arg1: i32) -> (i32, i32, i32) {
    %c0_i32 = arith.constant 0 : i32
    %c0_i32_0 = arith.constant 0 : i32
    %c0_i32_1 = arith.constant 0 : i32
    return %arg1, %c0_i32, %c0_i32_0 : i32, i32, i32
  }
  func.func @transform_7(%arg0: i32, %arg1: i32) -> (i32, i32, i32) {
    %c0_i32 = arith.constant 0 : i32
    %c0_i32_0 = arith.constant 0 : i32
    %c0_i32_1 = arith.constant 0 : i32
    return %arg1, %c0_i32, %c0_i32_0 : i32, i32, i32
  }
  func.func @transform_8(%arg0: i32, %arg1: i32) -> (i32, i32, i32) {
    %c0_i32 = arith.constant 0 : i32
    %c0_i32_0 = arith.constant 0 : i32
    %c0_i32_1 = arith.constant 0 : i32
    return %arg1, %c0_i32, %c0_i32_0 : i32, i32, i32
  }
  func.func @transform_9(%arg0: i32, %arg1: i32) -> (i32, i32, i32) {
    %c0_i32 = arith.constant 0 : i32
    %c0_i32_0 = arith.constant 0 : i32
    %c0_i32_1 = arith.constant 0 : i32
    return %arg1, %c0_i32, %c0_i32_0 : i32, i32, i32
  }
  func.func @transform_10(%arg0: i32, %arg1: i32) -> (i32, i32, i32) {
    %c0_i32 = arith.constant 0 : i32
    %c0_i32_0 = arith.constant 0 : i32
    %c0_i32_1 = arith.constant 0 : i32
    return %arg1, %c0_i32, %c0_i32_0 : i32, i32, i32
  }
  func.func @transform_11(%arg0: i32, %arg1: i32) -> (i32, i32, i32) {
    %c0_i32 = arith.constant 0 : i32
    %c0_i32_0 = arith.constant 0 : i32
    %c0_i32_1 = arith.constant 0 : i32
    return %arg1, %c0_i32, %c0_i32_0 : i32, i32, i32
  }
  func.func @transform_12(%arg0: i32, %arg1: i32) -> (i32, i32, i32) {
    %c0_i32 = arith.constant 0 : i32
    %c0_i32_0 = arith.constant 0 : i32
    %c0_i32_1 = arith.constant 0 : i32
    return %arg1, %c0_i32, %c0_i32_0 : i32, i32, i32
  }
  func.func @transform_13(%arg0: i32, %arg1: i32) -> (i32, i32, i32) {
    %c0_i32 = arith.constant 0 : i32
    %c0_i32_0 = arith.constant 0 : i32
    %c0_i32_1 = arith.constant 0 : i32
    return %arg1, %c0_i32, %c0_i32_0 : i32, i32, i32
  }
  func.func @transform_14(%arg0: i32, %arg1: i32) -> (i32, i32, i32) {
    %c0_i32 = arith.constant 0 : i32
    %c0_i32_0 = arith.constant 0 : i32
    %c0_i32_1 = arith.constant 0 : i32
    return %arg1, %c0_i32, %c0_i32_0 : i32, i32, i32
  }
  func.func @transform_15(%arg0: i32, %arg1: i32) -> (i32, i32, i32) {
    %c0_i32 = arith.constant 0 : i32
    %c0_i32_0 = arith.constant 0 : i32
    %c0_i32_1 = arith.constant 0 : i32
    return %arg1, %c0_i32, %c0_i32_0 : i32, i32, i32
  }
  func.func @transform_16(%arg0: i32, %arg1: i32) -> (i32, i32, i32) {
    %c0_i32 = arith.constant 0 : i32
    %c0_i32_0 = arith.constant 0 : i32
    %c0_i32_1 = arith.constant 0 : i32
    return %arg1, %c0_i32, %c0_i32_0 : i32, i32, i32
  }
  func.func @transform_17(%arg0: i32, %arg1: i32) -> (i32, i32, i32) {
    %c0_i32 = arith.constant 0 : i32
    %c0_i32_0 = arith.constant 0 : i32
    %c0_i32_1 = arith.constant 0 : i32
    return %arg1, %c0_i32, %c0_i32_0 : i32, i32, i32
  }
  func.func @transform_18(%arg0: i32, %arg1: i32) -> (i32, i32, i32) {
    %c0_i32 = arith.constant 0 : i32
    %c0_i32_0 = arith.constant 0 : i32
    %c0_i32_1 = arith.constant 0 : i32
    return %arg1, %c0_i32, %c0_i32_0 : i32, i32, i32
  }
  func.func @transform_19(%arg0: i32, %arg1: i32) -> (i32, i32, i32) {
    %c0_i32 = arith.constant 0 : i32
    %c0_i32_0 = arith.constant 0 : i32
    %c0_i32_1 = arith.constant 0 : i32
    return %arg1, %c0_i32, %c0_i32_0 : i32, i32, i32
  }
  func.func @transform_20(%arg0: i32, %arg1: i32) -> (i32, i32, i32) {
    %c0_i32 = arith.constant 0 : i32
    %c0_i32_0 = arith.constant 0 : i32
    %c0_i32_1 = arith.constant 0 : i32
    return %arg1, %c0_i32, %c0_i32_0 : i32, i32, i32
  }
  func.func @transform_21(%arg0: i32, %arg1: i32) -> (i32, i32, i32) {
    %c0_i32 = arith.constant 0 : i32
    %c0_i32_0 = arith.constant 0 : i32
    %c0_i32_1 = arith.constant 0 : i32
    return %arg1, %c0_i32, %c0_i32_0 : i32, i32, i32
  }
  func.func @transform_22(%arg0: i32, %arg1: i32) -> (i32, i32, i32) {
    %c0_i32 = arith.constant 0 : i32
    %c0_i32_0 = arith.constant 0 : i32
    %c0_i32_1 = arith.constant 0 : i32
    return %arg0, %c0_i32, %c0_i32_0 : i32, i32, i32
  }
}

</mosaic_0001>

<llo_original>
// kernel: decoder_forward.3
$region0: #{decoder_forward.3}
  #allocation0 [shape = 'u32[]', space=smem, size = 0x4, offset = 0x4, fixed_abs, tag = 'smem constant byte address 0x4 - core index']
  #allocation1 [shape = 'u32[144,128]{1,0:T(1,128)}', space=vmem, size = 0x12000, scoped, tag = 'internal scratch']
  %s0 = inlined_call_operand.vmem [shape: f32[2,8,32], index: 0, kind: input, shape index: {}]
  %s1 = inlined_call_operand.vmem [shape: bf16[32,128], index: 1, kind: input, shape index: {}]
  %s2 = inlined_call_operand.vmem [shape: f32[1,128], index: 2, kind: input, shape index: {}]
  %s3 = inlined_call_operand.hbm [shape: f32[2,8,128], index: 3, kind: output, shape index: {}]
  %s4 = sld [smem:[#allocation0]]
  $region45: #{decoder_forward.3} parent=0
    _
  %s6 = ssub.s32 1, %s4
  %s7 = scalar_select 0, %s6, %s4
  $region1: #{decoder_forward.3} parent=0
    #allocation2 [shape = 'u8[8192]{0}', space=vmem, size = 0x2000, scoped, tag = 'output window, operand 0']
    #allocation3 [shape = 's32[2]{0}', space=sflag, size = 0x8, scoped, tag = 'scoped memory for decoder_forward.3']
    %8 = vsyncpa [#allocation3], 0
    %s9 = scalar_lea.sflag [#allocation3], 1
    %10 = vsyncpa %s9, 0
    loop: start=0, step=1, limit=4
    $region2: #{decoder_forward.3} parent=1 // loop_pre_header
      _
    $region3: #{decoder_forward.3} parent=1 // loop_header
      %s12 = sphi 0, %s16
      %p13 = scmp.ge.s32.totalorder %s12, 4
      %s22 = sphi 0, %s24
      %s25 = sphi 0, %s22
      %s26 = sphi 0, %s25
      %s42 = sphi 0, %s26
      %s46 = sphi 0, %s46
      %s48 = sphi 0, %s46
      %s49 = sphi 0, %s48
      %s63 = sphi 0, %s49
      %s67 = sphi 0, %s67
      %s69 = sphi 0, %s67
      %s70 = sphi 0, %s69
      %s84 = sphi 0, %s70
      %s90 = sphi 0, %s92
      %s93 = sphi 0, %s90
      %s94 = sphi 0, %s93
      %s110 = sphi 0, %s94
    $region4: #{decoder_forward.3} parent=1 // loop_header_branch
      %15 = sbr.rel (%p13) target = $region8
    $region5: #{decoder_forward.3} parent=1 // loop_body
      %s17 = ssub.s32 %s12, 1
      %s18 = ssub.s32 %s12, 2
      %s19 = sadd.s32 %s12, 1
      %s20 = ssub.s32 %s12, %s19
      %p21 = scmp.eq.s32.totalorder %s20, 0
      %s23 = sadd.s32 %s22, 1
      %s24 = scalar_select %p21, %s22, %s23
      %p27 = pneg %p21
      %p28 = scmp.eq.s32.totalorder %s12, 1
      %p29 = por %p27, %p28
      %p30 = scmp.ne.s32.totalorder %s22, %s25
      %p31 = scmp.eq.s32.totalorder %s12, 0
      %p32 = por %p30, %p31
      %p33 = scmp.ne.s32.totalorder %s22, %s25
      %p34 = scmp.eq.s32.totalorder %s17, 1
      %p35 = por %p33, %p34
      %p36 = scmp.ne.s32.totalorder %s25, %s26
      %p37 = scmp.eq.s32.totalorder %s17, 0
      %p38 = por %p36, %p37
      %p39 = scmp.ne.s32.totalorder %s25, %s26
      %p40 = scmp.eq.s32.totalorder %s18, 1
      %p41 = por %p39, %p40
      %p43 = scmp.ne.s32.totalorder %s26, %s42
      %p44 = scmp.eq.s32.totalorder %s18, 0
      %p45 = por %p43, %p44
      %s47 = sadd.s32 %s46, 1
      %p50 = scmp.eq.s32.totalorder %s12, 1
      %p51 = scmp.ne.s32.totalorder %s46, %s48
      %p52 = scmp.eq.s32.totalorder %s12, 0
      %p53 = por %p51, %p52
      %p54 = scmp.ne.s32.totalorder %s46, %s48
      %p55 = scmp.eq.s32.totalorder %s17, 1
      %p56 = por %p54, %p55
      %p57 = scmp.ne.s32.totalorder %s48, %s49
      %p58 = scmp.eq.s32.totalorder %s17, 0
      %p59 = por %p57, %p58
      %p60 = scmp.ne.s32.totalorder %s48, %s49
      %p61 = scmp.eq.s32.totalorder %s18, 1
      %p62 = por %p60, %p61
      %p64 = scmp.ne.s32.totalorder %s49, %s63
      %p65 = scmp.eq.s32.totalorder %s18, 0
      %p66 = por %p64, %p65
      %s68 = sadd.s32 %s67, 1
      %p71 = scmp.eq.s32.totalorder %s12, 1
      %p72 = scmp.ne.s32.totalorder %s67, %s69
      %p73 = scmp.eq.s32.totalorder %s12, 0
      %p74 = por %p72, %p73
      %p75 = scmp.ne.s32.totalorder %s67, %s69
      %p76 = scmp.eq.s32.totalorder %s17, 1
      %p77 = por %p75, %p76
      %p78 = scmp.ne.s32.totalorder %s69, %s70
      %p79 = scmp.eq.s32.totalorder %s17, 0
      %p80 = por %p78, %p79
      %p81 = scmp.ne.s32.totalorder %s69, %s70
      %p82 = scmp.eq.s32.totalorder %s18, 1
      %p83 = por %p81, %p82
      %p85 = scmp.ne.s32.totalorder %s70, %s84
      %p86 = scmp.eq.s32.totalorder %s18, 0
      %p87 = por %p85, %p86
      %s88 = ssub.s32 %s12, %s19
      %p89 = scmp.eq.s32.totalorder %s88, 0
      %s91 = sadd.s32 %s90, 1
      %s92 = scalar_select %p89, %s90, %s91
      %p95 = pneg %p89
      %p96 = scmp.eq.s32.totalorder %s12, 1
      %p97 = por %p95, %p96
      %p98 = scmp.ne.s32.totalorder %s90, %s93
      %p99 = scmp.eq.s32.totalorder %s12, 0
      %p100 = por %p98, %p99
      %p101 = scmp.ne.s32.totalorder %s90, %s93
      %p102 = scmp.eq.s32.totalorder %s17, 1
      %p103 = por %p101, %p102
      %p104 = scmp.ne.s32.totalorder %s93, %s94
      %p105 = scmp.eq.s32.totalorder %s17, 0
      %p106 = por %p104, %p105
      %p107 = scmp.ne.s32.totalorder %s93, %s94
      %p108 = scmp.eq.s32.totalorder %s18, 1
      %p109 = por %p107, %p108
      %p111 = scmp.ne.s32.totalorder %s94, %s110
      %p112 = scmp.eq.s32.totalorder %s18, 0
      %p113 = por %p111, %p112
      %p114 = scmp.le.s32.totalorder 1, %s12
      %p115 = scmp.lt.s32.totalorder %s12, 3
      %p116 = pnand %p114, %p115
      %p117 = pneg %p116
      // Predicated region
      $region9: #{decoder_forward.3} parent=5 // pred_check
        _
      $region10: #{decoder_forward.3} parent=5 // pred_check_branch
        %119 = sbr.rel (%p116) target = $region12
      $region11: #{decoder_forward.3} parent=5 // pred_region
        %s120 = ssub.s32 %s12, 1
        // Predicated region
        $region13: #{decoder_forward.3} parent=11 // pred_check
          %p121 = pneg %p59
        $region14: #{decoder_forward.3} parent=11 // pred_check_branch
          %123 = sbr.rel (%p121) target = $region16
        $region15: #{decoder_forward.3} parent=11 // pred_region
          _
        $region16: #{decoder_forward.3} parent=11 // pred_fallthru
          _
        // Predicated region
        $region17: #{decoder_forward.3} parent=11 // pred_check
          %p124 = pneg %p80
        $region18: #{decoder_forward.3} parent=11 // pred_check_branch
          %126 = sbr.rel (%p124) target = $region20
        $region19: #{decoder_forward.3} parent=11 // pred_region
          _
        $region20: #{decoder_forward.3} parent=11 // pred_fallthru
          _
      $region12: #{decoder_forward.3} parent=5 // pred_fallthru
        _
      %p127 = scmp.lt.s32.totalorder %s12, 2
      // Predicated region
      $region21: #{decoder_forward.3} parent=5 // pred_check
        %p128 = pneg %p127
      $region22: #{decoder_forward.3} parent=5 // pred_check_branch
        %130 = sbr.rel (%p128) target = $region24
      $region23: #{decoder_forward.3} parent=5 // pred_region
        // Predicated region
        $region25: #{decoder_forward.3} parent=23 // pred_check
          %p131 = pneg %p32
        $region26: #{decoder_forward.3} parent=23 // pred_check_branch
          %133 = sbr.rel (%p131) target = $region28
        $region27: #{decoder_forward.3} parent=23 // pred_region
          %p134 = scmp.lt.s32.totalorder %s12, 1
          %s135 = scalar_select %p134, %s12, 1
          %s136 = smul.addr %s135, 8
          %s137 = scalar_lea.vmem %s0, %s136
        $region28: #{decoder_forward.3} parent=23 // pred_fallthru
          _
      $region24: #{decoder_forward.3} parent=5 // pred_fallthru
        _
      %p138 = scmp.le.s32.totalorder 1, %s12
      %p139 = scmp.lt.s32.totalorder %s12, 3
      %p140 = pnand %p138, %p139
      %p141 = pneg %p140
      // Predicated region
      $region29: #{decoder_forward.3} parent=5 // pred_check
        _
      $region30: #{decoder_forward.3} parent=5 // pred_check_branch
        %143 = sbr.rel (%p140) target = $region32
      $region31: #{decoder_forward.3} parent=5 // pred_region
        %s144 = ssub.s32 %s12, 1
        %p145 = scmp.lt.s32.totalorder %s17, 1
        %s146 = scalar_select %p145, %s17, 1
        %s147 = smul.addr %s146, 8
        %s148 = scalar_lea.vmem %s0, %s147
        %p149 = pneg %p38
        %p150 = pneg %p35
        %p151 = pneg %p59
        %p152 = pneg %p56
        %p153 = pneg %p80
        %p154 = pneg %p77
        %p155 = pneg %p106
        %p156 = pneg %p103
        %s157 = sand.u32 %s93, 1
        %s158 = scalar_lea.sflag [#allocation3], %s157
        %s159 = sand.u32 %s93, 1
        %s160 = smul.addr %s159, 8
        %s161 = scalar_lea.vmem [#allocation2], %s160
        %p162 = scmp.lt.s32.totalorder %s17, 1
        %s163 = scalar_select %p162, %s17, 1
        %s164 = smul.addr %s163, 8
        %s165 = scalar_lea.vmem %s0, %s164
        %v167 = vld [vmem:[%s165] sm:$0xff]
        %v168 = vpack.c.bf16 %v167, %v167
        %v169 = vld [vmem:[%s1] sm:$0xf]
        %v170 = vld [vmem:[%s1 + $0x4] sm:$0xf]
        %v171 = vld [vmem:[%s1 + $0x8] sm:$0xf]
        %v172 = vld [vmem:[%s1 + $0xc] sm:$0xf]
        %v173 = vld [vmem:[%s2] sm:$0x1]
        %v175 = vlaneseq
        %v176 = vshrl.u32 %v175, 7
        %v177 = vsub.s32 0, %v176
        %v178 = vrot.slane %v173, %v177
        %v184 = vunpack.c.l.b16 %v169
        %v185 = vunpack.c.l.b16 %v170
        %v186 = vunpack.c.l.b16 %v171
        %v187 = vunpack.c.l.b16 %v172
        %v188 = vpack.c.b16 %v185, %v184
        %v189 = vpack.c.b16 %v187, %v186
        %vm192 = vcmask 261120
        %v194 = vsel %vm192, %v168, 0
        %196 = vmatprep.subr.bf16.mxu0 0
        %197 = vmatpush1.bf16.msra.mxu0 %v188
        %198 = vmatprep.subr.bf16.mxu0 0
        %199 = vmatpush1.bf16.msra.mxu0 %v189
        %200 = vmatprep.subr.bf16.mxu0 0
        %201 = vmatpush1.bf16.msra.mxu0 0
        %202 = vmatprep.subr.bf16.mxu0 0
        %203 = vmatpush1.bf16.msra.mxu0 0
        %204 = vmatprep.subr.bf16.mxu0 0
        %205 = vmatpush1.bf16.msra.mxu0 0
        %206 = vmatprep.subr.bf16.mxu0 0
        %207 = vmatpush1.bf16.msra.mxu0 0
        %208 = vmatprep.subr.bf16.mxu0 0
        %209 = vmatpush1.bf16.msra.mxu0 0
        %210 = vmatprep.subr.bf16.mxu0 0
        %211 = vmatpush1.bf16.msra.mxu0 0
        %212 = vmatprep.subr.bf16.mxu0 0
        %213 = vmatpush1.bf16.msra.mxu0 0
        %214 = vmatprep.subr.bf16.mxu0 0
        %215 = vmatpush1.bf16.msra.mxu0 0
        %216 = vmatprep.subr.bf16.mxu0 0
        %217 = vmatpush1.bf16.msra.mxu0 0
        %218 = vmatprep.subr.bf16.mxu0 0
        %219 = vmatpush1.bf16.msra.mxu0 0
        %220 = vmatprep.subr.bf16.mxu0 0
        %221 = vmatpush1.bf16.msra.mxu0 0
        %222 = vmatprep.subr.bf16.mxu0 0
        %223 = vmatpush1.bf16.msra.mxu0 0
        %224 = vmatprep.subr.bf16.mxu0 0
        %225 = vmatpush1.bf16.msra.mxu0 0
        %226 = vmatprep.subr.bf16.mxu0 0
        %227 = vmatpush1.bf16.msra.mxu0 0
        %228 = vmatprep.mubr.bf16.mxu0 0
        %229 = vmatmul.mubr.bf16.gmra.mrb[0].mxu0 %v194
        %v230 = vpop.f32.mrb[0].mxu0
        %v231 = vadd.f32 %v178, %v230
        %v232 = vpop.f32.mrb[0].mxu0
        %v233 = vpop.f32.mrb[0].mxu0
        %v234 = vpop.f32.mrb[0].mxu0
        %235 = vdwg.mxu0
        %v236 = vlaneseq
        %v237 = vand.u32 %v236, 127
        %vm238 = vcmp.lt.s32.totalorder %v237, 16
        %v239 = vsel %vm238, %v231, -1e+30
        %240 = vmax.xlane.f32.xlu0 %v239
        %v241 = vpop.xlane.xlu0 %240
        %v242 = vsub.f32 %v239, %v241
        %v243 = vmul.f32 %v242, 1.442695
        %v244 = vpow.pop %v243
        %245 = vadd.xlane.f32.xlu0 %v244
        %v246 = vpop.xlane.xlu0 %245
        %v247 = vrcp.pop %v246
        %v248 = vmul.f32 %v244, %v247
        %249 = vst [vmem:[%s161] sm:$0xff] %v248
        %s250 = sand.u32 %s93, 1
        %s251 = scalar_lea.sflag [#allocation3], %s250
        %s252 = sand.u32 %s93, 1
        %s253 = smul.addr %s252, 8
        %s254 = scalar_lea.vmem [#allocation2], %s253
        // Predicated region
        $region33: #{decoder_forward.3} parent=31 // pred_check
          %p255 = pneg %p103
        $region34: #{decoder_forward.3} parent=31 // pred_check_branch
          %257 = sbr.rel (%p255) target = $region36
        $region35: #{decoder_forward.3} parent=31 // pred_region
          %s259 = ssub.s32 128, 128
          %260 = vsyncadd %s251, %s259
          %s261 = smul.addr %s17, 128
          %s262 = scalar_lea.hbm %s3, %s261
          %s264 = sshll.u32 %s254, 4
          %s265 = int_to_ptr.vmem [resolvable:$true] %s264
          %267 = dma.vmem_to_hbm [thread:$0]  %s265, 128, %s262, %s251
        $region36: #{decoder_forward.3} parent=31 // pred_fallthru
          _
      $region32: #{decoder_forward.3} parent=5 // pred_fallthru
        _
      %p268 = scmp.le.s32.totalorder 2, %s12
      // Predicated region
      $region37: #{decoder_forward.3} parent=5 // pred_check
        %p269 = pneg %p268
      $region38: #{decoder_forward.3} parent=5 // pred_check_branch
        %271 = sbr.rel (%p269) target = $region40
      $region39: #{decoder_forward.3} parent=5 // pred_region
        %s272 = ssub.s32 %s12, 2
        // Predicated region
        $region41: #{decoder_forward.3} parent=39 // pred_check
          %p273 = pneg %p109
        $region42: #{decoder_forward.3} parent=39 // pred_check_branch
          %275 = sbr.rel (%p273) target = $region44
        $region43: #{decoder_forward.3} parent=39 // pred_region
          %s276 = sand.u32 %s94, 1
          %s277 = scalar_lea.sflag [#allocation3], %s276
          %s278 = sand.u32 %s94, 1
          %s279 = smul.addr %s278, 8
          %s280 = scalar_lea.vmem [#allocation2], %s279
          %281 = dma.done %s277, 128
        $region44: #{decoder_forward.3} parent=39 // pred_fallthru
          _
      $region40: #{decoder_forward.3} parent=5 // pred_fallthru
        _
    $region6: #{decoder_forward.3} parent=1 // loop_footer
      %s16 = sadd.s32 1, %s12
    $region7: #{decoder_forward.3} parent=1 // loop_footer_branch
      %11 = sbr.rel target = $region3
    $region8: #{decoder_forward.3} parent=1 // loop_exit
      _
    %282 = vsyncpa [#allocation3], 1
    %s283 = scalar_lea.sflag [#allocation3], 1
    %284 = vsyncpa %s283, 1

// kernel: decoder_forward.2
$region0: #{decoder_forward.2}
  #allocation0 [shape = 'u32[]', space=smem, size = 0x4, offset = 0x4, fixed_abs, tag = 'smem constant byte address 0x4 - core index']
  #allocation1 [shape = 'u32[144,128]{1,0:T(1,128)}', space=vmem, size = 0x12000, scoped, tag = 'internal scratch']
  %s0 = inlined_call_operand.hbm [shape: f32[2,8,32], index: 0, kind: input, shape index: {}]
  %s1 = inlined_call_operand.hbm [shape: f32[2,8,32], index: 1, kind: input, shape index: {}]
  %s2 = inlined_call_operand.vmem [shape: bf16[2,32,96], index: 2, kind: input, shape index: {}]
  %s3 = inlined_call_operand.hbm [shape: f32[2,1,96], index: 3, kind: input, shape index: {}]
  %s4 = inlined_call_operand.vmem [shape: bf16[2,32,32], index: 4, kind: input, shape index: {}]
  %s5 = inlined_call_operand.hbm [shape: f32[2,1,32], index: 5, kind: input, shape index: {}]
  %s6 = inlined_call_operand.vmem [shape: bf16[2,32,32], index: 6, kind: input, shape index: {}]
  %s7 = inlined_call_operand.hbm [shape: f32[2,1,32], index: 7, kind: input, shape index: {}]
  %s8 = inlined_call_operand.vmem [shape: bf16[2,32,64], index: 8, kind: input, shape index: {}]
  %s9 = inlined_call_operand.hbm [shape: f32[2,1,64], index: 9, kind: input, shape index: {}]
  %s10 = inlined_call_operand.vmem [shape: bf16[2,32,32], index: 10, kind: input, shape index: {}]
  %s11 = inlined_call_operand.hbm [shape: f32[2,1,32], index: 11, kind: input, shape index: {}]
  %s12 = inlined_call_operand.hbm [shape: f32[2,1,32], index: 12, kind: input, shape index: {}]
  %s13 = inlined_call_operand.hbm [shape: f32[2,1,32], index: 13, kind: input, shape index: {}]
  %s14 = inlined_call_operand.hbm [shape: f32[2,1,32], index: 14, kind: input, shape index: {}]
  %s15 = inlined_call_operand.hbm [shape: f32[2,1,32], index: 15, kind: input, shape index: {}]
  %s16 = inlined_call_operand.hbm [shape: f32[2,1,32], index: 16, kind: input, shape index: {}]
  %s17 = inlined_call_operand.hbm [shape: f32[2,1,32], index: 17, kind: input, shape index: {}]
  %s18 = inlined_call_operand.vmem [shape: bf16[2,32,128], index: 18, kind: input, shape index: {}]
  %s19 = inlined_call_operand.hbm [shape: f32[2,1,128], index: 19, kind: input, shape index: {}]
  %s20 = inlined_call_operand.vmem [shape: bf16[2,128,32], index: 20, kind: input, shape index: {}]
  %s21 = inlined_call_operand.hbm [shape: f32[2,1,32], index: 21, kind: input, shape index: {}]
  %s22 = inlined_call_operand.vmem [shape: f32[2,8,32], index: 22, kind: output, shape index: {}]
  %s23 = sld [smem:[#allocation0]]
  $region185: #{decoder_forward.2} parent=0
    _
  %s25 = ssub.s32 1, %s23
  %s26 = scalar_select 0, %s25, %s23
  $region1: #{decoder_forward.2} parent=0
    #allocation2 [shape = 'u8[8192]{0}', space=vmem, size = 0x2000, scoped, tag = 'input window, operand 0']
    #allocation3 [shape = 's32[2]{0}', space=sflag, size = 0x8, scoped, tag = 'scoped memory for decoder_forward.2']
    #allocation4 [shape = 'u8[8192]{0}', space=vmem, size = 0x2000, scoped, tag = 'input window, operand 1']
    #allocation5 [shape = 's32[2]{0}', space=sflag, size = 0x8, scoped, tag = 'scoped memory for decoder_forward.2']
    #allocation6 [shape = 'u8[1024]{0}', space=vmem, size = 0x400, scoped, tag = 'input window, operand 3']
    #allocation7 [shape = 'u8[1024]{0}', space=vmem, size = 0x400, scoped, tag = 'input window, operand 5']
    #allocation8 [shape = 's32[2]{0}', space=sflag, size = 0x8, scoped, tag = 'scoped memory for decoder_forward.2']
    #allocation9 [shape = 'u8[1024]{0}', space=vmem, size = 0x400, scoped, tag = 'input window, operand 7']
    #allocation10 [shape = 'u8[1024]{0}', space=vmem, size = 0x400, scoped, tag = 'input window, operand 9']
    #allocation11 [shape = 's32[2]{0}', space=sflag, size = 0x8, scoped, tag = 'scoped memory for decoder_forward.2']
    #allocation12 [shape = 'u8[1024]{0}', space=vmem, size = 0x400, scoped, tag = 'input window, operand 11']
    #allocation13 [shape = 'u8[1024]{0}', space=vmem, size = 0x400, scoped, tag = 'input window, operand 12']
    #allocation14 [shape = 's32[2]{0}', space=sflag, size = 0x8, scoped, tag = 'scoped memory for decoder_forward.2']
    #allocation15 [shape = 'u8[1024]{0}', space=vmem, size = 0x400, scoped, tag = 'input window, operand 13']
    #allocation16 [shape = 'u8[1024]{0}', space=vmem, size = 0x400, scoped, tag = 'input window, operand 14']
    #allocation17 [shape = 's32[2]{0}', space=sflag, size = 0x8, scoped, tag = 'scoped memory for decoder_forward.2']
    #allocation18 [shape = 'u8[1024]{0}', space=vmem, size = 0x400, scoped, tag = 'input window, operand 15']
    #allocation19 [shape = 'u8[1024]{0}', space=vmem, size = 0x400, scoped, tag = 'input window, operand 16']
    #allocation20 [shape = 's32[2]{0}', space=sflag, size = 0x8, scoped, tag = 'scoped memory for decoder_forward.2']
    #allocation21 [shape = 'u8[1024]{0}', space=vmem, size = 0x400, scoped, tag = 'input window, operand 17']
    #allocation22 [shape = 'u8[1024]{0}', space=vmem, size = 0x400, scoped, tag = 'input window, operand 19']
    #allocation23 [shape = 's32[2]{0}', space=sflag, size = 0x8, scoped, tag = 'scoped memory for decoder_forward.2']
    #allocation24 [shape = 'u8[1024]{0}', space=vmem, size = 0x400, scoped, tag = 'input window, operand 21']
    %27 = vsyncpa [#allocation3], 0
    %s28 = scalar_lea.sflag [#allocation3], 1
    %29 = vsyncpa %s28, 0
    %30 = vsyncpa [#allocation5], 0
    %s31 = scalar_lea.sflag [#allocation5], 1
    %32 = vsyncpa %s31, 0
    %33 = vsyncpa [#allocation8], 0
    %s34 = scalar_lea.sflag [#allocation8], 1
    %35 = vsyncpa %s34, 0
    %36 = vsyncpa [#allocation11], 0
    %s37 = scalar_lea.sflag [#allocation11], 1
    %38 = vsyncpa %s37, 0
    %39 = vsyncpa [#allocation14], 0
    %s40 = scalar_lea.sflag [#allocation14], 1
    %41 = vsyncpa %s40, 0
    %42 = vsyncpa [#allocation17], 0
    %s43 = scalar_lea.sflag [#allocation17], 1
    %44 = vsyncpa %s43, 0
    %45 = vsyncpa [#allocation20], 0
    %s46 = scalar_lea.sflag [#allocation20], 1
    %47 = vsyncpa %s46, 0
    %48 = vsyncpa [#allocation23], 0
    %s49 = scalar_lea.sflag [#allocation23], 1
    %50 = vsyncpa %s49, 0
    loop: start=0, step=1, limit=6
    $region2: #{decoder_forward.2} parent=1 // loop_pre_header
      _
    $region3: #{decoder_forward.2} parent=1 // loop_header
      %s52 = sphi 0, %s56
      %p53 = scmp.ge.s32.totalorder %s52, 6
      %s59 = sphi 0, %s71
      %s60 = sphi 0, %s67
      %s61 = sphi 0, %s59
      %s62 = sphi 0, %s60
      %s63 = sphi 0, %s61
      %s64 = sphi 0, %s62
      %s74 = sphi 0, %s76
      %s77 = sphi 0, %s74
      %s78 = sphi 0, %s77
      %s94 = sphi 0, %s78
      %s100 = sphi 0, %s102
      %s103 = sphi 0, %s100
      %s104 = sphi 0, %s103
      %s120 = sphi 0, %s104
      %s126 = sphi 0, %s128
      %s129 = sphi 0, %s126
      %s130 = sphi 0, %s129
      %s146 = sphi 0, %s130
      %s152 = sphi 0, %s154
      %s155 = sphi 0, %s152
      %s156 = sphi 0, %s155
      %s172 = sphi 0, %s156
      %s178 = sphi 0, %s180
      %s181 = sphi 0, %s178
      %s182 = sphi 0, %s181
      %s198 = sphi 0, %s182
      %s204 = sphi 0, %s206
      %s207 = sphi 0, %s204
      %s208 = sphi 0, %s207
      %s224 = sphi 0, %s208
      %s230 = sphi 0, %s232
      %s233 = sphi 0, %s230
      %s234 = sphi 0, %s233
      %s250 = sphi 0, %s234
      %s256 = sphi 0, %s258
      %s259 = sphi 0, %s256
      %s260 = sphi 0, %s259
      %s276 = sphi 0, %s260
      %s282 = sphi 0, %s284
      %s285 = sphi 0, %s282
      %s286 = sphi 0, %s285
      %s302 = sphi 0, %s286
      %s308 = sphi 0, %s310
      %s311 = sphi 0, %s308
      %s312 = sphi 0, %s311
      %s328 = sphi 0, %s312
      %s334 = sphi 0, %s336
      %s337 = sphi 0, %s334
      %s338 = sphi 0, %s337
      %s354 = sphi 0, %s338
      %s360 = sphi 0, %s362
      %s363 = sphi 0, %s360
      %s364 = sphi 0, %s363
      %s380 = sphi 0, %s364
      %s386 = sphi 0, %s388
      %s389 = sphi 0, %s386
      %s390 = sphi 0, %s389
      %s406 = sphi 0, %s390
      %s412 = sphi 0, %s414
      %s415 = sphi 0, %s412
      %s416 = sphi 0, %s415
      %s432 = sphi 0, %s416
      %s438 = sphi 0, %s440
      %s441 = sphi 0, %s438
      %s442 = sphi 0, %s441
      %s458 = sphi 0, %s442
      %s464 = sphi 0, %s466
      %s467 = sphi 0, %s464
      %s468 = sphi 0, %s467
      %s484 = sphi 0, %s468
      %s490 = sphi 0, %s492
      %s493 = sphi 0, %s490
      %s494 = sphi 0, %s493
      %s510 = sphi 0, %s494
      %s516 = sphi 0, %s518
      %s519 = sphi 0, %s516
      %s520 = sphi 0, %s519
      %s536 = sphi 0, %s520
      %s542 = sphi 0, %s544
      %s545 = sphi 0, %s542
      %s546 = sphi 0, %s545
      %s562 = sphi 0, %s546
      %s568 = sphi 0, %s570
      %s571 = sphi 0, %s568
      %s572 = sphi 0, %s571
      %s588 = sphi 0, %s572
      %s594 = sphi 0, %s596
      %s597 = sphi 0, %s594
      %s598 = sphi 0, %s597
      %s614 = sphi 0, %s598
      %s620 = sphi 0, %s622
      %s623 = sphi 0, %s620
      %s624 = sphi 0, %s623
      %s640 = sphi 0, %s624
      %s646 = sphi 0, %s648
      %s649 = sphi 0, %s646
      %s650 = sphi 0, %s649
      %s666 = sphi 0, %s650
    $region4: #{decoder_forward.2} parent=1 // loop_header_branch
      %55 = sbr.rel (%p53) target = $region8
    $region5: #{decoder_forward.2} parent=1 // loop_body
      %s57 = ssub.s32 %s52, 1
      %s58 = ssub.s32 %s52, 2
      %s65 = sadd.s32 1, %s60
      %p66 = scmp.ge.s32.totalorder %s65, 2
      %s67 = scalar_select %p66, 0, %s65
      %s68 = sadd.s32 1, %s59
      %s69 = scalar_select %p66, %s68, %s59
      %p70 = scmp.ge.s32.totalorder %s69, 2
      %s71 = scalar_select %p70, 0, %s69
      %s72 = ssub.s32 %s59, %s71
      %p73 = scmp.eq.s32.totalorder %s72, 0
      %s75 = sadd.s32 %s74, 1
      %s76 = scalar_select %p73, %s74, %s75
      %p79 = pneg %p73
      %p80 = scmp.eq.s32.totalorder %s52, 3
      %p81 = por %p79, %p80
      %p82 = scmp.ne.s32.totalorder %s74, %s77
      %p83 = scmp.eq.s32.totalorder %s52, 0
      %p84 = por %p82, %p83
      %p85 = scmp.ne.s32.totalorder %s74, %s77
      %p86 = scmp.eq.s32.totalorder %s57, 3
      %p87 = por %p85, %p86
      %p88 = scmp.ne.s32.totalorder %s77, %s78
      %p89 = scmp.eq.s32.totalorder %s57, 0
      %p90 = por %p88, %p89
      %p91 = scmp.ne.s32.totalorder %s77, %s78
      %p92 = scmp.eq.s32.totalorder %s58, 3
      %p93 = por %p91, %p92
      %p95 = scmp.ne.s32.totalorder %s78, %s94
      %p96 = scmp.eq.s32.totalorder %s58, 0
      %p97 = por %p95, %p96
      %s98 = ssub.s32 %s59, %s71
      %p99 = scmp.eq.s32.totalorder %s98, 0
      %s101 = sadd.s32 %s100, 1
      %s102 = scalar_select %p99, %s100, %s101
      %p105 = pneg %p99
      %p106 = scmp.eq.s32.totalorder %s52, 3
      %p107 = por %p105, %p106
      %p108 = scmp.ne.s32.totalorder %s100, %s103
      %p109 = scmp.eq.s32.totalorder %s52, 0
      %p110 = por %p108, %p109
      %p111 = scmp.ne.s32.totalorder %s100, %s103
      %p112 = scmp.eq.s32.totalorder %s57, 3
      %p113 = por %p111, %p112
      %p114 = scmp.ne.s32.totalorder %s103, %s104
      %p115 = scmp.eq.s32.totalorder %s57, 0
      %p116 = por %p114, %p115
      %p117 = scmp.ne.s32.totalorder %s103, %s104
      %p118 = scmp.eq.s32.totalorder %s58, 3
      %p119 = por %p117, %p118
      %p121 = scmp.ne.s32.totalorder %s104, %s120
      %p122 = scmp.eq.s32.totalorder %s58, 0
      %p123 = por %p121, %p122
      %s124 = ssub.s32 %s60, %s67
      %p125 = scmp.eq.s32.totalorder %s124, 0
      %s127 = sadd.s32 %s126, 1
      %s128 = scalar_select %p125, %s126, %s127
      %p131 = pneg %p125
      %p132 = scmp.eq.s32.totalorder %s52, 3
      %p133 = por %p131, %p132
      %p134 = scmp.ne.s32.totalorder %s126, %s129
      %p135 = scmp.eq.s32.totalorder %s52, 0
      %p136 = por %p134, %p135
      %p137 = scmp.ne.s32.totalorder %s126, %s129
      %p138 = scmp.eq.s32.totalorder %s57, 3
      %p139 = por %p137, %p138
      %p140 = scmp.ne.s32.totalorder %s129, %s130
      %p141 = scmp.eq.s32.totalorder %s57, 0
      %p142 = por %p140, %p141
      %p143 = scmp.ne.s32.totalorder %s129, %s130
      %p144 = scmp.eq.s32.totalorder %s58, 3
      %p145 = por %p143, %p144
      %p147 = scmp.ne.s32.totalorder %s130, %s146
      %p148 = scmp.eq.s32.totalorder %s58, 0
      %p149 = por %p147, %p148
      %s150 = ssub.s32 %s60, %s67
      %p151 = scmp.eq.s32.totalorder %s150, 0
      %s153 = sadd.s32 %s152, 1
      %s154 = scalar_select %p151, %s152, %s153
      %p157 = pneg %p151
      %p158 = scmp.eq.s32.totalorder %s52, 3
      %p159 = por %p157, %p158
      %p160 = scmp.ne.s32.totalorder %s152, %s155
      %p161 = scmp.eq.s32.totalorder %s52, 0
      %p162 = por %p160, %p161
      %p163 = scmp.ne.s32.totalorder %s152, %s155
      %p164 = scmp.eq.s32.totalorder %s57, 3
      %p165 = por %p163, %p164
      %p166 = scmp.ne.s32.totalorder %s155, %s156
      %p167 = scmp.eq.s32.totalorder %s57, 0
      %p168 = por %p166, %p167
      %p169 = scmp.ne.s32.totalorder %s155, %s156
      %p170 = scmp.eq.s32.totalorder %s58, 3
      %p171 = por %p169, %p170
      %p173 = scmp.ne.s32.totalorder %s156, %s172
      %p174 = scmp.eq.s32.totalorder %s58, 0
      %p175 = por %p173, %p174
      %s176 = ssub.s32 %s60, %s67
      %p177 = scmp.eq.s32.totalorder %s176, 0
      %s179 = sadd.s32 %s178, 1
      %s180 = scalar_select %p177, %s178, %s179
      %p183 = pneg %p177
      %p184 = scmp.eq.s32.totalorder %s52, 3
      %p185 = por %p183, %p184
      %p186 = scmp.ne.s32.totalorder %s178, %s181
      %p187 = scmp.eq.s32.totalorder %s52, 0
      %p188 = por %p186, %p187
      %p189 = scmp.ne.s32.totalorder %s178, %s181
      %p190 = scmp.eq.s32.totalorder %s57, 3
      %p191 = por %p189, %p190
      %p192 = scmp.ne.s32.totalorder %s181, %s182
      %p193 = scmp.eq.s32.totalorder %s57, 0
      %p194 = por %p192, %p193
      %p195 = scmp.ne.s32.totalorder %s181, %s182
      %p196 = scmp.eq.s32.totalorder %s58, 3
      %p197 = por %p195, %p196
      %p199 = scmp.ne.s32.totalorder %s182, %s198
      %p200 = scmp.eq.s32.totalorder %s58, 0
      %p201 = por %p199, %p200
      %s202 = ssub.s32 %s60, %s67
      %p203 = scmp.eq.s32.totalorder %s202, 0
      %s205 = sadd.s32 %s204, 1
      %s206 = scalar_select %p203, %s204, %s205
      %p209 = pneg %p203
      %p210 = scmp.eq.s32.totalorder %s52, 3
      %p211 = por %p209, %p210
      %p212 = scmp.ne.s32.totalorder %s204, %s207
      %p213 = scmp.eq.s32.totalorder %s52, 0
      %p214 = por %p212, %p213
      %p215 = scmp.ne.s32.totalorder %s204, %s207
      %p216 = scmp.eq.s32.totalorder %s57, 3
      %p217 = por %p215, %p216
      %p218 = scmp.ne.s32.totalorder %s207, %s208
      %p219 = scmp.eq.s32.totalorder %s57, 0
      %p220 = por %p218, %p219
      %p221 = scmp.ne.s32.totalorder %s207, %s208
      %p222 = scmp.eq.s32.totalorder %s58, 3
      %p223 = por %p221, %p222
      %p225 = scmp.ne.s32.totalorder %s208, %s224
      %p226 = scmp.eq.s32.totalorder %s58, 0
      %p227 = por %p225, %p226
      %s228 = ssub.s32 %s60, %s67
      %p229 = scmp.eq.s32.totalorder %s228, 0
      %s231 = sadd.s32 %s230, 1
      %s232 = scalar_select %p229, %s230, %s231
      %p235 = pneg %p229
      %p236 = scmp.eq.s32.totalorder %s52, 3
      %p237 = por %p235, %p236
      %p238 = scmp.ne.s32.totalorder %s230, %s233
      %p239 = scmp.eq.s32.totalorder %s52, 0
      %p240 = por %p238, %p239
      %p241 = scmp.ne.s32.totalorder %s230, %s233
      %p242 = scmp.eq.s32.totalorder %s57, 3
      %p243 = por %p241, %p242
      %p244 = scmp.ne.s32.totalorder %s233, %s234
      %p245 = scmp.eq.s32.totalorder %s57, 0
      %p246 = por %p244, %p245
      %p247 = scmp.ne.s32.totalorder %s233, %s234
      %p248 = scmp.eq.s32.totalorder %s58, 3
      %p249 = por %p247, %p248
      %p251 = scmp.ne.s32.totalorder %s234, %s250
      %p252 = scmp.eq.s32.totalorder %s58, 0
      %p253 = por %p251, %p252
      %s254 = ssub.s32 %s60, %s67
      %p255 = scmp.eq.s32.totalorder %s254, 0
      %s257 = sadd.s32 %s256, 1
      %s258 = scalar_select %p255, %s256, %s257
      %p261 = pneg %p255
      %p262 = scmp.eq.s32.totalorder %s52, 3
      %p263 = por %p261, %p262
      %p264 = scmp.ne.s32.totalorder %s256, %s259
      %p265 = scmp.eq.s32.totalorder %s52, 0
      %p266 = por %p264, %p265
      %p267 = scmp.ne.s32.totalorder %s256, %s259
      %p268 = scmp.eq.s32.totalorder %s57, 3
      %p269 = por %p267, %p268
      %p270 = scmp.ne.s32.totalorder %s259, %s260
      %p271 = scmp.eq.s32.totalorder %s57, 0
      %p272 = por %p270, %p271
      %p273 = scmp.ne.s32.totalorder %s259, %s260
      %p274 = scmp.eq.s32.totalorder %s58, 3
      %p275 = por %p273, %p274
      %p277 = scmp.ne.s32.totalorder %s260, %s276
      %p278 = scmp.eq.s32.totalorder %s58, 0
      %p279 = por %p277, %p278
      %s280 = ssub.s32 %s60, %s67
      %p281 = scmp.eq.s32.totalorder %s280, 0
      %s283 = sadd.s32 %s282, 1
      %s284 = scalar_select %p281, %s282, %s283
      %p287 = pneg %p281
      %p288 = scmp.eq.s32.totalorder %s52, 3
      %p289 = por %p287, %p288
      %p290 = scmp.ne.s32.totalorder %s282, %s285
      %p291 = scmp.eq.s32.totalorder %s52, 0
      %p292 = por %p290, %p291
      %p293 = scmp.ne.s32.totalorder %s282, %s285
      %p294 = scmp.eq.s32.totalorder %s57, 3
      %p295 = por %p293, %p294
      %p296 = scmp.ne.s32.totalorder %s285, %s286
      %p297 = scmp.eq.s32.totalorder %s57, 0
      %p298 = por %p296, %p297
      %p299 = scmp.ne.s32.totalorder %s285, %s286
      %p300 = scmp.eq.s32.totalorder %s58, 3
      %p301 = por %p299, %p300
      %p303 = scmp.ne.s32.totalorder %s286, %s302
      %p304 = scmp.eq.s32.totalorder %s58, 0
      %p305 = por %p303, %p304
      %s306 = ssub.s32 %s60, %s67
      %p307 = scmp.eq.s32.totalorder %s306, 0
      %s309 = sadd.s32 %s308, 1
      %s310 = scalar_select %p307, %s308, %s309
      %p313 = pneg %p307
      %p314 = scmp.eq.s32.totalorder %s52, 3
      %p315 = por %p313, %p314
      %p316 = scmp.ne.s32.totalorder %s308, %s311
      %p317 = scmp.eq.s32.totalorder %s52, 0
      %p318 = por %p316, %p317
      %p319 = scmp.ne.s32.totalorder %s308, %s311
      %p320 = scmp.eq.s32.totalorder %s57, 3
      %p321 = por %p319, %p320
      %p322 = scmp.ne.s32.totalorder %s311, %s312
      %p323 = scmp.eq.s32.totalorder %s57, 0
      %p324 = por %p322, %p323
      %p325 = scmp.ne.s32.totalorder %s311, %s312
      %p326 = scmp.eq.s32.totalorder %s58, 3
      %p327 = por %p325, %p326
      %p329 = scmp.ne.s32.totalorder %s312, %s328
      %p330 = scmp.eq.s32.totalorder %s58, 0
      %p331 = por %p329, %p330
      %s332 = ssub.s32 %s60, %s67
      %p333 = scmp.eq.s32.totalorder %s332, 0
      %s335 = sadd.s32 %s334, 1
      %s336 = scalar_select %p333, %s334, %s335
      %p339 = pneg %p333
      %p340 = scmp.eq.s32.totalorder %s52, 3
      %p341 = por %p339, %p340
      %p342 = scmp.ne.s32.totalorder %s334, %s337
      %p343 = scmp.eq.s32.totalorder %s52, 0
      %p344 = por %p342, %p343
      %p345 = scmp.ne.s32.totalorder %s334, %s337
      %p346 = scmp.eq.s32.totalorder %s57, 3
      %p347 = por %p345, %p346
      %p348 = scmp.ne.s32.totalorder %s337, %s338
      %p349 = scmp.eq.s32.totalorder %s57, 0
      %p350 = por %p348, %p349
      %p351 = scmp.ne.s32.totalorder %s337, %s338
      %p352 = scmp.eq.s32.totalorder %s58, 3
      %p353 = por %p351, %p352
      %p355 = scmp.ne.s32.totalorder %s338, %s354
      %p356 = scmp.eq.s32.totalorder %s58, 0
      %p357 = por %p355, %p356
      %s358 = ssub.s32 %s60, %s67
      %p359 = scmp.eq.s32.totalorder %s358, 0
      %s361 = sadd.s32 %s360, 1
      %s362 = scalar_select %p359, %s360, %s361
      %p365 = pneg %p359
      %p366 = scmp.eq.s32.totalorder %s52, 3
      %p367 = por %p365, %p366
      %p368 = scmp.ne.s32.totalorder %s360, %s363
      %p369 = scmp.eq.s32.totalorder %s52, 0
      %p370 = por %p368, %p369
      %p371 = scmp.ne.s32.totalorder %s360, %s363
      %p372 = scmp.eq.s32.totalorder %s57, 3
      %p373 = por %p371, %p372
      %p374 = scmp.ne.s32.totalorder %s363, %s364
      %p375 = scmp.eq.s32.totalorder %s57, 0
      %p376 = por %p374, %p375
      %p377 = scmp.ne.s32.totalorder %s363, %s364
      %p378 = scmp.eq.s32.totalorder %s58, 3
      %p379 = por %p377, %p378
      %p381 = scmp.ne.s32.totalorder %s364, %s380
      %p382 = scmp.eq.s32.totalorder %s58, 0
      %p383 = por %p381, %p382
      %s384 = ssub.s32 %s60, %s67
      %p385 = scmp.eq.s32.totalorder %s384, 0
      %s387 = sadd.s32 %s386, 1
      %s388 = scalar_select %p385, %s386, %s387
      %p391 = pneg %p385
      %p392 = scmp.eq.s32.totalorder %s52, 3
      %p393 = por %p391, %p392
      %p394 = scmp.ne.s32.totalorder %s386, %s389
      %p395 = scmp.eq.s32.totalorder %s52, 0
      %p396 = por %p394, %p395
      %p397 = scmp.ne.s32.totalorder %s386, %s389
      %p398 = scmp.eq.s32.totalorder %s57, 3
      %p399 = por %p397, %p398
      %p400 = scmp.ne.s32.totalorder %s389, %s390
      %p401 = scmp.eq.s32.totalorder %s57, 0
      %p402 = por %p400, %p401
      %p403 = scmp.ne.s32.totalorder %s389, %s390
      %p404 = scmp.eq.s32.totalorder %s58, 3
      %p405 = por %p403, %p404
      %p407 = scmp.ne.s32.totalorder %s390, %s406
      %p408 = scmp.eq.s32.totalorder %s58, 0
      %p409 = por %p407, %p408
      %s410 = ssub.s32 %s60, %s67
      %p411 = scmp.eq.s32.totalorder %s410, 0
      %s413 = sadd.s32 %s412, 1
      %s414 = scalar_select %p411, %s412, %s413
      %p417 = pneg %p411
      %p418 = scmp.eq.s32.totalorder %s52, 3
      %p419 = por %p417, %p418
      %p420 = scmp.ne.s32.totalorder %s412, %s415
      %p421 = scmp.eq.s32.totalorder %s52, 0
      %p422 = por %p420, %p421
      %p423 = scmp.ne.s32.totalorder %s412, %s415
      %p424 = scmp.eq.s32.totalorder %s57, 3
      %p425 = por %p423, %p424
      %p426 = scmp.ne.s32.totalorder %s415, %s416
      %p427 = scmp.eq.s32.totalorder %s57, 0
      %p428 = por %p426, %p427
      %p429 = scmp.ne.s32.totalorder %s415, %s416
      %p430 = scmp.eq.s32.totalorder %s58, 3
      %p431 = por %p429, %p430
      %p433 = scmp.ne.s32.totalorder %s416, %s432
      %p434 = scmp.eq.s32.totalorder %s58, 0
      %p435 = por %p433, %p434
      %s436 = ssub.s32 %s60, %s67
      %p437 = scmp.eq.s32.totalorder %s436, 0
      %s439 = sadd.s32 %s438, 1
      %s440 = scalar_select %p437, %s438, %s439
      %p443 = pneg %p437
      %p444 = scmp.eq.s32.totalorder %s52, 3
      %p445 = por %p443, %p444
      %p446 = scmp.ne.s32.totalorder %s438, %s441
      %p447 = scmp.eq.s32.totalorder %s52, 0
      %p448 = por %p446, %p447
      %p449 = scmp.ne.s32.totalorder %s438, %s441
      %p450 = scmp.eq.s32.totalorder %s57, 3
      %p451 = por %p449, %p450
      %p452 = scmp.ne.s32.totalorder %s441, %s442
      %p453 = scmp.eq.s32.totalorder %s57, 0
      %p454 = por %p452, %p453
      %p455 = scmp.ne.s32.totalorder %s441, %s442
      %p456 = scmp.eq.s32.totalorder %s58, 3
      %p457 = por %p455, %p456
      %p459 = scmp.ne.s32.totalorder %s442, %s458
      %p460 = scmp.eq.s32.totalorder %s58, 0
      %p461 = por %p459, %p460
      %s462 = ssub.s32 %s60, %s67
      %p463 = scmp.eq.s32.totalorder %s462, 0
      %s465 = sadd.s32 %s464, 1
      %s466 = scalar_select %p463, %s464, %s465
      %p469 = pneg %p463
      %p470 = scmp.eq.s32.totalorder %s52, 3
      %p471 = por %p469, %p470
      %p472 = scmp.ne.s32.totalorder %s464, %s467
      %p473 = scmp.eq.s32.totalorder %s52, 0
      %p474 = por %p472, %p473
      %p475 = scmp.ne.s32.totalorder %s464, %s467
      %p476 = scmp.eq.s32.totalorder %s57, 3
      %p477 = por %p475, %p476
      %p478 = scmp.ne.s32.totalorder %s467, %s468
      %p479 = scmp.eq.s32.totalorder %s57, 0
      %p480 = por %p478, %p479
      %p481 = scmp.ne.s32.totalorder %s467, %s468
      %p482 = scmp.eq.s32.totalorder %s58, 3
      %p483 = por %p481, %p482
      %p485 = scmp.ne.s32.totalorder %s468, %s484
      %p486 = scmp.eq.s32.totalorder %s58, 0
      %p487 = por %p485, %p486
      %s488 = ssub.s32 %s60, %s67
      %p489 = scmp.eq.s32.totalorder %s488, 0
      %s491 = sadd.s32 %s490, 1
      %s492 = scalar_select %p489, %s490, %s491
      %p495 = pneg %p489
      %p496 = scmp.eq.s32.totalorder %s52, 3
      %p497 = por %p495, %p496
      %p498 = scmp.ne.s32.totalorder %s490, %s493
      %p499 = scmp.eq.s32.totalorder %s52, 0
      %p500 = por %p498, %p499
      %p501 = scmp.ne.s32.totalorder %s490, %s493
      %p502 = scmp.eq.s32.totalorder %s57, 3
      %p503 = por %p501, %p502
      %p504 = scmp.ne.s32.totalorder %s493, %s494
      %p505 = scmp.eq.s32.totalorder %s57, 0
      %p506 = por %p504, %p505
      %p507 = scmp.ne.s32.totalorder %s493, %s494
      %p508 = scmp.eq.s32.totalorder %s58, 3
      %p509 = por %p507, %p508
      %p511 = scmp.ne.s32.totalorder %s494, %s510
      %p512 = scmp.eq.s32.totalorder %s58, 0
      %p513 = por %p511, %p512
      %s514 = ssub.s32 %s60, %s67
      %p515 = scmp.eq.s32.totalorder %s514, 0
      %s517 = sadd.s32 %s516, 1
      %s518 = scalar_select %p515, %s516, %s517
      %p521 = pneg %p515
      %p522 = scmp.eq.s32.totalorder %s52, 3
      %p523 = por %p521, %p522
      %p524 = scmp.ne.s32.totalorder %s516, %s519
      %p525 = scmp.eq.s32.totalorder %s52, 0
      %p526 = por %p524, %p525
      %p527 = scmp.ne.s32.totalorder %s516, %s519
      %p528 = scmp.eq.s32.totalorder %s57, 3
      %p529 = por %p527, %p528
      %p530 = scmp.ne.s32.totalorder %s519, %s520
      %p531 = scmp.eq.s32.totalorder %s57, 0
      %p532 = por %p530, %p531
      %p533 = scmp.ne.s32.totalorder %s519, %s520
      %p534 = scmp.eq.s32.totalorder %s58, 3
      %p535 = por %p533, %p534
      %p537 = scmp.ne.s32.totalorder %s520, %s536
      %p538 = scmp.eq.s32.totalorder %s58, 0
      %p539 = por %p537, %p538
      %s540 = ssub.s32 %s60, %s67
      %p541 = scmp.eq.s32.totalorder %s540, 0
      %s543 = sadd.s32 %s542, 1
      %s544 = scalar_select %p541, %s542, %s543
      %p547 = pneg %p541
      %p548 = scmp.eq.s32.totalorder %s52, 3
      %p549 = por %p547, %p548
      %p550 = scmp.ne.s32.totalorder %s542, %s545
      %p551 = scmp.eq.s32.totalorder %s52, 0
      %p552 = por %p550, %p551
      %p553 = scmp.ne.s32.totalorder %s542, %s545
      %p554 = scmp.eq.s32.totalorder %s57, 3
      %p555 = por %p553, %p554
      %p556 = scmp.ne.s32.totalorder %s545, %s546
      %p557 = scmp.eq.s32.totalorder %s57, 0
      %p558 = por %p556, %p557
      %p559 = scmp.ne.s32.totalorder %s545, %s546
      %p560 = scmp.eq.s32.totalorder %s58, 3
      %p561 = por %p559, %p560
      %p563 = scmp.ne.s32.totalorder %s546, %s562
      %p564 = scmp.eq.s32.totalorder %s58, 0
      %p565 = por %p563, %p564
      %s566 = ssub.s32 %s60, %s67
      %p567 = scmp.eq.s32.totalorder %s566, 0
      %s569 = sadd.s32 %s568, 1
      %s570 = scalar_select %p567, %s568, %s569
      %p573 = pneg %p567
      %p574 = scmp.eq.s32.totalorder %s52, 3
      %p575 = por %p573, %p574
      %p576 = scmp.ne.s32.totalorder %s568, %s571
      %p577 = scmp.eq.s32.totalorder %s52, 0
      %p578 = por %p576, %p577
      %p579 = scmp.ne.s32.totalorder %s568, %s571
      %p580 = scmp.eq.s32.totalorder %s57, 3
      %p581 = por %p579, %p580
      %p582 = scmp.ne.s32.totalorder %s571, %s572
      %p583 = scmp.eq.s32.totalorder %s57, 0
      %p584 = por %p582, %p583
      %p585 = scmp.ne.s32.totalorder %s571, %s572
      %p586 = scmp.eq.s32.totalorder %s58, 3
      %p587 = por %p585, %p586
      %p589 = scmp.ne.s32.totalorder %s572, %s588
      %p590 = scmp.eq.s32.totalorder %s58, 0
      %p591 = por %p589, %p590
      %s592 = ssub.s32 %s60, %s67
      %p593 = scmp.eq.s32.totalorder %s592, 0
      %s595 = sadd.s32 %s594, 1
      %s596 = scalar_select %p593, %s594, %s595
      %p599 = pneg %p593
      %p600 = scmp.eq.s32.totalorder %s52, 3
      %p601 = por %p599, %p600
      %p602 = scmp.ne.s32.totalorder %s594, %s597
      %p603 = scmp.eq.s32.totalorder %s52, 0
      %p604 = por %p602, %p603
      %p605 = scmp.ne.s32.totalorder %s594, %s597
      %p606 = scmp.eq.s32.totalorder %s57, 3
      %p607 = por %p605, %p606
      %p608 = scmp.ne.s32.totalorder %s597, %s598
      %p609 = scmp.eq.s32.totalorder %s57, 0
      %p610 = por %p608, %p609
      %p611 = scmp.ne.s32.totalorder %s597, %s598
      %p612 = scmp.eq.s32.totalorder %s58, 3
      %p613 = por %p611, %p612
      %p615 = scmp.ne.s32.totalorder %s598, %s614
      %p616 = scmp.eq.s32.totalorder %s58, 0
      %p617 = por %p615, %p616
      %s618 = ssub.s32 %s60, %s67
      %p619 = scmp.eq.s32.totalorder %s618, 0
      %s621 = sadd.s32 %s620, 1
      %s622 = scalar_select %p619, %s620, %s621
      %p625 = pneg %p619
      %p626 = scmp.eq.s32.totalorder %s52, 3
      %p627 = por %p625, %p626
      %p628 = scmp.ne.s32.totalorder %s620, %s623
      %p629 = scmp.eq.s32.totalorder %s52, 0
      %p630 = por %p628, %p629
      %p631 = scmp.ne.s32.totalorder %s620, %s623
      %p632 = scmp.eq.s32.totalorder %s57, 3
      %p633 = por %p631, %p632
      %p634 = scmp.ne.s32.totalorder %s623, %s624
      %p635 = scmp.eq.s32.totalorder %s57, 0
      %p636 = por %p634, %p635
      %p637 = scmp.ne.s32.totalorder %s623, %s624
      %p638 = scmp.eq.s32.totalorder %s58, 3
      %p639 = por %p637, %p638
      %p641 = scmp.ne.s32.totalorder %s624, %s640
      %p642 = scmp.eq.s32.totalorder %s58, 0
      %p643 = por %p641, %p642
      %s644 = ssub.s32 %s59, %s71
      %p645 = scmp.eq.s32.totalorder %s644, 0
      %s647 = sadd.s32 %s646, 1
      %s648 = scalar_select %p645, %s646, %s647
      %p651 = pneg %p645
      %p652 = scmp.eq.s32.totalorder %s52, 3
      %p653 = por %p651, %p652
      %p654 = scmp.ne.s32.totalorder %s646, %s649
      %p655 = scmp.eq.s32.totalorder %s52, 0
      %p656 = por %p654, %p655
      %p657 = scmp.ne.s32.totalorder %s646, %s649
      %p658 = scmp.eq.s32.totalorder %s57, 3
      %p659 = por %p657, %p658
      %p660 = scmp.ne.s32.totalorder %s649, %s650
      %p661 = scmp.eq.s32.totalorder %s57, 0
      %p662 = por %p660, %p661
      %p663 = scmp.ne.s32.totalorder %s649, %s650
      %p664 = scmp.eq.s32.totalorder %s58, 3
      %p665 = por %p663, %p664
      %p667 = scmp.ne.s32.totalorder %s650, %s666
      %p668 = scmp.eq.s32.totalorder %s58, 0
      %p669 = por %p667, %p668
      %p670 = scmp.le.s32.totalorder 1, %s52
      %p671 = scmp.lt.s32.totalorder %s52, 5
      %p672 = pnand %p670, %p671
      %p673 = pneg %p672
      // Predicated region
      $region9: #{decoder_forward.2} parent=5 // pred_check
        _
      $region10: #{decoder_forward.2} parent=5 // pred_check_branch
        %675 = sbr.rel (%p672) target = $region12
      $region11: #{decoder_forward.2} parent=5 // pred_region
        %s676 = ssub.s32 %s52, 1
      $region12: #{decoder_forward.2} parent=5 // pred_fallthru
        _
      %p677 = scmp.lt.s32.totalorder %s52, 4
      // Predicated region
      $region13: #{decoder_forward.2} parent=5 // pred_check
        %p678 = pneg %p677
      $region14: #{decoder_forward.2} parent=5 // pred_check_branch
        %680 = sbr.rel (%p678) target = $region16
      $region15: #{decoder_forward.2} parent=5 // pred_region
        // Predicated region
        $region17: #{decoder_forward.2} parent=15 // pred_check
          %p681 = pneg %p84
        $region18: #{decoder_forward.2} parent=15 // pred_check_branch
          %683 = sbr.rel (%p681) target = $region20
        $region19: #{decoder_forward.2} parent=15 // pred_region
          %s684 = sand.u32 %s74, 1
          %s685 = scalar_lea.sflag [#allocation3], %s684
          %s686 = sand.u32 %s74, 1
          %s687 = smul.addr %s686, 8
          %s688 = scalar_lea.vmem [#allocation2], %s687
          %s690 = ssub.s32 128, 128
          %691 = vsyncadd %s685, %s690
          %s692 = smul.addr %s59, 128
          %s693 = scalar_lea.hbm %s0, %s692
          %s695 = sshll.u32 %s688, 4
          %s696 = int_to_ptr.vmem [resolvable:$true] %s695
          %698 = dma.hbm_to_vmem [thread:$0]  %s693, 128, %s696, %s685
        $region20: #{decoder_forward.2} parent=15 // pred_fallthru
          _
        // Predicated region
        $region21: #{decoder_forward.2} parent=15 // pred_check
          %p699 = pneg %p110
        $region22: #{decoder_forward.2} parent=15 // pred_check_branch
          %701 = sbr.rel (%p699) target = $region24
        $region23: #{decoder_forward.2} parent=15 // pred_region
          %s702 = sand.u32 %s52, 1
          %s703 = scalar_lea.sflag [#allocation5], %s702
          %s704 = sand.u32 %s100, 1
          %s705 = smul.addr %s704, 8
          %s706 = scalar_lea.vmem [#allocation4], %s705
          %s708 = ssub.s32 128, 128
          %709 = vsyncadd %s703, %s708
          %s710 = smul.addr %s59, 128
          %s711 = scalar_lea.hbm %s1, %s710
          %s713 = sshll.u32 %s706, 4
          %s714 = int_to_ptr.vmem [resolvable:$true] %s713
          %716 = dma.hbm_to_vmem [thread:$0]  %s711, 128, %s714, %s703
        $region24: #{decoder_forward.2} parent=15 // pred_fallthru
          _
        // Predicated region
        $region25: #{decoder_forward.2} parent=15 // pred_check
          %p717 = pneg %p136
        $region26: #{decoder_forward.2} parent=15 // pred_check_branch
          %719 = sbr.rel (%p717) target = $region28
        $region27: #{decoder_forward.2} parent=15 // pred_region
          %p720 = scmp.lt.s32.totalorder %s60, 1
          %s721 = scalar_select %p720, %s60, 1
          %s722 = smul.addr %s721, 4
          %s723 = smul.addr %s722, 4
          %s724 = scalar_lea.vmem %s2, %s723
        $region28: #{decoder_forward.2} parent=15 // pred_fallthru
          _
        // Predicated region
        $region29: #{decoder_forward.2} parent=15 // pred_check
          %p725 = pneg %p162
        $region30: #{decoder_forward.2} parent=15 // pred_check_branch
          %727 = sbr.rel (%p725) target = $region32
        $region31: #{decoder_forward.2} parent=15 // pred_region
          %s728 = sand.u32 %s52, 1
          %s729 = scalar_lea.sflag [#allocation5], %s728
          %s730 = sand.u32 %s152, 1
          %s731 = scalar_lea.vmem [#allocation6], %s730
          %s733 = ssub.s32 16, 16
          %734 = vsyncadd %s729, %s733
          %s735 = smul.addr %s60, 16
          %s736 = scalar_lea.hbm %s3, %s735
          %s738 = sshll.u32 %s731, 4
          %s739 = int_to_ptr.vmem [resolvable:$true] %s738
          %741 = dma.hbm_to_vmem [thread:$0]  %s736, 16, %s739, %s729
        $region32: #{decoder_forward.2} parent=15 // pred_fallthru
          _
        // Predicated region
        $region33: #{decoder_forward.2} parent=15 // pred_check
          %p742 = pneg %p188
        $region34: #{decoder_forward.2} parent=15 // pred_check_branch
          %744 = sbr.rel (%p742) target = $region36
        $region35: #{decoder_forward.2} parent=15 // pred_region
          %p745 = scmp.lt.s32.totalorder %s60, 1
          %s746 = scalar_select %p745, %s60, 1
          %s747 = smul.addr %s746, 4
          %s748 = smul.addr %s747, 4
          %s749 = scalar_lea.vmem %s4, %s748
        $region36: #{decoder_forward.2} parent=15 // pred_fallthru
          _
        // Predicated region
        $region37: #{decoder_forward.2} parent=15 // pred_check
          %p750 = pneg %p214
        $region38: #{decoder_forward.2} parent=15 // pred_check_branch
          %752 = sbr.rel (%p750) target = $region40
        $region39: #{decoder_forward.2} parent=15 // pred_region
          %s753 = sand.u32 %s52, 1
          %s754 = scalar_lea.sflag [#allocation8], %s753
          %s755 = sand.u32 %s204, 1
          %s756 = scalar_lea.vmem [#allocation7], %s755
          %s758 = ssub.s32 16, 16
          %759 = vsyncadd %s754, %s758
          %s760 = smul.addr %s60, 16
          %s761 = scalar_lea.hbm %s5, %s760
          %s763 = sshll.u32 %s756, 4
          %s764 = int_to_ptr.vmem [resolvable:$true] %s763
          %766 = dma.hbm_to_vmem [thread:$0]  %s761, 16, %s764, %s754
        $region40: #{decoder_forward.2} parent=15 // pred_fallthru
          _
        // Predicated region
        $region41: #{decoder_forward.2} parent=15 // pred_check
          %p767 = pneg %p240
        $region42: #{decoder_forward.2} parent=15 // pred_check_branch
          %769 = sbr.rel (%p767) target = $region44
        $region43: #{decoder_forward.2} parent=15 // pred_region
          %p770 = scmp.lt.s32.totalorder %s60, 1
          %s771 = scalar_select %p770, %s60, 1
          %s772 = smul.addr %s771, 4
          %s773 = smul.addr %s772, 4
          %s774 = scalar_lea.vmem %s6, %s773
        $region44: #{decoder_forward.2} parent=15 // pred_fallthru
          _
        // Predicated region
        $region45: #{decoder_forward.2} parent=15 // pred_check
          %p775 = pneg %p266
        $region46: #{decoder_forward.2} parent=15 // pred_check_branch
          %777 = sbr.rel (%p775) target = $region48
        $region47: #{decoder_forward.2} parent=15 // pred_region
          %s778 = sand.u32 %s52, 1
          %s779 = scalar_lea.sflag [#allocation8], %s778
          %s780 = sand.u32 %s256, 1
          %s781 = scalar_lea.vmem [#allocation9], %s780
          %s783 = ssub.s32 16, 16
          %784 = vsyncadd %s779, %s783
          %s785 = smul.addr %s60, 16
          %s786 = scalar_lea.hbm %s7, %s785
          %s788 = sshll.u32 %s781, 4
          %s789 = int_to_ptr.vmem [resolvable:$true] %s788
          %791 = dma.hbm_to_vmem [thread:$0]  %s786, 16, %s789, %s779
        $region48: #{decoder_forward.2} parent=15 // pred_fallthru
          _
        // Predicated region
        $region49: #{decoder_forward.2} parent=15 // pred_check
          %p792 = pneg %p292
        $region50: #{decoder_forward.2} parent=15 // pred_check_branch
          %794 = sbr.rel (%p792) target = $region52
        $region51: #{decoder_forward.2} parent=15 // pred_region
          %p795 = scmp.lt.s32.totalorder %s60, 1
          %s796 = scalar_select %p795, %s60, 1
          %s797 = smul.addr %s796, 4
          %s798 = smul.addr %s797, 4
          %s799 = scalar_lea.vmem %s8, %s798
        $region52: #{decoder_forward.2} parent=15 // pred_fallthru
          _
        // Predicated region
        $region53: #{decoder_forward.2} parent=15 // pred_check
          %p800 = pneg %p318
        $region54: #{decoder_forward.2} parent=15 // pred_check_branch
          %802 = sbr.rel (%p800) target = $region56
        $region55: #{decoder_forward.2} parent=15 // pred_region
          %s803 = sand.u32 %s52, 1
          %s804 = scalar_lea.sflag [#allocation11], %s803
          %s805 = sand.u32 %s308, 1
          %s806 = scalar_lea.vmem [#allocation10], %s805
          %s808 = ssub.s32 16, 16
          %809 = vsyncadd %s804, %s808
          %s810 = smul.addr %s60, 16
          %s811 = scalar_lea.hbm %s9, %s810
          %s813 = sshll.u32 %s806, 4
          %s814 = int_to_ptr.vmem [resolvable:$true] %s813
          %816 = dma.hbm_to_vmem [thread:$0]  %s811, 16, %s814, %s804
        $region56: #{decoder_forward.2} parent=15 // pred_fallthru
          _
        // Predicated region
        $region57: #{decoder_forward.2} parent=15 // pred_check
          %p817 = pneg %p344
        $region58: #{decoder_forward.2} parent=15 // pred_check_branch
          %819 = sbr.rel (%p817) target = $region60
        $region59: #{decoder_forward.2} parent=15 // pred_region
          %p820 = scmp.lt.s32.totalorder %s60, 1
          %s821 = scalar_select %p820, %s60, 1
          %s822 = smul.addr %s821, 4
          %s823 = smul.addr %s822, 4
          %s824 = scalar_lea.vmem %s10, %s823
        $region60: #{decoder_forward.2} parent=15 // pred_fallthru
          _
        // Predicated region
        $region61: #{decoder_forward.2} parent=15 // pred_check
          %p825 = pneg %p370
        $region62: #{decoder_forward.2} parent=15 // pred_check_branch
          %827 = sbr.rel (%p825) target = $region64
        $region63: #{decoder_forward.2} parent=15 // pred_region
          %s828 = sand.u32 %s52, 1
          %s829 = scalar_lea.sflag [#allocation11], %s828
          %s830 = sand.u32 %s360, 1
          %s831 = scalar_lea.vmem [#allocation12], %s830
          %s833 = ssub.s32 16, 16
          %834 = vsyncadd %s829, %s833
          %s835 = smul.addr %s60, 16
          %s836 = scalar_lea.hbm %s11, %s835
          %s838 = sshll.u32 %s831, 4
          %s839 = int_to_ptr.vmem [resolvable:$true] %s838
          %841 = dma.hbm_to_vmem [thread:$0]  %s836, 16, %s839, %s829
        $region64: #{decoder_forward.2} parent=15 // pred_fallthru
          _
        // Predicated region
        $region65: #{decoder_forward.2} parent=15 // pred_check
          %p842 = pneg %p396
        $region66: #{decoder_forward.2} parent=15 // pred_check_branch
          %844 = sbr.rel (%p842) target = $region68
        $region67: #{decoder_forward.2} parent=15 // pred_region
          %s845 = sand.u32 %s52, 1
          %s846 = scalar_lea.sflag [#allocation14], %s845
          %s847 = sand.u32 %s386, 1
          %s848 = scalar_lea.vmem [#allocation13], %s847
          %s850 = ssub.s32 16, 16
          %851 = vsyncadd %s846, %s850
          %s852 = smul.addr %s60, 16
          %s853 = scalar_lea.hbm %s12, %s852
          %s855 = sshll.u32 %s848, 4
          %s856 = int_to_ptr.vmem [resolvable:$true] %s855
          %858 = dma.hbm_to_vmem [thread:$0]  %s853, 16, %s856, %s846
        $region68: #{decoder_forward.2} parent=15 // pred_fallthru
          _
        // Predicated region
        $region69: #{decoder_forward.2} parent=15 // pred_check
          %p859 = pneg %p422
        $region70: #{decoder_forward.2} parent=15 // pred_check_branch
          %861 = sbr.rel (%p859) target = $region72
        $region71: #{decoder_forward.2} parent=15 // pred_region
          %s862 = sand.u32 %s52, 1
          %s863 = scalar_lea.sflag [#allocation14], %s862
          %s864 = sand.u32 %s412, 1
          %s865 = scalar_lea.vmem [#allocation15], %s864
          %s867 = ssub.s32 16, 16
          %868 = vsyncadd %s863, %s867
          %s869 = smul.addr %s60, 16
          %s870 = scalar_lea.hbm %s13, %s869
          %s872 = sshll.u32 %s865, 4
          %s873 = int_to_ptr.vmem [resolvable:$true] %s872
          %875 = dma.hbm_to_vmem [thread:$0]  %s870, 16, %s873, %s863
        $region72: #{decoder_forward.2} parent=15 // pred_fallthru
          _
        // Predicated region
        $region73: #{decoder_forward.2} parent=15 // pred_check
          %p876 = pneg %p448
        $region74: #{decoder_forward.2} parent=15 // pred_check_branch
          %878 = sbr.rel (%p876) target = $region76
        $region75: #{decoder_forward.2} parent=15 // pred_region
          %s879 = sand.u32 %s52, 1
          %s880 = scalar_lea.sflag [#allocation17], %s879
          %s881 = sand.u32 %s438, 1
          %s882 = scalar_lea.vmem [#allocation16], %s881
          %s884 = ssub.s32 16, 16
          %885 = vsyncadd %s880, %s884
          %s886 = smul.addr %s60, 16
          %s887 = scalar_lea.hbm %s14, %s886
          %s889 = sshll.u32 %s882, 4
          %s890 = int_to_ptr.vmem [resolvable:$true] %s889
          %892 = dma.hbm_to_vmem [thread:$0]  %s887, 16, %s890, %s880
        $region76: #{decoder_forward.2} parent=15 // pred_fallthru
          _
        // Predicated region
        $region77: #{decoder_forward.2} parent=15 // pred_check
          %p893 = pneg %p474
        $region78: #{decoder_forward.2} parent=15 // pred_check_branch
          %895 = sbr.rel (%p893) target = $region80
        $region79: #{decoder_forward.2} parent=15 // pred_region
          %s896 = sand.u32 %s52, 1
          %s897 = scalar_lea.sflag [#allocation17], %s896
          %s898 = sand.u32 %s464, 1
          %s899 = scalar_lea.vmem [#allocation18], %s898
          %s901 = ssub.s32 16, 16
          %902 = vsyncadd %s897, %s901
          %s903 = smul.addr %s60, 16
          %s904 = scalar_lea.hbm %s15, %s903
          %s906 = sshll.u32 %s899, 4
          %s907 = int_to_ptr.vmem [resolvable:$true] %s906
          %909 = dma.hbm_to_vmem [thread:$0]  %s904, 16, %s907, %s897
        $region80: #{decoder_forward.2} parent=15 // pred_fallthru
          _
        // Predicated region
        $region81: #{decoder_forward.2} parent=15 // pred_check
          %p910 = pneg %p500
        $region82: #{decoder_forward.2} parent=15 // pred_check_branch
          %912 = sbr.rel (%p910) target = $region84
        $region83: #{decoder_forward.2} parent=15 // pred_region
          %s913 = sand.u32 %s52, 1
          %s914 = scalar_lea.sflag [#allocation20], %s913
          %s915 = sand.u32 %s490, 1
          %s916 = scalar_lea.vmem [#allocation19], %s915
          %s918 = ssub.s32 16, 16
          %919 = vsyncadd %s914, %s918
          %s920 = smul.addr %s60, 16
          %s921 = scalar_lea.hbm %s16, %s920
          %s923 = sshll.u32 %s916, 4
          %s924 = int_to_ptr.vmem [resolvable:$true] %s923
          %926 = dma.hbm_to_vmem [thread:$0]  %s921, 16, %s924, %s914
        $region84: #{decoder_forward.2} parent=15 // pred_fallthru
          _
        // Predicated region
        $region85: #{decoder_forward.2} parent=15 // pred_check
          %p927 = pneg %p526
        $region86: #{decoder_forward.2} parent=15 // pred_check_branch
          %929 = sbr.rel (%p927) target = $region88
        $region87: #{decoder_forward.2} parent=15 // pred_region
          %s930 = sand.u32 %s52, 1
          %s931 = scalar_lea.sflag [#allocation20], %s930
          %s932 = sand.u32 %s516, 1
          %s933 = scalar_lea.vmem [#allocation21], %s932
          %s935 = ssub.s32 16, 16
          %936 = vsyncadd %s931, %s935
          %s937 = smul.addr %s60, 16
          %s938 = scalar_lea.hbm %s17, %s937
          %s940 = sshll.u32 %s933, 4
          %s941 = int_to_ptr.vmem [resolvable:$true] %s940
          %943 = dma.hbm_to_vmem [thread:$0]  %s938, 16, %s941, %s931
        $region88: #{decoder_forward.2} parent=15 // pred_fallthru
          _
        // Predicated region
        $region89: #{decoder_forward.2} parent=15 // pred_check
          %p944 = pneg %p552
        $region90: #{decoder_forward.2} parent=15 // pred_check_branch
          %946 = sbr.rel (%p944) target = $region92
        $region91: #{decoder_forward.2} parent=15 // pred_region
          %p947 = scmp.lt.s32.totalorder %s60, 1
          %s948 = scalar_select %p947, %s60, 1
          %s949 = smul.addr %s948, 4
          %s950 = smul.addr %s949, 4
          %s951 = scalar_lea.vmem %s18, %s950
        $region92: #{decoder_forward.2} parent=15 // pred_fallthru
          _
        // Predicated region
        $region93: #{decoder_forward.2} parent=15 // pred_check
          %p952 = pneg %p578
        $region94: #{decoder_forward.2} parent=15 // pred_check_branch
          %954 = sbr.rel (%p952) target = $region96
        $region95: #{decoder_forward.2} parent=15 // pred_region
          %s955 = sand.u32 %s52, 1
          %s956 = scalar_lea.sflag [#allocation23], %s955
          %s957 = sand.u32 %s568, 1
          %s958 = scalar_lea.vmem [#allocation22], %s957
          %s960 = ssub.s32 16, 16
          %961 = vsyncadd %s956, %s960
          %s962 = smul.addr %s60, 16
          %s963 = scalar_lea.hbm %s19, %s962
          %s965 = sshll.u32 %s958, 4
          %s966 = int_to_ptr.vmem [resolvable:$true] %s965
          %968 = dma.hbm_to_vmem [thread:$0]  %s963, 16, %s966, %s956
        $region96: #{decoder_forward.2} parent=15 // pred_fallthru
          _
        // Predicated region
        $region97: #{decoder_forward.2} parent=15 // pred_check
          %p969 = pneg %p604
        $region98: #{decoder_forward.2} parent=15 // pred_check_branch
          %971 = sbr.rel (%p969) target = $region100
        $region99: #{decoder_forward.2} parent=15 // pred_region
          %p972 = scmp.lt.s32.totalorder %s60, 1
          %s973 = scalar_select %p972, %s60, 1
          %s974 = smul.addr %s973, 16
          %s975 = smul.addr %s974, 4
          %s976 = scalar_lea.vmem %s20, %s975
        $region100: #{decoder_forward.2} parent=15 // pred_fallthru
          _
        // Predicated region
        $region101: #{decoder_forward.2} parent=15 // pred_check
          %p977 = pneg %p630
        $region102: #{decoder_forward.2} parent=15 // pred_check_branch
          %979 = sbr.rel (%p977) target = $region104
        $region103: #{decoder_forward.2} parent=15 // pred_region
          %s980 = sand.u32 %s52, 1
          %s981 = scalar_lea.sflag [#allocation23], %s980
          %s982 = sand.u32 %s620, 1
          %s983 = scalar_lea.vmem [#allocation24], %s982
          %s985 = ssub.s32 16, 16
          %986 = vsyncadd %s981, %s985
          %s987 = smul.addr %s60, 16
          %s988 = scalar_lea.hbm %s21, %s987
          %s990 = sshll.u32 %s983, 4
          %s991 = int_to_ptr.vmem [resolvable:$true] %s990
          %993 = dma.hbm_to_vmem [thread:$0]  %s988, 16, %s991, %s981
        $region104: #{decoder_forward.2} parent=15 // pred_fallthru
          _
      $region16: #{decoder_forward.2} parent=5 // pred_fallthru
        _
      %p994 = scmp.le.s32.totalorder 1, %s52
      %p995 = scmp.lt.s32.totalorder %s52, 5
      %p996 = pnand %p994, %p995
      %p997 = pneg %p996
      // Predicated region
      $region105: #{decoder_forward.2} parent=5 // pred_check
        _
      $region106: #{decoder_forward.2} parent=5 // pred_check_branch
        %999 = sbr.rel (%p996) target = $region108
      $region107: #{decoder_forward.2} parent=5 // pred_region
        %s1000 = ssub.s32 %s52, 1
        %s1001 = sand.u32 %s77, 1
        %s1002 = scalar_lea.sflag [#allocation3], %s1001
        %s1003 = sand.u32 %s77, 1
        %s1004 = smul.addr %s1003, 8
        %s1005 = scalar_lea.vmem [#allocation2], %s1004
        // Predicated region
        $region109: #{decoder_forward.2} parent=107 // pred_check
          %p1006 = pneg %p90
        $region110: #{decoder_forward.2} parent=107 // pred_check_branch
          %1008 = sbr.rel (%p1006) target = $region112
        $region111: #{decoder_forward.2} parent=107 // pred_region
          %1009 = dma.done %s1002, 128
        $region112: #{decoder_forward.2} parent=107 // pred_fallthru
          _
        %s1010 = sand.u32 %s57, 1
        %s1011 = scalar_lea.sflag [#allocation5], %s1010
        %s1012 = sand.u32 %s103, 1
        %s1013 = smul.addr %s1012, 8
        %s1014 = scalar_lea.vmem [#allocation4], %s1013
        // Predicated region
        $region113: #{decoder_forward.2} parent=107 // pred_check
          %p1015 = pneg %p116
        $region114: #{decoder_forward.2} parent=107 // pred_check_branch
          %1017 = sbr.rel (%p1015) target = $region116
        $region115: #{decoder_forward.2} parent=107 // pred_region
          %1018 = dma.done %s1011, 128
        $region116: #{decoder_forward.2} parent=107 // pred_fallthru
          _
        %s1019 = sand.u32 %s57, 1
        %s1020 = scalar_lea.sflag [#allocation5], %s1019
        %s1021 = sand.u32 %s155, 1
        %s1022 = scalar_lea.vmem [#allocation6], %s1021
        // Predicated region
        $region117: #{decoder_forward.2} parent=107 // pred_check
          %p1023 = pneg %p168
        $region118: #{decoder_forward.2} parent=107 // pred_check_branch
          %1025 = sbr.rel (%p1023) target = $region120
        $region119: #{decoder_forward.2} parent=107 // pred_region
          %1026 = dma.done %s1020, 16
        $region120: #{decoder_forward.2} parent=107 // pred_fallthru
          _
        %s1027 = sand.u32 %s57, 1
        %s1028 = scalar_lea.sflag [#allocation8], %s1027
        %s1029 = sand.u32 %s207, 1
        %s1030 = scalar_lea.vmem [#allocation7], %s1029
        // Predicated region
        $region121: #{decoder_forward.2} parent=107 // pred_check
          %p1031 = pneg %p220
        $region122: #{decoder_forward.2} parent=107 // pred_check_branch
          %1033 = sbr.rel (%p1031) target = $region124
        $region123: #{decoder_forward.2} parent=107 // pred_region
          %1034 = dma.done %s1028, 16
        $region124: #{decoder_forward.2} parent=107 // pred_fallthru
          _
        %s1035 = sand.u32 %s57, 1
        %s1036 = scalar_lea.sflag [#allocation8], %s1035
        %s1037 = sand.u32 %s259, 1
        %s1038 = scalar_lea.vmem [#allocation9], %s1037
        // Predicated region
        $region125: #{decoder_forward.2} parent=107 // pred_check
          %p1039 = pneg %p272
        $region126: #{decoder_forward.2} parent=107 // pred_check_branch
          %1041 = sbr.rel (%p1039) target = $region128
        $region127: #{decoder_forward.2} parent=107 // pred_region
          %1042 = dma.done %s1036, 16
        $region128: #{decoder_forward.2} parent=107 // pred_fallthru
          _
        %s1043 = sand.u32 %s57, 1
        %s1044 = scalar_lea.sflag [#allocation11], %s1043
        %s1045 = sand.u32 %s311, 1
        %s1046 = scalar_lea.vmem [#allocation10], %s1045
        // Predicated region
        $region129: #{decoder_forward.2} parent=107 // pred_check
          %p1047 = pneg %p324
        $region130: #{decoder_forward.2} parent=107 // pred_check_branch
          %1049 = sbr.rel (%p1047) target = $region132
        $region131: #{decoder_forward.2} parent=107 // pred_region
          %1050 = dma.done %s1044, 16
        $region132: #{decoder_forward.2} parent=107 // pred_fallthru
          _
        %s1051 = sand.u32 %s57, 1
        %s1052 = scalar_lea.sflag [#allocation11], %s1051
        %s1053 = sand.u32 %s363, 1
        %s1054 = scalar_lea.vmem [#allocation12], %s1053
        // Predicated region
        $region133: #{decoder_forward.2} parent=107 // pred_check
          %p1055 = pneg %p376
        $region134: #{decoder_forward.2} parent=107 // pred_check_branch
          %1057 = sbr.rel (%p1055) target = $region136
        $region135: #{decoder_forward.2} parent=107 // pred_region
          %1058 = dma.done %s1052, 16
        $region136: #{decoder_forward.2} parent=107 // pred_fallthru
          _
        %s1059 = sand.u32 %s57, 1
        %s1060 = scalar_lea.sflag [#allocation14], %s1059
        %s1061 = sand.u32 %s389, 1
        %s1062 = scalar_lea.vmem [#allocation13], %s1061
        // Predicated region
        $region137: #{decoder_forward.2} parent=107 // pred_check
          %p1063 = pneg %p402
        $region138: #{decoder_forward.2} parent=107 // pred_check_branch
          %1065 = sbr.rel (%p1063) target = $region140
        $region139: #{decoder_forward.2} parent=107 // pred_region
          %1066 = dma.done %s1060, 16
        $region140: #{decoder_forward.2} parent=107 // pred_fallthru
          _
        %s1067 = sand.u32 %s57, 1
        %s1068 = scalar_lea.sflag [#allocation14], %s1067
        %s1069 = sand.u32 %s415, 1
        %s1070 = scalar_lea.vmem [#allocation15], %s1069
        // Predicated region
        $region141: #{decoder_forward.2} parent=107 // pred_check
          %p1071 = pneg %p428
        $region142: #{decoder_forward.2} parent=107 // pred_check_branch
          %1073 = sbr.rel (%p1071) target = $region144
        $region143: #{decoder_forward.2} parent=107 // pred_region
          %1074 = dma.done %s1068, 16
        $region144: #{decoder_forward.2} parent=107 // pred_fallthru
          _
        %s1075 = sand.u32 %s57, 1
        %s1076 = scalar_lea.sflag [#allocation17], %s1075
        %s1077 = sand.u32 %s441, 1
        %s1078 = scalar_lea.vmem [#allocation16], %s1077
        // Predicated region
        $region145: #{decoder_forward.2} parent=107 // pred_check
          %p1079 = pneg %p454
        $region146: #{decoder_forward.2} parent=107 // pred_check_branch
          %1081 = sbr.rel (%p1079) target = $region148
        $region147: #{decoder_forward.2} parent=107 // pred_region
          %1082 = dma.done %s1076, 16
        $region148: #{decoder_forward.2} parent=107 // pred_fallthru
          _
        %s1083 = sand.u32 %s57, 1
        %s1084 = scalar_lea.sflag [#allocation17], %s1083
        %s1085 = sand.u32 %s467, 1
        %s1086 = scalar_lea.vmem [#allocation18], %s1085
        // Predicated region
        $region149: #{decoder_forward.2} parent=107 // pred_check
          %p1087 = pneg %p480
        $region150: #{decoder_forward.2} parent=107 // pred_check_branch
          %1089 = sbr.rel (%p1087) target = $region152
        $region151: #{decoder_forward.2} parent=107 // pred_region
          %1090 = dma.done %s1084, 16
        $region152: #{decoder_forward.2} parent=107 // pred_fallthru
          _
        %s1091 = sand.u32 %s57, 1
        %s1092 = scalar_lea.sflag [#allocation20], %s1091
        %s1093 = sand.u32 %s493, 1
        %s1094 = scalar_lea.vmem [#allocation19], %s1093
        // Predicated region
        $region153: #{decoder_forward.2} parent=107 // pred_check
          %p1095 = pneg %p506
        $region154: #{decoder_forward.2} parent=107 // pred_check_branch
          %1097 = sbr.rel (%p1095) target = $region156
        $region155: #{decoder_forward.2} parent=107 // pred_region
          %1098 = dma.done %s1092, 16
        $region156: #{decoder_forward.2} parent=107 // pred_fallthru
          _
        %s1099 = sand.u32 %s57, 1
        %s1100 = scalar_lea.sflag [#allocation20], %s1099
        %s1101 = sand.u32 %s519, 1
        %s1102 = scalar_lea.vmem [#allocation21], %s1101
        // Predicated region
        $region157: #{decoder_forward.2} parent=107 // pred_check
          %p1103 = pneg %p532
        $region158: #{decoder_forward.2} parent=107 // pred_check_branch
          %1105 = sbr.rel (%p1103) target = $region160
        $region159: #{decoder_forward.2} parent=107 // pred_region
          %1106 = dma.done %s1100, 16
        $region160: #{decoder_forward.2} parent=107 // pred_fallthru
          _
        %s1107 = sand.u32 %s57, 1
        %s1108 = scalar_lea.sflag [#allocation23], %s1107
        %s1109 = sand.u32 %s571, 1
        %s1110 = scalar_lea.vmem [#allocation22], %s1109
        // Predicated region
        $region161: #{decoder_forward.2} parent=107 // pred_check
          %p1111 = pneg %p584
        $region162: #{decoder_forward.2} parent=107 // pred_check_branch
          %1113 = sbr.rel (%p1111) target = $region164
        $region163: #{decoder_forward.2} parent=107 // pred_region
          %1114 = dma.done %s1108, 16
        $region164: #{decoder_forward.2} parent=107 // pred_fallthru
          _
        %s1115 = sand.u32 %s57, 1
        %s1116 = scalar_lea.sflag [#allocation23], %s1115
        %s1117 = sand.u32 %s623, 1
        %s1118 = scalar_lea.vmem [#allocation24], %s1117
        // Predicated region
        $region165: #{decoder_forward.2} parent=107 // pred_check
          %p1119 = pneg %p636
        $region166: #{decoder_forward.2} parent=107 // pred_check_branch
          %1121 = sbr.rel (%p1119) target = $region168
        $region167: #{decoder_forward.2} parent=107 // pred_region
          %1122 = dma.done %s1116, 16
        $region168: #{decoder_forward.2} parent=107 // pred_fallthru
          _
        %s1123 = sand.u32 %s77, 1
        %s1124 = scalar_lea.sflag [#allocation3], %s1123
        %s1125 = sand.u32 %s77, 1
        %s1126 = smul.addr %s1125, 8
        %s1127 = scalar_lea.vmem [#allocation2], %s1126
        %p1128 = pneg %p90
        %p1129 = pneg %p87
        %s1130 = sand.u32 %s57, 1
        %s1131 = scalar_lea.sflag [#allocation5], %s1130
        %s1132 = sand.u32 %s103, 1
        %s1133 = smul.addr %s1132, 8
        %s1134 = scalar_lea.vmem [#allocation4], %s1133
        %p1135 = pneg %p116
        %p1136 = pneg %p113
        %p1137 = scmp.lt.s32.totalorder %s62, 1
        %s1138 = scalar_select %p1137, %s62, 1
        %s1139 = smul.addr %s1138, 4
        %s1140 = smul.addr %s1139, 4
        %s1141 = scalar_lea.vmem %s2, %s1140
        %p1142 = pneg %p142
        %p1143 = pneg %p139
        %s1144 = sand.u32 %s57, 1
        %s1145 = scalar_lea.sflag [#allocation5], %s1144
        %s1146 = sand.u32 %s155, 1
        %s1147 = scalar_lea.vmem [#allocation6], %s1146
        %p1148 = pneg %p168
        %p1149 = pneg %p165
        %p1150 = scmp.lt.s32.totalorder %s62, 1
        %s1151 = scalar_select %p1150, %s62, 1
        %s1152 = smul.addr %s1151, 4
        %s1153 = smul.addr %s1152, 4
        %s1154 = scalar_lea.vmem %s4, %s1153
        %p1155 = pneg %p194
        %p1156 = pneg %p191
        %s1157 = sand.u32 %s57, 1
        %s1158 = scalar_lea.sflag [#allocation8], %s1157
        %s1159 = sand.u32 %s207, 1
        %s1160 = scalar_lea.vmem [#allocation7], %s1159
        %p1161 = pneg %p220
        %p1162 = pneg %p217
        %p1163 = scmp.lt.s32.totalorder %s62, 1
        %s1164 = scalar_select %p1163, %s62, 1
        %s1165 = smul.addr %s1164, 4
        %s1166 = smul.addr %s1165, 4
        %s1167 = scalar_lea.vmem %s6, %s1166
        %p1168 = pneg %p246
        %p1169 = pneg %p243
        %s1170 = sand.u32 %s57, 1
        %s1171 = scalar_lea.sflag [#allocation8], %s1170
        %s1172 = sand.u32 %s259, 1
        %s1173 = scalar_lea.vmem [#allocation9], %s1172
        %p1174 = pneg %p272
        %p1175 = pneg %p269
        %p1176 = scmp.lt.s32.totalorder %s62, 1
        %s1177 = scalar_select %p1176, %s62, 1
        %s1178 = smul.addr %s1177, 4
        %s1179 = smul.addr %s1178, 4
        %s1180 = scalar_lea.vmem %s8, %s1179
        %p1181 = pneg %p298
        %p1182 = pneg %p295
        %s1183 = sand.u32 %s57, 1
        %s1184 = scalar_lea.sflag [#allocation11], %s1183
        %s1185 = sand.u32 %s311, 1
        %s1186 = scalar_lea.vmem [#allocation10], %s1185
        %p1187 = pneg %p324
        %p1188 = pneg %p321
        %p1189 = scmp.lt.s32.totalorder %s62, 1
        %s1190 = scalar_select %p1189, %s62, 1
        %s1191 = smul.addr %s1190, 4
        %s1192 = smul.addr %s1191, 4
        %s1193 = scalar_lea.vmem %s10, %s1192
        %p1194 = pneg %p350
        %p1195 = pneg %p347
        %s1196 = sand.u32 %s57, 1
        %s1197 = scalar_lea.sflag [#allocation11], %s1196
        %s1198 = sand.u32 %s363, 1
        %s1199 = scalar_lea.vmem [#allocation12], %s1198
        %p1200 = pneg %p376
        %p1201 = pneg %p373
        %s1202 = sand.u32 %s57, 1
        %s1203 = scalar_lea.sflag [#allocation14], %s1202
        %s1204 = sand.u32 %s389, 1
        %s1205 = scalar_lea.vmem [#allocation13], %s1204
        %p1206 = pneg %p402
        %p1207 = pneg %p399
        %s1208 = sand.u32 %s57, 1
        %s1209 = scalar_lea.sflag [#allocation14], %s1208
        %s1210 = sand.u32 %s415, 1
        %s1211 = scalar_lea.vmem [#allocation15], %s1210
        %p1212 = pneg %p428
        %p1213 = pneg %p425
        %s1214 = sand.u32 %s57, 1
        %s1215 = scalar_lea.sflag [#allocation17], %s1214
        %s1216 = sand.u32 %s441, 1
        %s1217 = scalar_lea.vmem [#allocation16], %s1216
        %p1218 = pneg %p454
        %p1219 = pneg %p451
        %s1220 = sand.u32 %s57, 1
        %s1221 = scalar_lea.sflag [#allocation17], %s1220
        %s1222 = sand.u32 %s467, 1
        %s1223 = scalar_lea.vmem [#allocation18], %s1222
        %p1224 = pneg %p480
        %p1225 = pneg %p477
        %s1226 = sand.u32 %s57, 1
        %s1227 = scalar_lea.sflag [#allocation20], %s1226
        %s1228 = sand.u32 %s493, 1
        %s1229 = scalar_lea.vmem [#allocation19], %s1228
        %p1230 = pneg %p506
        %p1231 = pneg %p503
        %s1232 = sand.u32 %s57, 1
        %s1233 = scalar_lea.sflag [#allocation20], %s1232
        %s1234 = sand.u32 %s519, 1
        %s1235 = scalar_lea.vmem [#allocation21], %s1234
        %p1236 = pneg %p532
        %p1237 = pneg %p529
        %p1238 = scmp.lt.s32.totalorder %s62, 1
        %s1239 = scalar_select %p1238, %s62, 1
        %s1240 = smul.addr %s1239, 4
        %s1241 = smul.addr %s1240, 4
        %s1242 = scalar_lea.vmem %s18, %s1241
        %p1243 = pneg %p558
        %p1244 = pneg %p555
        %s1245 = sand.u32 %s57, 1
        %s1246 = scalar_lea.sflag [#allocation23], %s1245
        %s1247 = sand.u32 %s571, 1
        %s1248 = scalar_lea.vmem [#allocation22], %s1247
        %p1249 = pneg %p584
        %p1250 = pneg %p581
        %p1251 = scmp.lt.s32.totalorder %s62, 1
        %s1252 = scalar_select %p1251, %s62, 1
        %s1253 = smul.addr %s1252, 16
        %s1254 = smul.addr %s1253, 4
        %s1255 = scalar_lea.vmem %s20, %s1254
        %p1256 = pneg %p610
        %p1257 = pneg %p607
        %s1258 = sand.u32 %s57, 1
        %s1259 = scalar_lea.sflag [#allocation23], %s1258
        %s1260 = sand.u32 %s623, 1
        %s1261 = scalar_lea.vmem [#allocation24], %s1260
        %p1262 = pneg %p636
        %p1263 = pneg %p633
        %p1264 = pneg %p662
        %p1265 = pneg %p659
        %p1266 = scmp.lt.s32.totalorder %s61, 1
        %s1267 = scalar_select %p1266, %s61, 1
        %s1268 = smul.addr %s1267, 8
        %s1269 = scalar_lea.vmem %s22, %s1268
        %p1270 = scmp.lt.s32.totalorder %s62, 1
        %s1271 = scalar_select %p1270, %s62, 1
        %s1272 = smul.addr %s1271, 4
        %s1273 = smul.addr %s1272, 4
        %s1274 = scalar_lea.vmem %s2, %s1273
        %p1275 = scmp.lt.s32.totalorder %s62, 1
        %s1276 = scalar_select %p1275, %s62, 1
        %s1277 = smul.addr %s1276, 4
        %s1278 = smul.addr %s1277, 4
        %s1279 = scalar_lea.vmem %s4, %s1278
        %p1280 = scmp.lt.s32.totalorder %s62, 1
        %s1281 = scalar_select %p1280, %s62, 1
        %s1282 = smul.addr %s1281, 4
        %s1283 = smul.addr %s1282, 4
        %s1284 = scalar_lea.vmem %s6, %s1283
        %p1285 = scmp.lt.s32.totalorder %s62, 1
        %s1286 = scalar_select %p1285, %s62, 1
        %s1287 = smul.addr %s1286, 4
        %s1288 = smul.addr %s1287, 4
        %s1289 = scalar_lea.vmem %s8, %s1288
        %p1290 = scmp.lt.s32.totalorder %s62, 1
        %s1291 = scalar_select %p1290, %s62, 1
        %s1292 = smul.addr %s1291, 4
        %s1293 = smul.addr %s1292, 4
        %s1294 = scalar_lea.vmem %s10, %s1293
        %p1295 = scmp.lt.s32.totalorder %s62, 1
        %s1296 = scalar_select %p1295, %s62, 1
        %s1297 = smul.addr %s1296, 4
        %s1298 = smul.addr %s1297, 4
        %s1299 = scalar_lea.vmem %s18, %s1298
        %p1300 = scmp.lt.s32.totalorder %s62, 1
        %s1301 = scalar_select %p1300, %s62, 1
        %s1302 = smul.addr %s1301, 16
        %s1303 = smul.addr %s1302, 4
        %s1304 = scalar_lea.vmem %s20, %s1303
        %p1305 = scmp.lt.s32.totalorder %s61, 1
        %s1306 = scalar_select %p1305, %s61, 1
        %s1307 = smul.addr %s1306, 8
        %s1308 = scalar_lea.vmem %s22, %s1307
        %p1310 = scmp.eq.s32.totalorder %s62, 0
        // Predicated region
        $region169: #{decoder_forward.2} parent=107 // pred_check
          %p1311 = pneg %p1310
        $region170: #{decoder_forward.2} parent=107 // pred_check_branch
          %1313 = sbr.rel (%p1311) target = $region172
        $region171: #{decoder_forward.2} parent=107 // pred_region
          %v1314 = vld [vmem:[%s1014] sm:$0xff]
          %vm1315 = vcmask 261120
          %1316 = vst.msk [vmem:[%s1308] sm:$0xff] %vm1315, %v1314
        $region172: #{decoder_forward.2} parent=107 // pred_fallthru
          _
        %v1317 = vld [vmem:[%s1308] sm:$0xff]
        %v1318 = vld [vmem:[%s1005] sm:$0xff]
        %v1319 = vpack.c.bf16 %v1317, %v1317
        %v1320 = vld [vmem:[%s1274] sm:$0xf]
        %v1321 = vld [vmem:[%s1274 + $0x4] sm:$0xf]
        %v1322 = vld [vmem:[%s1274 + $0x8] sm:$0xf]
        %v1323 = vld [vmem:[%s1274 + $0xc] sm:$0xf]
        %v1324 = vld [vmem:[%s1022] sm:$0x1]
        %v1326 = vlaneseq
        %v1327 = vshrl.u32 %v1326, 7
        %v1328 = vsub.s32 0, %v1327
        %v1329 = vrot.slane %v1324, %v1328
        %v1335 = vunpack.c.l.b16 %v1320
        %v1336 = vunpack.c.l.b16 %v1321
        %v1337 = vunpack.c.l.b16 %v1322
        %v1338 = vunpack.c.l.b16 %v1323
        %v1339 = vpack.c.b16 %v1336, %v1335
        %v1340 = vpack.c.b16 %v1338, %v1337
        %vm1343 = vcmask 261120
        %v1345 = vsel %vm1343, %v1319, 0
        %1347 = vmatprep.subr.bf16.mxu0 0
        %1348 = vmatpush1.bf16.msra.mxu0 %v1339
        %1349 = vmatprep.subr.bf16.mxu0 0
        %1350 = vmatpush1.bf16.msra.mxu0 %v1340
        %1351 = vmatprep.subr.bf16.mxu0 0
        %1352 = vmatpush1.bf16.msra.mxu0 0
        %1353 = vmatprep.subr.bf16.mxu0 0
        %1354 = vmatpush1.bf16.msra.mxu0 0
        %1355 = vmatprep.subr.bf16.mxu0 0
        %1356 = vmatpush1.bf16.msra.mxu0 0
        %1357 = vmatprep.subr.bf16.mxu0 0
        %1358 = vmatpush1.bf16.msra.mxu0 0
        %1359 = vmatprep.subr.bf16.mxu0 0
        %1360 = vmatpush1.bf16.msra.mxu0 0
        %1361 = vmatprep.subr.bf16.mxu0 0
        %1362 = vmatpush1.bf16.msra.mxu0 0
        %1363 = vmatprep.subr.bf16.mxu0 0
        %1364 = vmatpush1.bf16.msra.mxu0 0
        %1365 = vmatprep.subr.bf16.mxu0 0
        %1366 = vmatpush1.bf16.msra.mxu0 0
        %1367 = vmatprep.subr.bf16.mxu0 0
        %1368 = vmatpush1.bf16.msra.mxu0 0
        %1369 = vmatprep.subr.bf16.mxu0 0
        %1370 = vmatpush1.bf16.msra.mxu0 0
        %1371 = vmatprep.subr.bf16.mxu0 0
        %1372 = vmatpush1.bf16.msra.mxu0 0
        %1373 = vmatprep.subr.bf16.mxu0 0
        %1374 = vmatpush1.bf16.msra.mxu0 0
        %1375 = vmatprep.subr.bf16.mxu0 0
        %1376 = vmatpush1.bf16.msra.mxu0 0
        %1377 = vmatprep.subr.bf16.mxu0 0
        %1378 = vmatpush1.bf16.msra.mxu0 0
        %1379 = vmatprep.mubr.bf16.mxu0 0
        %1380 = vmatmul.mubr.bf16.gmra.mrb[0].mxu0 %v1345
        %v1381 = vpop.f32.mrb[0].mxu0
        %v1382 = vadd.f32 %v1329, %v1381
        %v1383 = vpop.f32.mrb[0].mxu0
        %v1384 = vpop.f32.mrb[0].mxu0
        %v1385 = vpop.f32.mrb[0].mxu0
        %1386 = vdwg.mxu0
        %1388 = vrot.lane.b32.xlu0 %v1382, 120
        %v1389 = vpop.permute.xlu0 %1388
        %1391 = vrot.lane.b32.xlu0 %v1382, 112
        %v1392 = vpop.permute.xlu0 %1391
        %1394 = vrot.lane.b32.xlu0 %v1382, 104
        %v1395 = vpop.permute.xlu0 %1394
        %v1397 = vpack.c.bf16 %v1382, %v1382
        %v1398 = vpack.c.bf16 %v1389, %v1389
        %v1399 = vpack.c.bf16 %v1392, %v1392
        %v1400 = vpack.c.bf16 %v1395, %v1395
        %1402 = vrot.lane.b32.xlu0 %v1397, 96
        %v1403 = vpop.permute.xlu0 %1402
        %vm1404 = vcmask 64512
        %v1406 = vsel %vm1404, %v1397, 0
        %v1409 = vsel %vm1404, %v1403, 0
        %1411 = vmatprep.subr.bf16.mxu0 0
        %1412 = vmatpush1.bf16.xpose.msra.mxu0 %v1409
        %1413 = vmatprep.subr.bf16.mxu0 0
        %1414 = vmatpush1.bf16.xpose.msra.mxu0 0
        %1415 = vmatprep.subr.bf16.mxu0 0
        %1416 = vmatpush1.bf16.xpose.msra.mxu0 0
        %1417 = vmatprep.subr.bf16.mxu0 0
        %1418 = vmatpush1.bf16.xpose.msra.mxu0 0
        %1419 = vmatprep.subr.bf16.mxu0 0
        %1420 = vmatpush1.bf16.xpose.msra.mxu0 0
        %1421 = vmatprep.subr.bf16.mxu0 0
        %1422 = vmatpush1.bf16.xpose.msra.mxu0 0
        %1423 = vmatprep.subr.bf16.mxu0 0
        %1424 = vmatpush1.bf16.xpose.msra.mxu0 0
        %1425 = vmatprep.subr.bf16.mxu0 0
        %1426 = vmatpush1.bf16.xpose.msra.mxu0 0
        %1427 = vmatprep.subr.bf16.mxu0 0
        %1428 = vmatpush1.bf16.xpose.msra.mxu0 0
        %1429 = vmatprep.subr.bf16.mxu0 0
        %1430 = vmatpush1.bf16.xpose.msra.mxu0 0
        %1431 = vmatprep.subr.bf16.mxu0 0
        %1432 = vmatpush1.bf16.xpose.msra.mxu0 0
        %1433 = vmatprep.subr.bf16.mxu0 0
        %1434 = vmatpush1.bf16.xpose.msra.mxu0 0
        %1435 = vmatprep.subr.bf16.mxu0 0
        %1436 = vmatpush1.bf16.xpose.msra.mxu0 0
        %1437 = vmatprep.subr.bf16.mxu0 0
        %1438 = vmatpush1.bf16.xpose.msra.mxu0 0
        %1439 = vmatprep.subr.bf16.mxu0 0
        %1440 = vmatpush1.bf16.xpose.msra.mxu0 0
        %1441 = vmatprep.subr.bf16.mxu0 0
        %1442 = vmatpush1.bf16.xpose.msra.mxu0 0
        %1443 = vmatprep.mubr.bf16.mxu0 0
        %1444 = vmatmul.mubr.bf16.gmra.mrb[0].mxu0 %v1406
        %v1445 = vpop.f32.mrb[0].mxu0
        %v1446 = vadd.f32 0.0, %v1445
        %v1447 = vpop.f32.mrb[0].mxu0
        %v1448 = vpop.f32.mrb[0].mxu0
        %v1449 = vpop.f32.mrb[0].mxu0
        %1450 = vdwg.mxu0
        %1452 = vrot.lane.b32.xlu0 %v1398, 96
        %v1453 = vpop.permute.xlu0 %1452
        %v1455 = vsel %vm1404, %v1398, 0
        %v1458 = vsel %vm1404, %v1453, 0
        %1460 = vmatprep.subr.bf16.mxu0 0
        %1461 = vmatpush1.bf16.xpose.msra.mxu0 %v1458
        %1462 = vmatprep.subr.bf16.mxu0 0
        %1463 = vmatpush1.bf16.xpose.msra.mxu0 0
        %1464 = vmatprep.subr.bf16.mxu0 0
        %1465 = vmatpush1.bf16.xpose.msra.mxu0 0
        %1466 = vmatprep.subr.bf16.mxu0 0
        %1467 = vmatpush1.bf16.xpose.msra.mxu0 0
        %1468 = vmatprep.subr.bf16.mxu0 0
        %1469 = vmatpush1.bf16.xpose.msra.mxu0 0
        %1470 = vmatprep.subr.bf16.mxu0 0
        %1471 = vmatpush1.bf16.xpose.msra.mxu0 0
        %1472 = vmatprep.subr.bf16.mxu0 0
        %1473 = vmatpush1.bf16.xpose.msra.mxu0 0
        %1474 = vmatprep.subr.bf16.mxu0 0
        %1475 = vmatpush1.bf16.xpose.msra.mxu0 0
        %1476 = vmatprep.subr.bf16.mxu0 0
        %1477 = vmatpush1.bf16.xpose.msra.mxu0 0
        %1478 = vmatprep.subr.bf16.mxu0 0
        %1479 = vmatpush1.bf16.xpose.msra.mxu0 0
        %1480 = vmatprep.subr.bf16.mxu0 0
        %1481 = vmatpush1.bf16.xpose.msra.mxu0 0
        %1482 = vmatprep.subr.bf16.mxu0 0
        %1483 = vmatpush1.bf16.xpose.msra.mxu0 0
        %1484 = vmatprep.subr.bf16.mxu0 0
        %1485 = vmatpush1.bf16.xpose.msra.mxu0 0
        %1486 = vmatprep.subr.bf16.mxu0 0
        %1487 = vmatpush1.bf16.xpose.msra.mxu0 0
        %1488 = vmatprep.subr.bf16.mxu0 0
        %1489 = vmatpush1.bf16.xpose.msra.mxu0 0
        %1490 = vmatprep.subr.bf16.mxu0 0
        %1491 = vmatpush1.bf16.xpose.msra.mxu0 0
        %1492 = vmatprep.mubr.bf16.mxu0 0
        %1493 = vmatmul.mubr.bf16.gmra.mrb[0].mxu0 %v1455
        %v1494 = vpop.f32.mrb[0].mxu0
        %v1495 = vadd.f32 0.0, %v1494
        %v1496 = vpop.f32.mrb[0].mxu0
        %v1497 = vpop.f32.mrb[0].mxu0
        %v1498 = vpop.f32.mrb[0].mxu0
        %1499 = vdwg.mxu0
        %1501 = vrot.lane.b32.xlu0 %v1399, 96
        %v1502 = vpop.permute.xlu0 %1501
        %v1504 = vsel %vm1404, %v1399, 0
        %v1507 = vsel %vm1404, %v1502, 0
        %1509 = vmatprep.subr.bf16.mxu0 0
        %1510 = vmatpush1.bf16.xpose.msra.mxu0 %v1507
        %1511 = vmatprep.subr.bf16.mxu0 0
        %1512 = vmatpush1.bf16.xpose.msra.mxu0 0
        %1513 = vmatprep.subr.bf16.mxu0 0
        %1514 = vmatpush1.bf16.xpose.msra.mxu0 0
        %1515 = vmatprep.subr.bf16.mxu0 0
        %1516 = vmatpush1.bf16.xpose.msra.mxu0 0
        %1517 = vmatprep.subr.bf16.mxu0 0
        %1518 = vmatpush1.bf16.xpose.msra.mxu0 0
        %1519 = vmatprep.subr.bf16.mxu0 0
        %1520 = vmatpush1.bf16.xpose.msra.mxu0 0
        %1521 = vmatprep.subr.bf16.mxu0 0
        %1522 = vmatpush1.bf16.xpose.msra.mxu0 0
        %1523 = vmatprep.subr.bf16.mxu0 0
        %1524 = vmatpush1.bf16.xpose.msra.mxu0 0
        %1525 = vmatprep.subr.bf16.mxu0 0
        %1526 = vmatpush1.bf16.xpose.msra.mxu0 0
        %1527 = vmatprep.subr.bf16.mxu0 0
        %1528 = vmatpush1.bf16.xpose.msra.mxu0 0
        %1529 = vmatprep.subr.bf16.mxu0 0
        %1530 = vmatpush1.bf16.xpose.msra.mxu0 0
        %1531 = vmatprep.subr.bf16.mxu0 0
        %1532 = vmatpush1.bf16.xpose.msra.mxu0 0
        %1533 = vmatprep.subr.bf16.mxu0 0
        %1534 = vmatpush1.bf16.xpose.msra.mxu0 0
        %1535 = vmatprep.subr.bf16.mxu0 0
        %1536 = vmatpush1.bf16.xpose.msra.mxu0 0
        %1537 = vmatprep.subr.bf16.mxu0 0
        %1538 = vmatpush1.bf16.xpose.msra.mxu0 0
        %1539 = vmatprep.subr.bf16.mxu0 0
        %1540 = vmatpush1.bf16.xpose.msra.mxu0 0
        %1541 = vmatprep.mubr.bf16.mxu0 0
        %1542 = vmatmul.mubr.bf16.gmra.mrb[0].mxu0 %v1504
        %v1543 = vpop.f32.mrb[0].mxu0
        %v1544 = vadd.f32 0.0, %v1543
        %v1545 = vpop.f32.mrb[0].mxu0
        %v1546 = vpop.f32.mrb[0].mxu0
        %v1547 = vpop.f32.mrb[0].mxu0
        %1548 = vdwg.mxu0
        %1550 = vrot.lane.b32.xlu0 %v1400, 96
        %v1551 = vpop.permute.xlu0 %1550
        %v1553 = vsel %vm1404, %v1400, 0
        %v1556 = vsel %vm1404, %v1551, 0
        %1558 = vmatprep.subr.bf16.mxu0 0
        %1559 = vmatpush1.bf16.xpose.msra.mxu0 %v1556
        %1560 = vmatprep.subr.bf16.mxu0 0
        %1561 = vmatpush1.bf16.xpose.msra.mxu0 0
        %1562 = vmatprep.subr.bf16.mxu0 0
        %1563 = vmatpush1.bf16.xpose.msra.mxu0 0
        %1564 = vmatprep.subr.bf16.mxu0 0
        %1565 = vmatpush1.bf16.xpose.msra.mxu0 0
        %1566 = vmatprep.subr.bf16.mxu0 0
        %1567 = vmatpush1.bf16.xpose.msra.mxu0 0
        %1568 = vmatprep.subr.bf16.mxu0 0
        %1569 = vmatpush1.bf16.xpose.msra.mxu0 0
        %1570 = vmatprep.subr.bf16.mxu0 0
        %1571 = vmatpush1.bf16.xpose.msra.mxu0 0
        %1572 = vmatprep.subr.bf16.mxu0 0
        %1573 = vmatpush1.bf16.xpose.msra.mxu0 0
        %1574 = vmatprep.subr.bf16.mxu0 0
        %1575 = vmatpush1.bf16.xpose.msra.mxu0 0
        %1576 = vmatprep.subr.bf16.mxu0 0
        %1577 = vmatpush1.bf16.xpose.msra.mxu0 0
        %1578 = vmatprep.subr.bf16.mxu0 0
        %1579 = vmatpush1.bf16.xpose.msra.mxu0 0
        %1580 = vmatprep.subr.bf16.mxu0 0
        %1581 = vmatpush1.bf16.xpose.msra.mxu0 0
        %1582 = vmatprep.subr.bf16.mxu0 0
        %1583 = vmatpush1.bf16.xpose.msra.mxu0 0
        %1584 = vmatprep.subr.bf16.mxu0 0
        %1585 = vmatpush1.bf16.xpose.msra.mxu0 0
        %1586 = vmatprep.subr.bf16.mxu0 0
        %1587 = vmatpush1.bf16.xpose.msra.mxu0 0
        %1588 = vmatprep.subr.bf16.mxu0 0
        %1589 = vmatpush1.bf16.xpose.msra.mxu0 0
        %1590 = vmatprep.mubr.bf16.mxu0 0
        %1591 = vmatmul.mubr.bf16.gmra.mrb[0].mxu0 %v1553
        %v1592 = vpop.f32.mrb[0].mxu0
        %v1593 = vadd.f32 0.0, %v1592
        %v1594 = vpop.f32.mrb[0].mxu0
        %v1595 = vpop.f32.mrb[0].mxu0
        %v1596 = vpop.f32.mrb[0].mxu0
        %1597 = vdwg.mxu0
        %v1598 = vmul.f32 %v1446, 0.35355338
        %v1599 = vmul.f32 %v1495, 0.35355338
        %v1600 = vmul.f32 %v1544, 0.35355338
        %v1601 = vmul.f32 %v1593, 0.35355338
        %v1602 = vlaneseq
        %v1603 = vshrl.u32 %v1602, 7
        %v1604 = vlaneseq
        %v1605 = vand.u32 %v1604, 127
        %vm1606 = vcmp.le.s32.totalorder %v1605, %v1603
        %v1607 = vsel %vm1606, 1, 0
        %vm1608 = vcmp.eq.s32.totalorder %v1607, 1
        %v1609 = vsel %vm1608, %v1598, -1e+30
        %v1610 = vsel %vm1608, %v1599, -1e+30
        %v1611 = vsel %vm1608, %v1600, -1e+30
        %v1612 = vsel %vm1608, %v1601, -1e+30
        %v1613 = vsel %vm1404, %v1609, -inf
        %1614 = vmax.xlane.f32.xlu0 %v1613
        %v1615 = vpop.xlane.xlu0 %1614
        %v1616 = vsel %vm1404, %v1610, -inf
        %1617 = vmax.xlane.f32.xlu0 %v1616
        %v1618 = vpop.xlane.xlu0 %1617
        %v1619 = vsel %vm1404, %v1611, -inf
        %1620 = vmax.xlane.f32.xlu0 %v1619
        %v1621 = vpop.xlane.xlu0 %1620
        %v1622 = vsel %vm1404, %v1612, -inf
        %1623 = vmax.xlane.f32.xlu0 %v1622
        %v1624 = vpop.xlane.xlu0 %1623
        %v1625 = vsub.f32 %v1609, %v1615
        %v1626 = vsub.f32 %v1610, %v1618
        %v1627 = vsub.f32 %v1611, %v1621
        %v1628 = vsub.f32 %v1612, %v1624
        %v1629 = vmul.f32 %v1625, 1.442695
        %v1630 = vpow.pop %v1629
        %v1631 = vmul.f32 %v1626, 1.442695
        %v1632 = vpow.pop %v1631
        %v1633 = vmul.f32 %v1627, 1.442695
        %v1634 = vpow.pop %v1633
        %v1635 = vmul.f32 %v1628, 1.442695
        %v1636 = vpow.pop %v1635
        %v1637 = vsel %vm1404, %v1630, 0.0
        %1638 = vadd.xlane.f32.xlu0 %v1637
        %v1639 = vpop.xlane.xlu0 %1638
        %v1640 = vsel %vm1404, %v1632, 0.0
        %1641 = vadd.xlane.f32.xlu0 %v1640
        %v1642 = vpop.xlane.xlu0 %1641
        %v1643 = vsel %vm1404, %v1634, 0.0
        %1644 = vadd.xlane.f32.xlu0 %v1643
        %v1645 = vpop.xlane.xlu0 %1644
        %v1646 = vsel %vm1404, %v1636, 0.0
        %1647 = vadd.xlane.f32.xlu0 %v1646
        %v1648 = vpop.xlane.xlu0 %1647
        %v1649 = vrcp.pop %v1639
        %v1650 = vrcp.pop %v1642
        %v1651 = vrcp.pop %v1645
        %v1652 = vrcp.pop %v1648
        %v1653 = vmul.f32 %v1630, %v1649
        %v1654 = vmul.f32 %v1632, %v1650
        %v1655 = vmul.f32 %v1634, %v1651
        %v1656 = vmul.f32 %v1636, %v1652
        %v1657 = vpack.c.bf16 %v1653, %v1653
        %v1658 = vpack.c.bf16 %v1654, %v1654
        %v1659 = vpack.c.bf16 %v1655, %v1655
        %v1660 = vpack.c.bf16 %v1656, %v1656
        %1661 = vrot.lane.b32.xlu0 %v1397, 64
        %v1662 = vpop.permute.xlu0 %1661
        %v1664 = vsel %vm1404, %v1657, 0
        %vm1666 = vcmask 1043456
        %v1668 = vsel %vm1666, %v1662, 0
        %1670 = vmatprep.subr.bf16.mxu0 0
        %1671 = vmatpush1.bf16.msra.mxu0 %v1668
        %1672 = vmatprep.subr.bf16.mxu0 0
        %1673 = vmatpush1.bf16.msra.mxu0 0
        %1674 = vmatprep.subr.bf16.mxu0 0
        %1675 = vmatpush1.bf16.msra.mxu0 0
        %1676 = vmatprep.subr.bf16.mxu0 0
        %1677 = vmatpush1.bf16.msra.mxu0 0
        %1678 = vmatprep.subr.bf16.mxu0 0
        %1679 = vmatpush1.bf16.msra.mxu0 0
        %1680 = vmatprep.subr.bf16.mxu0 0
        %1681 = vmatpush1.bf16.msra.mxu0 0
        %1682 = vmatprep.subr.bf16.mxu0 0
        %1683 = vmatpush1.bf16.msra.mxu0 0
        %1684 = vmatprep.subr.bf16.mxu0 0
        %1685 = vmatpush1.bf16.msra.mxu0 0
        %1686 = vmatprep.subr.bf16.mxu0 0
        %1687 = vmatpush1.bf16.msra.mxu0 0
        %1688 = vmatprep.subr.bf16.mxu0 0
        %1689 = vmatpush1.bf16.msra.mxu0 0
        %1690 = vmatprep.subr.bf16.mxu0 0
        %1691 = vmatpush1.bf16.msra.mxu0 0
        %1692 = vmatprep.subr.bf16.mxu0 0
        %1693 = vmatpush1.bf16.msra.mxu0 0
        %1694 = vmatprep.subr.bf16.mxu0 0
        %1695 = vmatpush1.bf16.msra.mxu0 0
        %1696 = vmatprep.subr.bf16.mxu0 0
        %1697 = vmatpush1.bf16.msra.mxu0 0
        %1698 = vmatprep.subr.bf16.mxu0 0
        %1699 = vmatpush1.bf16.msra.mxu0 0
        %1700 = vmatprep.subr.bf16.mxu0 0
        %1701 = vmatpush1.bf16.msra.mxu0 0
        %1702 = vmatprep.mubr.bf16.mxu0 0
        %1703 = vmatmul.mubr.bf16.gmra.mrb[0].mxu0 %v1664
        %v1704 = vpop.f32.mrb[0].mxu0
        %v1705 = vadd.f32 0.0, %v1704
        %v1706 = vpop.f32.mrb[0].mxu0
        %v1707 = vpop.f32.mrb[0].mxu0
        %v1708 = vpop.f32.mrb[0].mxu0
        %1709 = vdwg.mxu0
        %1710 = vrot.lane.b32.xlu0 %v1398, 64
        %v1711 = vpop.permute.xlu0 %1710
        %v1713 = vsel %vm1404, %v1658, 0
        %v1716 = vsel %vm1666, %v1711, 0
        %1718 = vmatprep.subr.bf16.mxu0 0
        %1719 = vmatpush1.bf16.msra.mxu0 %v1716
        %1720 = vmatprep.subr.bf16.mxu0 0
        %1721 = vmatpush1.bf16.msra.mxu0 0
        %1722 = vmatprep.subr.bf16.mxu0 0
        %1723 = vmatpush1.bf16.msra.mxu0 0
        %1724 = vmatprep.subr.bf16.mxu0 0
        %1725 = vmatpush1.bf16.msra.mxu0 0
        %1726 = vmatprep.subr.bf16.mxu0 0
        %1727 = vmatpush1.bf16.msra.mxu0 0
        %1728 = vmatprep.subr.bf16.mxu0 0
        %1729 = vmatpush1.bf16.msra.mxu0 0
        %1730 = vmatprep.subr.bf16.mxu0 0
        %1731 = vmatpush1.bf16.msra.mxu0 0
        %1732 = vmatprep.subr.bf16.mxu0 0
        %1733 = vmatpush1.bf16.msra.mxu0 0
        %1734 = vmatprep.subr.bf16.mxu0 0
        %1735 = vmatpush1.bf16.msra.mxu0 0
        %1736 = vmatprep.subr.bf16.mxu0 0
        %1737 = vmatpush1.bf16.msra.mxu0 0
        %1738 = vmatprep.subr.bf16.mxu0 0
        %1739 = vmatpush1.bf16.msra.mxu0 0
        %1740 = vmatprep.subr.bf16.mxu0 0
        %1741 = vmatpush1.bf16.msra.mxu0 0
        %1742 = vmatprep.subr.bf16.mxu0 0
        %1743 = vmatpush1.bf16.msra.mxu0 0
        %1744 = vmatprep.subr.bf16.mxu0 0
        %1745 = vmatpush1.bf16.msra.mxu0 0
        %1746 = vmatprep.subr.bf16.mxu0 0
        %1747 = vmatpush1.bf16.msra.mxu0 0
        %1748 = vmatprep.subr.bf16.mxu0 0
        %1749 = vmatpush1.bf16.msra.mxu0 0
        %1750 = vmatprep.mubr.bf16.mxu0 0
        %1751 = vmatmul.mubr.bf16.gmra.mrb[0].mxu0 %v1713
        %v1752 = vpop.f32.mrb[0].mxu0
        %v1753 = vadd.f32 0.0, %v1752
        %v1754 = vpop.f32.mrb[0].mxu0
        %v1755 = vpop.f32.mrb[0].mxu0
        %v1756 = vpop.f32.mrb[0].mxu0
        %1757 = vdwg.mxu0
        %1758 = vrot.lane.b32.xlu0 %v1399, 64
        %v1759 = vpop.permute.xlu0 %1758
        %v1761 = vsel %vm1404, %v1659, 0
        %v1764 = vsel %vm1666, %v1759, 0
        %1766 = vmatprep.subr.bf16.mxu0 0
        %1767 = vmatpush1.bf16.msra.mxu0 %v1764
        %1768 = vmatprep.subr.bf16.mxu0 0
        %1769 = vmatpush1.bf16.msra.mxu0 0
        %1770 = vmatprep.subr.bf16.mxu0 0
        %1771 = vmatpush1.bf16.msra.mxu0 0
        %1772 = vmatprep.subr.bf16.mxu0 0
        %1773 = vmatpush1.bf16.msra.mxu0 0
        %1774 = vmatprep.subr.bf16.mxu0 0
        %1775 = vmatpush1.bf16.msra.mxu0 0
        %1776 = vmatprep.subr.bf16.mxu0 0
        %1777 = vmatpush1.bf16.msra.mxu0 0
        %1778 = vmatprep.subr.bf16.mxu0 0
        %1779 = vmatpush1.bf16.msra.mxu0 0
        %1780 = vmatprep.subr.bf16.mxu0 0
        %1781 = vmatpush1.bf16.msra.mxu0 0
        %1782 = vmatprep.subr.bf16.mxu0 0
        %1783 = vmatpush1.bf16.msra.mxu0 0
        %1784 = vmatprep.subr.bf16.mxu0 0
        %1785 = vmatpush1.bf16.msra.mxu0 0
        %1786 = vmatprep.subr.bf16.mxu0 0
        %1787 = vmatpush1.bf16.msra.mxu0 0
        %1788 = vmatprep.subr.bf16.mxu0 0
        %1789 = vmatpush1.bf16.msra.mxu0 0
        %1790 = vmatprep.subr.bf16.mxu0 0
        %1791 = vmatpush1.bf16.msra.mxu0 0
        %1792 = vmatprep.subr.bf16.mxu0 0
        %1793 = vmatpush1.bf16.msra.mxu0 0
        %1794 = vmatprep.subr.bf16.mxu0 0
        %1795 = vmatpush1.bf16.msra.mxu0 0
        %1796 = vmatprep.subr.bf16.mxu0 0
        %1797 = vmatpush1.bf16.msra.mxu0 0
        %1798 = vmatprep.mubr.bf16.mxu0 0
        %1799 = vmatmul.mubr.bf16.gmra.mrb[0].mxu0 %v1761
        %v1800 = vpop.f32.mrb[0].mxu0
        %v1801 = vadd.f32 0.0, %v1800
        %v1802 = vpop.f32.mrb[0].mxu0
        %v1803 = vpop.f32.mrb[0].mxu0
        %v1804 = vpop.f32.mrb[0].mxu0
        %1805 = vdwg.mxu0
        %1806 = vrot.lane.b32.xlu0 %v1400, 64
        %v1807 = vpop.permute.xlu0 %1806
        %v1809 = vsel %vm1404, %v1660, 0
        %v1812 = vsel %vm1666, %v1807, 0
        %1814 = vmatprep.subr.bf16.mxu0 0
        %1815 = vmatpush1.bf16.msra.mxu0 %v1812
        %1816 = vmatprep.subr.bf16.mxu0 0
        %1817 = vmatpush1.bf16.msra.mxu0 0
        %1818 = vmatprep.subr.bf16.mxu0 0
        %1819 = vmatpush1.bf16.msra.mxu0 0
        %1820 = vmatprep.subr.bf16.mxu0 0
        %1821 = vmatpush1.bf16.msra.mxu0 0
        %1822 = vmatprep.subr.bf16.mxu0 0
        %1823 = vmatpush1.bf16.msra.mxu0 0
        %1824 = vmatprep.subr.bf16.mxu0 0
        %1825 = vmatpush1.bf16.msra.mxu0 0
        %1826 = vmatprep.subr.bf16.mxu0 0
        %1827 = vmatpush1.bf16.msra.mxu0 0
        %1828 = vmatprep.subr.bf16.mxu0 0
        %1829 = vmatpush1.bf16.msra.mxu0 0
        %1830 = vmatprep.subr.bf16.mxu0 0
        %1831 = vmatpush1.bf16.msra.mxu0 0
        %1832 = vmatprep.subr.bf16.mxu0 0
        %1833 = vmatpush1.bf16.msra.mxu0 0
        %1834 = vmatprep.subr.bf16.mxu0 0
        %1835 = vmatpush1.bf16.msra.mxu0 0
        %1836 = vmatprep.subr.bf16.mxu0 0
        %1837 = vmatpush1.bf16.msra.mxu0 0
        %1838 = vmatprep.subr.bf16.mxu0 0
        %1839 = vmatpush1.bf16.msra.mxu0 0
        %1840 = vmatprep.subr.bf16.mxu0 0
        %1841 = vmatpush1.bf16.msra.mxu0 0
        %1842 = vmatprep.subr.bf16.mxu0 0
        %1843 = vmatpush1.bf16.msra.mxu0 0
        %1844 = vmatprep.subr.bf16.mxu0 0
        %1845 = vmatpush1.bf16.msra.mxu0 0
        %1846 = vmatprep.mubr.bf16.mxu0 0
        %1847 = vmatmul.mubr.bf16.gmra.mrb[0].mxu0 %v1809
        %v1848 = vpop.f32.mrb[0].mxu0
        %v1849 = vadd.f32 0.0, %v1848
        %v1850 = vpop.f32.mrb[0].mxu0
        %v1851 = vpop.f32.mrb[0].mxu0
        %v1852 = vpop.f32.mrb[0].mxu0
        %1853 = vdwg.mxu0
        %1855 = vrot.lane.b32.xlu0 %v1753, 8
        %v1856 = vpop.permute.xlu0 %1855
        %1859 = vrot.lane.b32.xlu0 %v1801, 16
        %v1860 = vpop.permute.xlu0 %1859
        %1863 = vrot.lane.b32.xlu0 %v1849, 24
        %v1864 = vpop.permute.xlu0 %1863
        %v1866 = vsel %vm1404, %v1705, %v1856
        %vm1867 = vcmask 130048
        %v1868 = vsel %vm1867, %v1866, %v1860
        %vm1869 = vcmask 195584
        %v1870 = vsel %vm1869, %v1868, %v1864
        %v1871 = vpack.c.bf16 %v1870, %v1870
        %v1872 = vld [vmem:[%s1279] sm:$0xf]
        %v1873 = vld [vmem:[%s1279 + $0x4] sm:$0xf]
        %v1874 = vld [vmem:[%s1279 + $0x8] sm:$0xf]
        %v1875 = vld [vmem:[%s1279 + $0xc] sm:$0xf]
        %v1876 = vld [vmem:[%s1030] sm:$0x1]
        %v1878 = vlaneseq
        %v1879 = vshrl.u32 %v1878, 7
        %v1880 = vsub.s32 0, %v1879
        %v1881 = vrot.slane %v1876, %v1880
        %v1887 = vunpack.c.l.b16 %v1872
        %v1888 = vunpack.c.l.b16 %v1873
        %v1889 = vunpack.c.l.b16 %v1874
        %v1890 = vunpack.c.l.b16 %v1875
        %v1891 = vpack.c.b16 %v1888, %v1887
        %v1892 = vpack.c.b16 %v1890, %v1889
        %v1896 = vsel %vm1343, %v1871, 0
        %1898 = vmatprep.subr.bf16.mxu0 0
        %1899 = vmatpush1.bf16.msra.mxu0 %v1891
        %1900 = vmatprep.subr.bf16.mxu0 0
        %1901 = vmatpush1.bf16.msra.mxu0 %v1892
        %1902 = vmatprep.subr.bf16.mxu0 0
        %1903 = vmatpush1.bf16.msra.mxu0 0
        %1904 = vmatprep.subr.bf16.mxu0 0
        %1905 = vmatpush1.bf16.msra.mxu0 0
        %1906 = vmatprep.subr.bf16.mxu0 0
        %1907 = vmatpush1.bf16.msra.mxu0 0
        %1908 = vmatprep.subr.bf16.mxu0 0
        %1909 = vmatpush1.bf16.msra.mxu0 0
        %1910 = vmatprep.subr.bf16.mxu0 0
        %1911 = vmatpush1.bf16.msra.mxu0 0
        %1912 = vmatprep.subr.bf16.mxu0 0
        %1913 = vmatpush1.bf16.msra.mxu0 0
        %1914 = vmatprep.subr.bf16.mxu0 0
        %1915 = vmatpush1.bf16.msra.mxu0 0
        %1916 = vmatprep.subr.bf16.mxu0 0
        %1917 = vmatpush1.bf16.msra.mxu0 0
        %1918 = vmatprep.subr.bf16.mxu0 0
        %1919 = vmatpush1.bf16.msra.mxu0 0
        %1920 = vmatprep.subr.bf16.mxu0 0
        %1921 = vmatpush1.bf16.msra.mxu0 0
        %1922 = vmatprep.subr.bf16.mxu0 0
        %1923 = vmatpush1.bf16.msra.mxu0 0
        %1924 = vmatprep.subr.bf16.mxu0 0
        %1925 = vmatpush1.bf16.msra.mxu0 0
        %1926 = vmatprep.subr.bf16.mxu0 0
        %1927 = vmatpush1.bf16.msra.mxu0 0
        %1928 = vmatprep.subr.bf16.mxu0 0
        %1929 = vmatpush1.bf16.msra.mxu0 0
        %1930 = vmatprep.mubr.bf16.mxu0 0
        %1931 = vmatmul.mubr.bf16.gmra.mrb[0].mxu0 %v1896
        %v1932 = vpop.f32.mrb[0].mxu0
        %v1933 = vadd.f32 %v1881, %v1932
        %v1934 = vpop.f32.mrb[0].mxu0
        %v1935 = vpop.f32.mrb[0].mxu0
        %v1936 = vpop.f32.mrb[0].mxu0
        %1937 = vdwg.mxu0
        %v1938 = vadd.f32 %v1317, %v1933
        %v1939 = vld [vmem:[%s1062] sm:$0x1]
        %v1940 = vld [vmem:[%s1070] sm:$0x1]
        %v1941 = vsel %vm1343, %v1938, 0.0
        %1942 = vadd.xlane.f32.xlu0 %v1941
        %v1943 = vpop.xlane.xlu0 %1942
        %v1944 = vrcp.pop 32.0
        %v1945 = vmul.f32 %v1943, %v1944
        %v1946 = vsub.f32 %v1938, %v1945
        %v1947 = vmul.f32 %v1946, %v1946
        %v1948 = vsel %vm1343, %v1947, 0.0
        %1949 = vadd.xlane.f32.xlu0 %v1948
        %v1950 = vpop.xlane.xlu0 %1949
        %v1951 = vmul.f32 %v1950, %v1944
        %v1952 = vadd.f32 %v1951, 1e-05
        %v1953 = vrsqrt.pop %v1952
        %v1954 = vmul.f32 %v1946, %v1953
        %v1956 = vlaneseq
        %v1957 = vshrl.u32 %v1956, 7
        %v1958 = vsub.s32 0, %v1957
        %v1959 = vrot.slane %v1939, %v1958
        %v1961 = vmul.f32 %v1954, %v1959
        %v1963 = vlaneseq
        %v1964 = vshrl.u32 %v1963, 7
        %v1965 = vsub.s32 0, %v1964
        %v1966 = vrot.slane %v1940, %v1965
        %v1968 = vadd.f32 %v1961, %v1966
        %v1969 = vld [vmem:[%s1284] sm:$0xf]
        %v1970 = vld [vmem:[%s1284 + $0x4] sm:$0xf]
        %v1971 = vld [vmem:[%s1284 + $0x8] sm:$0xf]
        %v1972 = vld [vmem:[%s1284 + $0xc] sm:$0xf]
        %v1973 = vld [vmem:[%s1038] sm:$0x1]
        %v1975 = vlaneseq
        %v1976 = vshrl.u32 %v1975, 7
        %v1977 = vsub.s32 0, %v1976
        %v1978 = vrot.slane %v1973, %v1977
        %v1984 = vunpack.c.l.b16 %v1969
        %v1985 = vunpack.c.l.b16 %v1970
        %v1986 = vunpack.c.l.b16 %v1971
        %v1987 = vunpack.c.l.b16 %v1972
        %v1988 = vpack.c.b16 %v1985, %v1984
        %v1989 = vpack.c.b16 %v1987, %v1986
        %1992 = vmatprep.subr.bf16.mxu0 0
        %1993 = vmatpush1.bf16.msra.mxu0 %v1988
        %1994 = vmatprep.subr.bf16.mxu0 0
        %1995 = vmatpush1.bf16.msra.mxu0 %v1989
        %1996 = vmatprep.subr.bf16.mxu0 0
        %1997 = vmatpush1.bf16.msra.mxu0 0
        %1998 = vmatprep.subr.bf16.mxu0 0
        %1999 = vmatpush1.bf16.msra.mxu0 0
        %2000 = vmatprep.subr.bf16.mxu0 0
        %2001 = vmatpush1.bf16.msra.mxu0 0
        %2002 = vmatprep.subr.bf16.mxu0 0
        %2003 = vmatpush1.bf16.msra.mxu0 0
        %2004 = vmatprep.subr.bf16.mxu0 0
        %2005 = vmatpush1.bf16.msra.mxu0 0
        %2006 = vmatprep.subr.bf16.mxu0 0
        %2007 = vmatpush1.bf16.msra.mxu0 0
        %2008 = vmatprep.subr.bf16.mxu0 0
        %2009 = vmatpush1.bf16.msra.mxu0 0
        %2010 = vmatprep.subr.bf16.mxu0 0
        %2011 = vmatpush1.bf16.msra.mxu0 0
        %2012 = vmatprep.subr.bf16.mxu0 0
        %2013 = vmatpush1.bf16.msra.mxu0 0
        %2014 = vmatprep.subr.bf16.mxu0 0
        %2015 = vmatpush1.bf16.msra.mxu0 0
        %2016 = vmatprep.subr.bf16.mxu0 0
        %2017 = vmatpush1.bf16.msra.mxu0 0
        %2018 = vmatprep.subr.bf16.mxu0 0
        %2019 = vmatpush1.bf16.msra.mxu0 0
        %2020 = vmatprep.subr.bf16.mxu0 0
        %2021 = vmatpush1.bf16.msra.mxu0 0
        %2022 = vmatprep.subr.bf16.mxu0 0
        %2023 = vmatpush1.bf16.msra.mxu0 0
        %2024 = vmatprep.mubr.bf16.mxu0 0
        %2025 = vmatmul.mubr.bf16.gmra.mrb[0].mxu0 %v1345
        %v2026 = vpop.f32.mrb[0].mxu0
        %v2027 = vadd.f32 %v1978, %v2026
        %v2028 = vpop.f32.mrb[0].mxu0
        %v2029 = vpop.f32.mrb[0].mxu0
        %v2030 = vpop.f32.mrb[0].mxu0
        %2031 = vdwg.mxu0
        %v2032 = vpack.c.bf16 %v1318, %v1318
        %v2033 = vld [vmem:[%s1289] sm:$0xf]
        %v2034 = vld [vmem:[%s1289 + $0x4] sm:$0xf]
        %v2035 = vld [vmem:[%s1289 + $0x8] sm:$0xf]
        %v2036 = vld [vmem:[%s1289 + $0xc] sm:$0xf]
        %v2037 = vld [vmem:[%s1046] sm:$0x1]
        %v2039 = vlaneseq
        %v2040 = vshrl.u32 %v2039, 7
        %v2041 = vsub.s32 0, %v2040
        %v2042 = vrot.slane %v2037, %v2041
        %v2048 = vunpack.c.l.b16 %v2033
        %v2049 = vunpack.c.l.b16 %v2034
        %v2050 = vunpack.c.l.b16 %v2035
        %v2051 = vunpack.c.l.b16 %v2036
        %v2052 = vpack.c.b16 %v2049, %v2048
        %v2053 = vpack.c.b16 %v2051, %v2050
        %v2057 = vsel %vm1343, %v2032, 0
        %2059 = vmatprep.subr.bf16.mxu0 0
        %2060 = vmatpush1.bf16.msra.mxu0 %v2052
        %2061 = vmatprep.subr.bf16.mxu0 0
        %2062 = vmatpush1.bf16.msra.mxu0 %v2053
        %2063 = vmatprep.subr.bf16.mxu0 0
        %2064 = vmatpush1.bf16.msra.mxu0 0
        %2065 = vmatprep.subr.bf16.mxu0 0
        %2066 = vmatpush1.bf16.msra.mxu0 0
        %2067 = vmatprep.subr.bf16.mxu0 0
        %2068 = vmatpush1.bf16.msra.mxu0 0
        %2069 = vmatprep.subr.bf16.mxu0 0
        %2070 = vmatpush1.bf16.msra.mxu0 0
        %2071 = vmatprep.subr.bf16.mxu0 0
        %2072 = vmatpush1.bf16.msra.mxu0 0
        %2073 = vmatprep.subr.bf16.mxu0 0
        %2074 = vmatpush1.bf16.msra.mxu0 0
        %2075 = vmatprep.subr.bf16.mxu0 0
        %2076 = vmatpush1.bf16.msra.mxu0 0
        %2077 = vmatprep.subr.bf16.mxu0 0
        %2078 = vmatpush1.bf16.msra.mxu0 0
        %2079 = vmatprep.subr.bf16.mxu0 0
        %2080 = vmatpush1.bf16.msra.mxu0 0
        %2081 = vmatprep.subr.bf16.mxu0 0
        %2082 = vmatpush1.bf16.msra.mxu0 0
        %2083 = vmatprep.subr.bf16.mxu0 0
        %2084 = vmatpush1.bf16.msra.mxu0 0
        %2085 = vmatprep.subr.bf16.mxu0 0
        %2086 = vmatpush1.bf16.msra.mxu0 0
        %2087 = vmatprep.subr.bf16.mxu0 0
        %2088 = vmatpush1.bf16.msra.mxu0 0
        %2089 = vmatprep.subr.bf16.mxu0 0
        %2090 = vmatpush1.bf16.msra.mxu0 0
        %2091 = vmatprep.mubr.bf16.mxu0 0
        %2092 = vmatmul.mubr.bf16.gmra.mrb[0].mxu0 %v2057
        %v2093 = vpop.f32.mrb[0].mxu0
        %v2094 = vadd.f32 %v2042, %v2093
        %v2095 = vpop.f32.mrb[0].mxu0
        %v2096 = vpop.f32.mrb[0].mxu0
        %v2097 = vpop.f32.mrb[0].mxu0
        %2098 = vdwg.mxu0
        %2100 = vrot.lane.b32.xlu0 %v2027, 120
        %v2101 = vpop.permute.xlu0 %2100
        %2103 = vrot.lane.b32.xlu0 %v2027, 112
        %v2104 = vpop.permute.xlu0 %2103
        %2106 = vrot.lane.b32.xlu0 %v2027, 104
        %v2107 = vpop.permute.xlu0 %2106
        %v2109 = vpack.c.bf16 %v2027, %v2027
        %v2110 = vpack.c.bf16 %v2101, %v2101
        %v2111 = vpack.c.bf16 %v2104, %v2104
        %v2112 = vpack.c.bf16 %v2107, %v2107
        %2114 = vrot.lane.b32.xlu0 %v2094, 120
        %v2115 = vpop.permute.xlu0 %2114
        %2117 = vrot.lane.b32.xlu0 %v2094, 112
        %v2118 = vpop.permute.xlu0 %2117
        %2120 = vrot.lane.b32.xlu0 %v2094, 104
        %v2121 = vpop.permute.xlu0 %2120
        %v2123 = vpack.c.bf16 %v2094, %v2094
        %v2124 = vpack.c.bf16 %v2115, %v2115
        %v2125 = vpack.c.bf16 %v2118, %v2118
        %v2126 = vpack.c.bf16 %v2121, %v2121
        %v2128 = vsel %vm1404, %v2109, 0
        %v2131 = vsel %vm1404, %v2123, 0
        %2133 = vmatprep.subr.bf16.mxu0 0
        %2134 = vmatpush1.bf16.xpose.msra.mxu0 %v2131
        %2135 = vmatprep.subr.bf16.mxu0 0
        %2136 = vmatpush1.bf16.xpose.msra.mxu0 0
        %2137 = vmatprep.subr.bf16.mxu0 0
        %2138 = vmatpush1.bf16.xpose.msra.mxu0 0
        %2139 = vmatprep.subr.bf16.mxu0 0
        %2140 = vmatpush1.bf16.xpose.msra.mxu0 0
        %2141 = vmatprep.subr.bf16.mxu0 0
        %2142 = vmatpush1.bf16.xpose.msra.mxu0 0
        %2143 = vmatprep.subr.bf16.mxu0 0
        %2144 = vmatpush1.bf16.xpose.msra.mxu0 0
        %2145 = vmatprep.subr.bf16.mxu0 0
        %2146 = vmatpush1.bf16.xpose.msra.mxu0 0
        %2147 = vmatprep.subr.bf16.mxu0 0
        %2148 = vmatpush1.bf16.xpose.msra.mxu0 0
        %2149 = vmatprep.subr.bf16.mxu0 0
        %2150 = vmatpush1.bf16.xpose.msra.mxu0 0
        %2151 = vmatprep.subr.bf16.mxu0 0
        %2152 = vmatpush1.bf16.xpose.msra.mxu0 0
        %2153 = vmatprep.subr.bf16.mxu0 0
        %2154 = vmatpush1.bf16.xpose.msra.mxu0 0
        %2155 = vmatprep.subr.bf16.mxu0 0
        %2156 = vmatpush1.bf16.xpose.msra.mxu0 0
        %2157 = vmatprep.subr.bf16.mxu0 0
        %2158 = vmatpush1.bf16.xpose.msra.mxu0 0
        %2159 = vmatprep.subr.bf16.mxu0 0
        %2160 = vmatpush1.bf16.xpose.msra.mxu0 0
        %2161 = vmatprep.subr.bf16.mxu0 0
        %2162 = vmatpush1.bf16.xpose.msra.mxu0 0
        %2163 = vmatprep.subr.bf16.mxu0 0
        %2164 = vmatpush1.bf16.xpose.msra.mxu0 0
        %2165 = vmatprep.mubr.bf16.mxu0 0
        %2166 = vmatmul.mubr.bf16.gmra.mrb[0].mxu0 %v2128
        %v2167 = vpop.f32.mrb[0].mxu0
        %v2168 = vadd.f32 0.0, %v2167
        %v2169 = vpop.f32.mrb[0].mxu0
        %v2170 = vpop.f32.mrb[0].mxu0
        %v2171 = vpop.f32.mrb[0].mxu0
        %2172 = vdwg.mxu0
        %v2174 = vsel %vm1404, %v2110, 0
        %v2177 = vsel %vm1404, %v2124, 0
        %2179 = vmatprep.subr.bf16.mxu0 0
        %2180 = vmatpush1.bf16.xpose.msra.mxu0 %v2177
        %2181 = vmatprep.subr.bf16.mxu0 0
        %2182 = vmatpush1.bf16.xpose.msra.mxu0 0
        %2183 = vmatprep.subr.bf16.mxu0 0
        %2184 = vmatpush1.bf16.xpose.msra.mxu0 0
        %2185 = vmatprep.subr.bf16.mxu0 0
        %2186 = vmatpush1.bf16.xpose.msra.mxu0 0
        %2187 = vmatprep.subr.bf16.mxu0 0
        %2188 = vmatpush1.bf16.xpose.msra.mxu0 0
        %2189 = vmatprep.subr.bf16.mxu0 0
        %2190 = vmatpush1.bf16.xpose.msra.mxu0 0
        %2191 = vmatprep.subr.bf16.mxu0 0
        %2192 = vmatpush1.bf16.xpose.msra.mxu0 0
        %2193 = vmatprep.subr.bf16.mxu0 0
        %2194 = vmatpush1.bf16.xpose.msra.mxu0 0
        %2195 = vmatprep.subr.bf16.mxu0 0
        %2196 = vmatpush1.bf16.xpose.msra.mxu0 0
        %2197 = vmatprep.subr.bf16.mxu0 0
        %2198 = vmatpush1.bf16.xpose.msra.mxu0 0
        %2199 = vmatprep.subr.bf16.mxu0 0
        %2200 = vmatpush1.bf16.xpose.msra.mxu0 0
        %2201 = vmatprep.subr.bf16.mxu0 0
        %2202 = vmatpush1.bf16.xpose.msra.mxu0 0
        %2203 = vmatprep.subr.bf16.mxu0 0
        %2204 = vmatpush1.bf16.xpose.msra.mxu0 0
        %2205 = vmatprep.subr.bf16.mxu0 0
        %2206 = vmatpush1.bf16.xpose.msra.mxu0 0
        %2207 = vmatprep.subr.bf16.mxu0 0
        %2208 = vmatpush1.bf16.xpose.msra.mxu0 0
        %2209 = vmatprep.subr.bf16.mxu0 0
        %2210 = vmatpush1.bf16.xpose.msra.mxu0 0
        %2211 = vmatprep.mubr.bf16.mxu0 0
        %2212 = vmatmul.mubr.bf16.gmra.mrb[0].mxu0 %v2174
        %v2213 = vpop.f32.mrb[0].mxu0
        %v2214 = vadd.f32 0.0, %v2213
        %v2215 = vpop.f32.mrb[0].mxu0
        %v2216 = vpop.f32.mrb[0].mxu0
        %v2217 = vpop.f32.mrb[0].mxu0
        %2218 = vdwg.mxu0
        %v2220 = vsel %vm1404, %v2111, 0
        %v2223 = vsel %vm1404, %v2125, 0
        %2225 = vmatprep.subr.bf16.mxu0 0
        %2226 = vmatpush1.bf16.xpose.msra.mxu0 %v2223
        %2227 = vmatprep.subr.bf16.mxu0 0
        %2228 = vmatpush1.bf16.xpose.msra.mxu0 0
        %2229 = vmatprep.subr.bf16.mxu0 0
        %2230 = vmatpush1.bf16.xpose.msra.mxu0 0
        %2231 = vmatprep.subr.bf16.mxu0 0
        %2232 = vmatpush1.bf16.xpose.msra.mxu0 0
        %2233 = vmatprep.subr.bf16.mxu0 0
        %2234 = vmatpush1.bf16.xpose.msra.mxu0 0
        %2235 = vmatprep.subr.bf16.mxu0 0
        %2236 = vmatpush1.bf16.xpose.msra.mxu0 0
        %2237 = vmatprep.subr.bf16.mxu0 0
        %2238 = vmatpush1.bf16.xpose.msra.mxu0 0
        %2239 = vmatprep.subr.bf16.mxu0 0
        %2240 = vmatpush1.bf16.xpose.msra.mxu0 0
        %2241 = vmatprep.subr.bf16.mxu0 0
        %2242 = vmatpush1.bf16.xpose.msra.mxu0 0
        %2243 = vmatprep.subr.bf16.mxu0 0
        %2244 = vmatpush1.bf16.xpose.msra.mxu0 0
        %2245 = vmatprep.subr.bf16.mxu0 0
        %2246 = vmatpush1.bf16.xpose.msra.mxu0 0
        %2247 = vmatprep.subr.bf16.mxu0 0
        %2248 = vmatpush1.bf16.xpose.msra.mxu0 0
        %2249 = vmatprep.subr.bf16.mxu0 0
        %2250 = vmatpush1.bf16.xpose.msra.mxu0 0
        %2251 = vmatprep.subr.bf16.mxu0 0
        %2252 = vmatpush1.bf16.xpose.msra.mxu0 0
        %2253 = vmatprep.subr.bf16.mxu0 0
        %2254 = vmatpush1.bf16.xpose.msra.mxu0 0
        %2255 = vmatprep.subr.bf16.mxu0 0
        %2256 = vmatpush1.bf16.xpose.msra.mxu0 0
        %2257 = vmatprep.mubr.bf16.mxu0 0
        %2258 = vmatmul.mubr.bf16.gmra.mrb[0].mxu0 %v2220
        %v2259 = vpop.f32.mrb[0].mxu0
        %v2260 = vadd.f32 0.0, %v2259
        %v2261 = vpop.f32.mrb[0].mxu0
        %v2262 = vpop.f32.mrb[0].mxu0
        %v2263 = vpop.f32.mrb[0].mxu0
        %2264 = vdwg.mxu0
        %v2266 = vsel %vm1404, %v2112, 0
        %v2269 = vsel %vm1404, %v2126, 0
        %2271 = vmatprep.subr.bf16.mxu0 0
        %2272 = vmatpush1.bf16.xpose.msra.mxu0 %v2269
        %2273 = vmatprep.subr.bf16.mxu0 0
        %2274 = vmatpush1.bf16.xpose.msra.mxu0 0
        %2275 = vmatprep.subr.bf16.mxu0 0
        %2276 = vmatpush1.bf16.xpose.msra.mxu0 0
        %2277 = vmatprep.subr.bf16.mxu0 0
        %2278 = vmatpush1.bf16.xpose.msra.mxu0 0
        %2279 = vmatprep.subr.bf16.mxu0 0
        %2280 = vmatpush1.bf16.xpose.msra.mxu0 0
        %2281 = vmatprep.subr.bf16.mxu0 0
        %2282 = vmatpush1.bf16.xpose.msra.mxu0 0
        %2283 = vmatprep.subr.bf16.mxu0 0
        %2284 = vmatpush1.bf16.xpose.msra.mxu0 0
        %2285 = vmatprep.subr.bf16.mxu0 0
        %2286 = vmatpush1.bf16.xpose.msra.mxu0 0
        %2287 = vmatprep.subr.bf16.mxu0 0
        %2288 = vmatpush1.bf16.xpose.msra.mxu0 0
        %2289 = vmatprep.subr.bf16.mxu0 0
        %2290 = vmatpush1.bf16.xpose.msra.mxu0 0
        %2291 = vmatprep.subr.bf16.mxu0 0
        %2292 = vmatpush1.bf16.xpose.msra.mxu0 0
        %2293 = vmatprep.subr.bf16.mxu0 0
        %2294 = vmatpush1.bf16.xpose.msra.mxu0 0
        %2295 = vmatprep.subr.bf16.mxu0 0
        %2296 = vmatpush1.bf16.xpose.msra.mxu0 0
        %2297 = vmatprep.subr.bf16.mxu0 0
        %2298 = vmatpush1.bf16.xpose.msra.mxu0 0
        %2299 = vmatprep.subr.bf16.mxu0 0
        %2300 = vmatpush1.bf16.xpose.msra.mxu0 0
        %2301 = vmatprep.subr.bf16.mxu0 0
        %2302 = vmatpush1.bf16.xpose.msra.mxu0 0
        %2303 = vmatprep.mubr.bf16.mxu0 0
        %2304 = vmatmul.mubr.bf16.gmra.mrb[0].mxu0 %v2266
        %v2305 = vpop.f32.mrb[0].mxu0
        %v2306 = vadd.f32 0.0, %v2305
        %v2307 = vpop.f32.mrb[0].mxu0
        %v2308 = vpop.f32.mrb[0].mxu0
        %v2309 = vpop.f32.mrb[0].mxu0
        %2310 = vdwg.mxu0
        %v2311 = vmul.f32 %v2168, 0.35355338
        %v2312 = vmul.f32 %v2214, 0.35355338
        %v2313 = vmul.f32 %v2260, 0.35355338
        %v2314 = vmul.f32 %v2306, 0.35355338
        %v2315 = vsel %vm1404, %v2311, -inf
        %2316 = vmax.xlane.f32.xlu0 %v2315
        %v2317 = vpop.xlane.xlu0 %2316
        %v2318 = vsel %vm1404, %v2312, -inf
        %2319 = vmax.xlane.f32.xlu0 %v2318
        %v2320 = vpop.xlane.xlu0 %2319
        %v2321 = vsel %vm1404, %v2313, -inf
        %2322 = vmax.xlane.f32.xlu0 %v2321
        %v2323 = vpop.xlane.xlu0 %2322
        %v2324 = vsel %vm1404, %v2314, -inf
        %2325 = vmax.xlane.f32.xlu0 %v2324
        %v2326 = vpop.xlane.xlu0 %2325
        %v2327 = vsub.f32 %v2311, %v2317
        %v2328 = vsub.f32 %v2312, %v2320
        %v2329 = vsub.f32 %v2313, %v2323
        %v2330 = vsub.f32 %v2314, %v2326
        %v2331 = vmul.f32 %v2327, 1.442695
        %v2332 = vpow.pop %v2331
        %v2333 = vmul.f32 %v2328, 1.442695
        %v2334 = vpow.pop %v2333
        %v2335 = vmul.f32 %v2329, 1.442695
        %v2336 = vpow.pop %v2335
        %v2337 = vmul.f32 %v2330, 1.442695
        %v2338 = vpow.pop %v2337
        %v2339 = vsel %vm1404, %v2332, 0.0
        %2340 = vadd.xlane.f32.xlu0 %v2339
        %v2341 = vpop.xlane.xlu0 %2340
        %v2342 = vsel %vm1404, %v2334, 0.0
        %2343 = vadd.xlane.f32.xlu0 %v2342
        %v2344 = vpop.xlane.xlu0 %2343
        %v2345 = vsel %vm1404, %v2336, 0.0
        %2346 = vadd.xlane.f32.xlu0 %v2345
        %v2347 = vpop.xlane.xlu0 %2346
        %v2348 = vsel %vm1404, %v2338, 0.0
        %2349 = vadd.xlane.f32.xlu0 %v2348
        %v2350 = vpop.xlane.xlu0 %2349
        %v2351 = vrcp.pop %v2341
        %v2352 = vrcp.pop %v2344
        %v2353 = vrcp.pop %v2347
        %v2354 = vrcp.pop %v2350
        %v2355 = vmul.f32 %v2332, %v2351
        %v2356 = vmul.f32 %v2334, %v2352
        %v2357 = vmul.f32 %v2336, %v2353
        %v2358 = vmul.f32 %v2338, %v2354
        %v2359 = vpack.c.bf16 %v2355, %v2355
        %v2360 = vpack.c.bf16 %v2356, %v2356
        %v2361 = vpack.c.bf16 %v2357, %v2357
        %v2362 = vpack.c.bf16 %v2358, %v2358
        %2364 = vrot.lane.b32.xlu0 %v2123, 96
        %v2365 = vpop.permute.xlu0 %2364
        %v2367 = vsel %vm1404, %v2359, 0
        %v2370 = vsel %vm1666, %v2365, 0
        %2372 = vmatprep.subr.bf16.mxu0 0
        %2373 = vmatpush1.bf16.msra.mxu0 %v2370
        %2374 = vmatprep.subr.bf16.mxu0 0
        %2375 = vmatpush1.bf16.msra.mxu0 0
        %2376 = vmatprep.subr.bf16.mxu0 0
        %2377 = vmatpush1.bf16.msra.mxu0 0
        %2378 = vmatprep.subr.bf16.mxu0 0
        %2379 = vmatpush1.bf16.msra.mxu0 0
        %2380 = vmatprep.subr.bf16.mxu0 0
        %2381 = vmatpush1.bf16.msra.mxu0 0
        %2382 = vmatprep.subr.bf16.mxu0 0
        %2383 = vmatpush1.bf16.msra.mxu0 0
        %2384 = vmatprep.subr.bf16.mxu0 0
        %2385 = vmatpush1.bf16.msra.mxu0 0
        %2386 = vmatprep.subr.bf16.mxu0 0
        %2387 = vmatpush1.bf16.msra.mxu0 0
        %2388 = vmatprep.subr.bf16.mxu0 0
        %2389 = vmatpush1.bf16.msra.mxu0 0
        %2390 = vmatprep.subr.bf16.mxu0 0
        %2391 = vmatpush1.bf16.msra.mxu0 0
        %2392 = vmatprep.subr.bf16.mxu0 0
        %2393 = vmatpush1.bf16.msra.mxu0 0
        %2394 = vmatprep.subr.bf16.mxu0 0
        %2395 = vmatpush1.bf16.msra.mxu0 0
        %2396 = vmatprep.subr.bf16.mxu0 0
        %2397 = vmatpush1.bf16.msra.mxu0 0
        %2398 = vmatprep.subr.bf16.mxu0 0
        %2399 = vmatpush1.bf16.msra.mxu0 0
        %2400 = vmatprep.subr.bf16.mxu0 0
        %2401 = vmatpush1.bf16.msra.mxu0 0
        %2402 = vmatprep.subr.bf16.mxu0 0
        %2403 = vmatpush1.bf16.msra.mxu0 0
        %2404 = vmatprep.mubr.bf16.mxu0 0
        %2405 = vmatmul.mubr.bf16.gmra.mrb[0].mxu0 %v2367
        %v2406 = vpop.f32.mrb[0].mxu0
        %v2407 = vadd.f32 0.0, %v2406
        %v2408 = vpop.f32.mrb[0].mxu0
        %v2409 = vpop.f32.mrb[0].mxu0
        %v2410 = vpop.f32.mrb[0].mxu0
        %2411 = vdwg.mxu0
        %2413 = vrot.lane.b32.xlu0 %v2124, 96
        %v2414 = vpop.permute.xlu0 %2413
        %v2416 = vsel %vm1404, %v2360, 0
        %v2419 = vsel %vm1666, %v2414, 0
        %2421 = vmatprep.subr.bf16.mxu0 0
        %2422 = vmatpush1.bf16.msra.mxu0 %v2419
        %2423 = vmatprep.subr.bf16.mxu0 0
        %2424 = vmatpush1.bf16.msra.mxu0 0
        %2425 = vmatprep.subr.bf16.mxu0 0
        %2426 = vmatpush1.bf16.msra.mxu0 0
        %2427 = vmatprep.subr.bf16.mxu0 0
        %2428 = vmatpush1.bf16.msra.mxu0 0
        %2429 = vmatprep.subr.bf16.mxu0 0
        %2430 = vmatpush1.bf16.msra.mxu0 0
        %2431 = vmatprep.subr.bf16.mxu0 0
        %2432 = vmatpush1.bf16.msra.mxu0 0
        %2433 = vmatprep.subr.bf16.mxu0 0
        %2434 = vmatpush1.bf16.msra.mxu0 0
        %2435 = vmatprep.subr.bf16.mxu0 0
        %2436 = vmatpush1.bf16.msra.mxu0 0
        %2437 = vmatprep.subr.bf16.mxu0 0
        %2438 = vmatpush1.bf16.msra.mxu0 0
        %2439 = vmatprep.subr.bf16.mxu0 0
        %2440 = vmatpush1.bf16.msra.mxu0 0
        %2441 = vmatprep.subr.bf16.mxu0 0
        %2442 = vmatpush1.bf16.msra.mxu0 0
        %2443 = vmatprep.subr.bf16.mxu0 0
        %2444 = vmatpush1.bf16.msra.mxu0 0
        %2445 = vmatprep.subr.bf16.mxu0 0
        %2446 = vmatpush1.bf16.msra.mxu0 0
        %2447 = vmatprep.subr.bf16.mxu0 0
        %2448 = vmatpush1.bf16.msra.mxu0 0
        %2449 = vmatprep.subr.bf16.mxu0 0
        %2450 = vmatpush1.bf16.msra.mxu0 0
        %2451 = vmatprep.subr.bf16.mxu0 0
        %2452 = vmatpush1.bf16.msra.mxu0 0
        %2453 = vmatprep.mubr.bf16.mxu0 0
        %2454 = vmatmul.mubr.bf16.gmra.mrb[0].mxu0 %v2416
        %v2455 = vpop.f32.mrb[0].mxu0
        %v2456 = vadd.f32 0.0, %v2455
        %v2457 = vpop.f32.mrb[0].mxu0
        %v2458 = vpop.f32.mrb[0].mxu0
        %v2459 = vpop.f32.mrb[0].mxu0
        %2460 = vdwg.mxu0
        %2462 = vrot.lane.b32.xlu0 %v2125, 96
        %v2463 = vpop.permute.xlu0 %2462
        %v2465 = vsel %vm1404, %v2361, 0
        %v2468 = vsel %vm1666, %v2463, 0
        %2470 = vmatprep.subr.bf16.mxu0 0
        %2471 = vmatpush1.bf16.msra.mxu0 %v2468
        %2472 = vmatprep.subr.bf16.mxu0 0
        %2473 = vmatpush1.bf16.msra.mxu0 0
        %2474 = vmatprep.subr.bf16.mxu0 0
        %2475 = vmatpush1.bf16.msra.mxu0 0
        %2476 = vmatprep.subr.bf16.mxu0 0
        %2477 = vmatpush1.bf16.msra.mxu0 0
        %2478 = vmatprep.subr.bf16.mxu0 0
        %2479 = vmatpush1.bf16.msra.mxu0 0
        %2480 = vmatprep.subr.bf16.mxu0 0
        %2481 = vmatpush1.bf16.msra.mxu0 0
        %2482 = vmatprep.subr.bf16.mxu0 0
        %2483 = vmatpush1.bf16.msra.mxu0 0
        %2484 = vmatprep.subr.bf16.mxu0 0
        %2485 = vmatpush1.bf16.msra.mxu0 0
        %2486 = vmatprep.subr.bf16.mxu0 0
        %2487 = vmatpush1.bf16.msra.mxu0 0
        %2488 = vmatprep.subr.bf16.mxu0 0
        %2489 = vmatpush1.bf16.msra.mxu0 0
        %2490 = vmatprep.subr.bf16.mxu0 0
        %2491 = vmatpush1.bf16.msra.mxu0 0
        %2492 = vmatprep.subr.bf16.mxu0 0
        %2493 = vmatpush1.bf16.msra.mxu0 0
        %2494 = vmatprep.subr.bf16.mxu0 0
        %2495 = vmatpush1.bf16.msra.mxu0 0
        %2496 = vmatprep.subr.bf16.mxu0 0
        %2497 = vmatpush1.bf16.msra.mxu0 0
        %2498 = vmatprep.subr.bf16.mxu0 0
        %2499 = vmatpush1.bf16.msra.mxu0 0
        %2500 = vmatprep.subr.bf16.mxu0 0
        %2501 = vmatpush1.bf16.msra.mxu0 0
        %2502 = vmatprep.mubr.bf16.mxu0 0
        %2503 = vmatmul.mubr.bf16.gmra.mrb[0].mxu0 %v2465
        %v2504 = vpop.f32.mrb[0].mxu0
        %v2505 = vadd.f32 0.0, %v2504
        %v2506 = vpop.f32.mrb[0].mxu0
        %v2507 = vpop.f32.mrb[0].mxu0
        %v2508 = vpop.f32.mrb[0].mxu0
        %2509 = vdwg.mxu0
        %2511 = vrot.lane.b32.xlu0 %v2126, 96
        %v2512 = vpop.permute.xlu0 %2511
        %v2514 = vsel %vm1404, %v2362, 0
        %v2517 = vsel %vm1666, %v2512, 0
        %2519 = vmatprep.subr.bf16.mxu0 0
        %2520 = vmatpush1.bf16.msra.mxu0 %v2517
        %2521 = vmatprep.subr.bf16.mxu0 0
        %2522 = vmatpush1.bf16.msra.mxu0 0
        %2523 = vmatprep.subr.bf16.mxu0 0
        %2524 = vmatpush1.bf16.msra.mxu0 0
        %2525 = vmatprep.subr.bf16.mxu0 0
        %2526 = vmatpush1.bf16.msra.mxu0 0
        %2527 = vmatprep.subr.bf16.mxu0 0
        %2528 = vmatpush1.bf16.msra.mxu0 0
        %2529 = vmatprep.subr.bf16.mxu0 0
        %2530 = vmatpush1.bf16.msra.mxu0 0
        %2531 = vmatprep.subr.bf16.mxu0 0
        %2532 = vmatpush1.bf16.msra.mxu0 0
        %2533 = vmatprep.subr.bf16.mxu0 0
        %2534 = vmatpush1.bf16.msra.mxu0 0
        %2535 = vmatprep.subr.bf16.mxu0 0
        %2536 = vmatpush1.bf16.msra.mxu0 0
        %2537 = vmatprep.subr.bf16.mxu0 0
        %2538 = vmatpush1.bf16.msra.mxu0 0
        %2539 = vmatprep.subr.bf16.mxu0 0
        %2540 = vmatpush1.bf16.msra.mxu0 0
        %2541 = vmatprep.subr.bf16.mxu0 0
        %2542 = vmatpush1.bf16.msra.mxu0 0
        %2543 = vmatprep.subr.bf16.mxu0 0
        %2544 = vmatpush1.bf16.msra.mxu0 0
        %2545 = vmatprep.subr.bf16.mxu0 0
        %2546 = vmatpush1.bf16.msra.mxu0 0
        %2547 = vmatprep.subr.bf16.mxu0 0
        %2548 = vmatpush1.bf16.msra.mxu0 0
        %2549 = vmatprep.subr.bf16.mxu0 0
        %2550 = vmatpush1.bf16.msra.mxu0 0
        %2551 = vmatprep.mubr.bf16.mxu0 0
        %2552 = vmatmul.mubr.bf16.gmra.mrb[0].mxu0 %v2514
        %v2553 = vpop.f32.mrb[0].mxu0
        %v2554 = vadd.f32 0.0, %v2553
        %v2555 = vpop.f32.mrb[0].mxu0
        %v2556 = vpop.f32.mrb[0].mxu0
        %v2557 = vpop.f32.mrb[0].mxu0
        %2558 = vdwg.mxu0
        %2560 = vrot.lane.b32.xlu0 %v2456, 8
        %v2561 = vpop.permute.xlu0 %2560
        %2564 = vrot.lane.b32.xlu0 %v2505, 16
        %v2565 = vpop.permute.xlu0 %2564
        %2568 = vrot.lane.b32.xlu0 %v2554, 24
        %v2569 = vpop.permute.xlu0 %2568
        %v2571 = vsel %vm1404, %v2407, %v2561
        %v2572 = vsel %vm1867, %v2571, %v2565
        %v2573 = vsel %vm1869, %v2572, %v2569
        %v2574 = vpack.c.bf16 %v2573, %v2573
        %v2575 = vld [vmem:[%s1294] sm:$0xf]
        %v2576 = vld [vmem:[%s1294 + $0x4] sm:$0xf]
        %v2577 = vld [vmem:[%s1294 + $0x8] sm:$0xf]
        %v2578 = vld [vmem:[%s1294 + $0xc] sm:$0xf]
        %v2579 = vld [vmem:[%s1054] sm:$0x1]
        %v2581 = vlaneseq
        %v2582 = vshrl.u32 %v2581, 7
        %v2583 = vsub.s32 0, %v2582
        %v2584 = vrot.slane %v2579, %v2583
        %v2590 = vunpack.c.l.b16 %v2575
        %v2591 = vunpack.c.l.b16 %v2576
        %v2592 = vunpack.c.l.b16 %v2577
        %v2593 = vunpack.c.l.b16 %v2578
        %v2594 = vpack.c.b16 %v2591, %v2590
        %v2595 = vpack.c.b16 %v2593, %v2592
        %v2599 = vsel %vm1343, %v2574, 0
        %2601 = vmatprep.subr.bf16.mxu0 0
        %2602 = vmatpush1.bf16.msra.mxu0 %v2594
        %2603 = vmatprep.subr.bf16.mxu0 0
        %2604 = vmatpush1.bf16.msra.mxu0 %v2595
        %2605 = vmatprep.subr.bf16.mxu0 0
        %2606 = vmatpush1.bf16.msra.mxu0 0
        %2607 = vmatprep.subr.bf16.mxu0 0
        %2608 = vmatpush1.bf16.msra.mxu0 0
        %2609 = vmatprep.subr.bf16.mxu0 0
        %2610 = vmatpush1.bf16.msra.mxu0 0
        %2611 = vmatprep.subr.bf16.mxu0 0
        %2612 = vmatpush1.bf16.msra.mxu0 0
        %2613 = vmatprep.subr.bf16.mxu0 0
        %2614 = vmatpush1.bf16.msra.mxu0 0
        %2615 = vmatprep.subr.bf16.mxu0 0
        %2616 = vmatpush1.bf16.msra.mxu0 0
        %2617 = vmatprep.subr.bf16.mxu0 0
        %2618 = vmatpush1.bf16.msra.mxu0 0
        %2619 = vmatprep.subr.bf16.mxu0 0
        %2620 = vmatpush1.bf16.msra.mxu0 0
        %2621 = vmatprep.subr.bf16.mxu0 0
        %2622 = vmatpush1.bf16.msra.mxu0 0
        %2623 = vmatprep.subr.bf16.mxu0 0
        %2624 = vmatpush1.bf16.msra.mxu0 0
        %2625 = vmatprep.subr.bf16.mxu0 0
        %2626 = vmatpush1.bf16.msra.mxu0 0
        %2627 = vmatprep.subr.bf16.mxu0 0
        %2628 = vmatpush1.bf16.msra.mxu0 0
        %2629 = vmatprep.subr.bf16.mxu0 0
        %2630 = vmatpush1.bf16.msra.mxu0 0
        %2631 = vmatprep.subr.bf16.mxu0 0
        %2632 = vmatpush1.bf16.msra.mxu0 0
        %2633 = vmatprep.mubr.bf16.mxu0 0
        %2634 = vmatmul.mubr.bf16.gmra.mrb[0].mxu0 %v2599
        %v2635 = vpop.f32.mrb[0].mxu0
        %v2636 = vadd.f32 %v2584, %v2635
        %v2637 = vpop.f32.mrb[0].mxu0
        %v2638 = vpop.f32.mrb[0].mxu0
        %v2639 = vpop.f32.mrb[0].mxu0
        %2640 = vdwg.mxu0
        %v2641 = vadd.f32 %v1968, %v2636
        %v2642 = vld [vmem:[%s1078] sm:$0x1]
        %v2643 = vld [vmem:[%s1086] sm:$0x1]
        %v2644 = vsel %vm1343, %v2641, 0.0
        %2645 = vadd.xlane.f32.xlu0 %v2644
        %v2646 = vpop.xlane.xlu0 %2645
        %v2647 = vmul.f32 %v2646, %v1944
        %v2648 = vsub.f32 %v2641, %v2647
        %v2649 = vmul.f32 %v2648, %v2648
        %v2650 = vsel %vm1343, %v2649, 0.0
        %2651 = vadd.xlane.f32.xlu0 %v2650
        %v2652 = vpop.xlane.xlu0 %2651
        %v2653 = vmul.f32 %v2652, %v1944
        %v2654 = vadd.f32 %v2653, 1e-05
        %v2655 = vrsqrt.pop %v2654
        %v2656 = vmul.f32 %v2648, %v2655
        %v2658 = vlaneseq
        %v2659 = vshrl.u32 %v2658, 7
        %v2660 = vsub.s32 0, %v2659
        %v2661 = vrot.slane %v2642, %v2660
        %v2663 = vmul.f32 %v2656, %v2661
        %v2665 = vlaneseq
        %v2666 = vshrl.u32 %v2665, 7
        %v2667 = vsub.s32 0, %v2666
        %v2668 = vrot.slane %v2643, %v2667
        %v2670 = vadd.f32 %v2663, %v2668
        %v2671 = vpack.c.bf16 %v2670, %v2670
        %v2672 = vld [vmem:[%s1299] sm:$0xf]
        %v2673 = vld [vmem:[%s1299 + $0x4] sm:$0xf]
        %v2674 = vld [vmem:[%s1299 + $0x8] sm:$0xf]
        %v2675 = vld [vmem:[%s1299 + $0xc] sm:$0xf]
        %v2676 = vld [vmem:[%s1110] sm:$0x1]
        %v2678 = vlaneseq
        %v2679 = vshrl.u32 %v2678, 7
        %v2680 = vsub.s32 0, %v2679
        %v2681 = vrot.slane %v2676, %v2680
        %v2687 = vunpack.c.l.b16 %v2672
        %v2688 = vunpack.c.l.b16 %v2673
        %v2689 = vunpack.c.l.b16 %v2674
        %v2690 = vunpack.c.l.b16 %v2675
        %v2691 = vpack.c.b16 %v2688, %v2687
        %v2692 = vpack.c.b16 %v2690, %v2689
        %v2696 = vsel %vm1343, %v2671, 0
        %2698 = vmatprep.subr.bf16.mxu0 0
        %2699 = vmatpush1.bf16.msra.mxu0 %v2691
        %2700 = vmatprep.subr.bf16.mxu0 0
        %2701 = vmatpush1.bf16.msra.mxu0 %v2692
        %2702 = vmatprep.subr.bf16.mxu0 0
        %2703 = vmatpush1.bf16.msra.mxu0 0
        %2704 = vmatprep.subr.bf16.mxu0 0
        %2705 = vmatpush1.bf16.msra.mxu0 0
        %2706 = vmatprep.subr.bf16.mxu0 0
        %2707 = vmatpush1.bf16.msra.mxu0 0
        %2708 = vmatprep.subr.bf16.mxu0 0
        %2709 = vmatpush1.bf16.msra.mxu0 0
        %2710 = vmatprep.subr.bf16.mxu0 0
        %2711 = vmatpush1.bf16.msra.mxu0 0
        %2712 = vmatprep.subr.bf16.mxu0 0
        %2713 = vmatpush1.bf16.msra.mxu0 0
        %2714 = vmatprep.subr.bf16.mxu0 0
        %2715 = vmatpush1.bf16.msra.mxu0 0
        %2716 = vmatprep.subr.bf16.mxu0 0
        %2717 = vmatpush1.bf16.msra.mxu0 0
        %2718 = vmatprep.subr.bf16.mxu0 0
        %2719 = vmatpush1.bf16.msra.mxu0 0
        %2720 = vmatprep.subr.bf16.mxu0 0
        %2721 = vmatpush1.bf16.msra.mxu0 0
        %2722 = vmatprep.subr.bf16.mxu0 0
        %2723 = vmatpush1.bf16.msra.mxu0 0
        %2724 = vmatprep.subr.bf16.mxu0 0
        %2725 = vmatpush1.bf16.msra.mxu0 0
        %2726 = vmatprep.subr.bf16.mxu0 0
        %2727 = vmatpush1.bf16.msra.mxu0 0
        %2728 = vmatprep.subr.bf16.mxu0 0
        %2729 = vmatpush1.bf16.msra.mxu0 0
        %2730 = vmatprep.mubr.bf16.mxu0 0
        %2731 = vmatmul.mubr.bf16.gmra.mrb[0].mxu0 %v2696
        %v2732 = vpop.f32.mrb[0].mxu0
        %v2733 = vadd.f32 %v2681, %v2732
        %v2734 = vpop.f32.mrb[0].mxu0
        %v2735 = vpop.f32.mrb[0].mxu0
        %v2736 = vpop.f32.mrb[0].mxu0
        %2737 = vdwg.mxu0
        %v2738 = vmax.f32 %v2733, 0.0
        %v2739 = vpack.c.bf16 %v2738, %v2738
        %v2740 = vld [vmem:[%s1304] sm:$0xf]
        %v2741 = vld [vmem:[%s1304 + $0x4] sm:$0xf]
        %v2742 = vld [vmem:[%s1304 + $0x8] sm:$0xf]
        %v2743 = vld [vmem:[%s1304 + $0xc] sm:$0xf]
        %v2744 = vld [vmem:[%s1304 + $0x10] sm:$0xf]
        %v2745 = vld [vmem:[%s1304 + $0x14] sm:$0xf]
        %v2746 = vld [vmem:[%s1304 + $0x18] sm:$0xf]
        %v2747 = vld [vmem:[%s1304 + $0x1c] sm:$0xf]
        %v2748 = vld [vmem:[%s1304 + $0x20] sm:$0xf]
        %v2749 = vld [vmem:[%s1304 + $0x24] sm:$0xf]
        %v2750 = vld [vmem:[%s1304 + $0x28] sm:$0xf]
        %v2751 = vld [vmem:[%s1304 + $0x2c] sm:$0xf]
        %v2752 = vld [vmem:[%s1304 + $0x30] sm:$0xf]
        %v2753 = vld [vmem:[%s1304 + $0x34] sm:$0xf]
        %v2754 = vld [vmem:[%s1304 + $0x38] sm:$0xf]
        %v2755 = vld [vmem:[%s1304 + $0x3c] sm:$0xf]
        %v2756 = vld [vmem:[%s1118] sm:$0x1]
        %v2758 = vlaneseq
        %v2759 = vshrl.u32 %v2758, 7
        %v2760 = vsub.s32 0, %v2759
        %v2761 = vrot.slane %v2756, %v2760
        %v2779 = vunpack.c.l.b16 %v2740
        %v2780 = vunpack.c.l.b16 %v2741
        %v2781 = vunpack.c.l.b16 %v2742
        %v2782 = vunpack.c.l.b16 %v2743
        %v2783 = vunpack.c.l.b16 %v2744
        %v2784 = vunpack.c.l.b16 %v2745
        %v2785 = vunpack.c.l.b16 %v2746
        %v2786 = vunpack.c.l.b16 %v2747
        %v2787 = vunpack.c.l.b16 %v2748
        %v2788 = vunpack.c.l.b16 %v2749
        %v2789 = vunpack.c.l.b16 %v2750
        %v2790 = vunpack.c.l.b16 %v2751
        %v2791 = vunpack.c.l.b16 %v2752
        %v2792 = vunpack.c.l.b16 %v2753
        %v2793 = vunpack.c.l.b16 %v2754
        %v2794 = vunpack.c.l.b16 %v2755
        %v2795 = vpack.c.b16 %v2780, %v2779
        %v2796 = vpack.c.b16 %v2782, %v2781
        %v2797 = vpack.c.b16 %v2784, %v2783
        %v2798 = vpack.c.b16 %v2786, %v2785
        %v2799 = vpack.c.b16 %v2788, %v2787
        %v2800 = vpack.c.b16 %v2790, %v2789
        %v2801 = vpack.c.b16 %v2792, %v2791
        %v2802 = vpack.c.b16 %v2794, %v2793
        %2811 = vmatprep.subr.bf16.mxu0 0
        %2812 = vmatpush1.bf16.msra.mxu0 %v2795
        %2813 = vmatprep.subr.bf16.mxu0 0
        %2814 = vmatpush1.bf16.msra.mxu0 %v2796
        %2815 = vmatprep.subr.bf16.mxu0 0
        %2816 = vmatpush1.bf16.msra.mxu0 %v2797
        %2817 = vmatprep.subr.bf16.mxu0 0
        %2818 = vmatpush1.bf16.msra.mxu0 %v2798
        %2819 = vmatprep.subr.bf16.mxu0 0
        %2820 = vmatpush1.bf16.msra.mxu0 %v2799
        %2821 = vmatprep.subr.bf16.mxu0 0
        %2822 = vmatpush1.bf16.msra.mxu0 %v2800
        %2823 = vmatprep.subr.bf16.mxu0 0
        %2824 = vmatpush1.bf16.msra.mxu0 %v2801
        %2825 = vmatprep.subr.bf16.mxu0 0
        %2826 = vmatpush1.bf16.msra.mxu0 %v2802
        %2827 = vmatprep.subr.bf16.mxu0 0
        %2828 = vmatpush1.bf16.msra.mxu0 0
        %2829 = vmatprep.subr.bf16.mxu0 0
        %2830 = vmatpush1.bf16.msra.mxu0 0
        %2831 = vmatprep.subr.bf16.mxu0 0
        %2832 = vmatpush1.bf16.msra.mxu0 0
        %2833 = vmatprep.subr.bf16.mxu0 0
        %2834 = vmatpush1.bf16.msra.mxu0 0
        %2835 = vmatprep.subr.bf16.mxu0 0
        %2836 = vmatpush1.bf16.msra.mxu0 0
        %2837 = vmatprep.subr.bf16.mxu0 0
        %2838 = vmatpush1.bf16.msra.mxu0 0
        %2839 = vmatprep.subr.bf16.mxu0 0
        %2840 = vmatpush1.bf16.msra.mxu0 0
        %2841 = vmatprep.subr.bf16.mxu0 0
        %2842 = vmatpush1.bf16.msra.mxu0 0
        %2843 = vmatprep.mubr.bf16.mxu0 0
        %2844 = vmatmul.mubr.bf16.gmra.mrb[0].mxu0 %v2739
        %v2845 = vpop.f32.mrb[0].mxu0
        %v2846 = vadd.f32 %v2761, %v2845
        %v2847 = vpop.f32.mrb[0].mxu0
        %v2848 = vpop.f32.mrb[0].mxu0
        %v2849 = vpop.f32.mrb[0].mxu0
        %2850 = vdwg.mxu0
        %v2851 = vadd.f32 %v2846, %v2670
        %v2852 = vld [vmem:[%s1094] sm:$0x1]
        %v2853 = vld [vmem:[%s1102] sm:$0x1]
        %v2854 = vsel %vm1343, %v2851, 0.0
        %2855 = vadd.xlane.f32.xlu0 %v2854
        %v2856 = vpop.xlane.xlu0 %2855
        %v2857 = vmul.f32 %v2856, %v1944
        %v2858 = vsub.f32 %v2851, %v2857
        %v2859 = vmul.f32 %v2858, %v2858
        %v2860 = vsel %vm1343, %v2859, 0.0
        %2861 = vadd.xlane.f32.xlu0 %v2860
        %v2862 = vpop.xlane.xlu0 %2861
        %v2863 = vmul.f32 %v2862, %v1944
        %v2864 = vadd.f32 %v2863, 1e-05
        %v2865 = vrsqrt.pop %v2864
        %v2866 = vmul.f32 %v2858, %v2865
        %v2868 = vlaneseq
        %v2869 = vshrl.u32 %v2868, 7
        %v2870 = vsub.s32 0, %v2869
        %v2871 = vrot.slane %v2852, %v2870
        %v2873 = vmul.f32 %v2866, %v2871
        %v2875 = vlaneseq
        %v2876 = vshrl.u32 %v2875, 7
        %v2877 = vsub.s32 0, %v2876
        %v2878 = vrot.slane %v2853, %v2877
        %v2880 = vadd.f32 %v2873, %v2878
        %2881 = vst.msk [vmem:[%s1308] sm:$0xff] %vm1343, %v2880
        %p2882 = scmp.lt.s32.totalorder %s61, 1
        %s2883 = scalar_select %p2882, %s61, 1
        %s2884 = smul.addr %s2883, 8
        %s2885 = scalar_lea.vmem %s22, %s2884
        // Predicated region
        $region173: #{decoder_forward.2} parent=107 // pred_check
          %p2886 = pneg %p659
        $region174: #{decoder_forward.2} parent=107 // pred_check_branch
          %2888 = sbr.rel (%p2886) target = $region176
        $region175: #{decoder_forward.2} parent=107 // pred_region
          _
        $region176: #{decoder_forward.2} parent=107 // pred_fallthru
          _
      $region108: #{decoder_forward.2} parent=5 // pred_fallthru
        _
      %p2889 = scmp.le.s32.totalorder 2, %s52
      // Predicated region
      $region177: #{decoder_forward.2} parent=5 // pred_check
        %p2890 = pneg %p2889
      $region178: #{decoder_forward.2} parent=5 // pred_check_branch
        %2892 = sbr.rel (%p2890) target = $region180
      $region179: #{decoder_forward.2} parent=5 // pred_region
        %s2893 = ssub.s32 %s52, 2
        // Predicated region
        $region181: #{decoder_forward.2} parent=179 // pred_check
          %p2894 = pneg %p665
        $region182: #{decoder_forward.2} parent=179 // pred_check_branch
          %2896 = sbr.rel (%p2894) target = $region184
        $region183: #{decoder_forward.2} parent=179 // pred_region
          %p2897 = scmp.lt.s32.totalorder %s63, 1
          %s2898 = scalar_select %p2897, %s63, 1
          %s2899 = smul.addr %s2898, 8
          %s2900 = scalar_lea.vmem %s22, %s2899
        $region184: #{decoder_forward.2} parent=179 // pred_fallthru
          _
      $region180: #{decoder_forward.2} parent=5 // pred_fallthru
        _
    $region6: #{decoder_forward.2} parent=1 // loop_footer
      %s56 = sadd.s32 1, %s52
    $region7: #{decoder_forward.2} parent=1 // loop_footer_branch
      %51 = sbr.rel target = $region3
    $region8: #{decoder_forward.2} parent=1 // loop_exit
      _
    %2901 = vsyncpa [#allocation3], 1
    %s2902 = scalar_lea.sflag [#allocation3], 1
    %2903 = vsyncpa %s2902, 1
    %2904 = vsyncpa [#allocation5], 1
    %s2905 = scalar_lea.sflag [#allocation5], 1
    %2906 = vsyncpa %s2905, 1
    %2907 = vsyncpa [#allocation8], 1
    %s2908 = scalar_lea.sflag [#allocation8], 1
    %2909 = vsyncpa %s2908, 1
    %2910 = vsyncpa [#allocation11], 1
    %s2911 = scalar_lea.sflag [#allocation11], 1
    %2912 = vsyncpa %s2911, 1
    %2913 = vsyncpa [#allocation14], 1
    %s2914 = scalar_lea.sflag [#allocation14], 1
    %2915 = vsyncpa %s2914, 1
    %2916 = vsyncpa [#allocation17], 1
    %s2917 = scalar_lea.sflag [#allocation17], 1
    %2918 = vsyncpa %s2917, 1
    %2919 = vsyncpa [#allocation20], 1
    %s2920 = scalar_lea.sflag [#allocation20], 1
    %2921 = vsyncpa %s2920, 1
    %2922 = vsyncpa [#allocation23], 1
    %s2923 = scalar_lea.sflag [#allocation23], 1
    %2924 = vsyncpa %s2923, 1

</llo_original>
